<compile_context>
chip_gen: v6e
topology: v6e:2x2x1
jax: 0.10.0
libtpu: 0.0.40
codegen_flags: <defaults>
</compile_context>

<pallas_src>
import jax
import jax.numpy as jnp
from jax import lax
from jax.experimental import pallas as pl
from jax.experimental.pallas import tpu as pltpu

LANE = 128
_VMEM_LIMIT = 32 * 1024 * 1024     # explicit scoped-VMEM budget, safe on v5e/v6e/v7x
_EPS = 1e-5


# ----------------------------- small helpers -----------------------------

def _rup(x, m):
    return (x + m - 1) // m * m


def _pick_rows(m, target=1024):
    """Largest row tile <= target that divides m and is a multiple of 8 (else m)."""
    if m <= target:
        return m
    t = target - (target % 8)
    while t >= 8 and m % t:
        t -= 8
    return t if (t >= 8 and m % t == 0) else m


def _compiler_params(n_axes=1):
    return pltpu.CompilerParams(
        dimension_semantics=("parallel",) * n_axes,
        vmem_limit_bytes=_VMEM_LIMIT)


# --------------------------- in-kernel helpers ---------------------------

def _bn_scale_shift(part, gamma, beta, count, eps=_EPS):
    # part: (T, 2, C) per-tile [sum, sum_sq]; gamma/beta: (1, C). Returns (1, C) affine.
    tot = jnp.sum(part, axis=0)                        # (2, C)
    mean = tot[0:1, :] * (1.0 / count)
    var = tot[1:2, :] * (1.0 / count) - mean * mean
    scale = gamma * lax.rsqrt(var + eps)
    shift = beta - mean * scale
    return scale, shift


def _write_stats(st_ref, h):
    # st_ref block: (1, 2, C); h: (rows, C) f32.
    st_ref[0, 0:1, :] = jnp.sum(h, axis=0, keepdims=True)
    st_ref[0, 1:2, :] = jnp.sum(h * h, axis=0, keepdims=True)


# ------------------------------ Pallas kernels ------------------------------

def _conv_stats_kernel(x_ref, w_ref, st_ref):
    # Sweep 1: per-tile [sum, sum_sq] of the conv1 (1x1) output.
    h = jnp.dot(x_ref[...], w_ref[...], preferred_element_type=jnp.float32)
    _write_stats(st_ref, h)


def _make_conv2_kernel(s, Hi, Wi, Ho, Wo, Pp, count1, cdt, eps=_EPS):
    """Sweep 2: conv1-apply + BN1 + ReLU + 3x3 stride-s conv, one image per step."""
    def kernel(x_ref, w1_ref, st1_ref, g1_ref, b1_ref, w2_ref,
               h2_ref, st2_ref, pad_ref):
        scale1, shift1 = _bn_scale_shift(st1_ref[...], g1_ref[...], b1_ref[...],
                                         count1, eps)
        x = x_ref[0]                                        # (s*s*Hi, Wi, Ci)
        ci = x.shape[-1]
        h1 = jnp.dot(x.reshape(s * s * Hi * Wi, ci), w1_ref[...],
                     preferred_element_type=jnp.float32)
        a1 = jnp.maximum(h1 * scale1 + shift1, 0.0).reshape(s * s, Hi, Wi, Pp)

        # Zero-padded, phase-split activation in VMEM scratch (in-kernel "im2col").
        pad_ref[...] = jnp.zeros(pad_ref.shape, pad_ref.dtype)
        for qy in range(s):
            for qx in range(s):
                py, oy = (qy + 1) % s, (qy + 1) // s
                px, ox = (qx + 1) % s, (qx + 1) // s
                pad_ref[py * s + px, oy:oy + Hi, ox:ox + Wi, :] = a1[qy * s + qx]

        # 3x3 stride-s conv = 9 accumulated tap matmuls on contiguous slabs.
        acc = jnp.zeros((Ho * Wo, Pp), jnp.float32)
        for ky in range(3):
            for kx in range(3):
                slab = pad_ref[(ky % s) * s + (kx % s),
                               ky // s:ky // s + Ho,
                               kx // s:kx // s + Wo, :]
                acc = acc + jnp.dot(slab.reshape(Ho * Wo, Pp).astype(cdt),
                                    w2_ref[ky * 3 + kx],
                                    preferred_element_type=jnp.float32)

        h2_ref[...] = acc.reshape(1, Ho, Wo, Pp)
        _write_stats(st2_ref, acc)
    return kernel


def _make_mid_kernel(downsampling, count2, cdt, eps=_EPS):
    """Sweep 3: BN2 + ReLU + 1x1 expansion conv (+ downsample 1x1 conv), with stats."""
    def kernel(h2_ref, st2_ref, g2_ref, b2_ref, w3_ref, *rest):
        if downsampling:
            xr_ref, wd_ref, h3_ref, st3_ref, hd_ref, std_ref = rest
        else:
            h3_ref, st3_ref = rest
        scale2, shift2 = _bn_scale_shift(st2_ref[...], g2_ref[...], b2_ref[...],
                                         count2, eps)
        a2 = jnp.maximum(h2_ref[...] * scale2 + shift2, 0.0)
        h3 = jnp.dot(a2.astype(cdt), w3_ref[...], preferred_element_type=jnp.float32)
        h3_ref[...] = h3
        _write_stats(st3_ref, h3)
        if downsampling:
            hd = jnp.dot(xr_ref[...], wd_ref[...], preferred_element_type=jnp.float32)
            hd_ref[...] = hd
            _write_stats(std_ref, hd)
    return kernel


def _make_final_kernel(downsampling, count, eps=_EPS):
    """Sweep 4: BN3 (+ BNd on the downsample path) + residual add + ReLU."""
    def kernel(h3_ref, st3_ref, g3_ref, b3_ref, *rest):
        if downsampling:
            hd_ref, std_ref, gd_ref, bd_ref, o_ref = rest
            sd, shd = _bn_scale_shift(std_ref[...], gd_ref[...], bd_ref[...],
                                      count, eps)
            res = hd_ref[...] * sd + shd
        else:
            res_ref, o_ref = rest
            res = res_ref[...]
        s3, sh3 = _bn_scale_shift(st3_ref[...], g3_ref[...], b3_ref[...], count, eps)
        o_ref[...] = jnp.maximum(h3_ref[...] * s3 + sh3 + res, 0.0)
    return kernel


# ------------------------------ forward wrapper ------------------------------

def bottleneck_forward(x_nchw, params, stride=1, downsampling=False, expansion=4,
                       use_bf16=True):
    N, Cin, H, W = x_nchw.shape
    P = params["w1"].shape[1]
    PE = P * expansion
    s = int(stride)
    if H % s or W % s:
        raise ValueError("spatial dims must be divisible by stride")
    Ho = (H + 2 - 3) // s + 1
    Wo = (W + 2 - 3) // s + 1
    Hi, Wi = H // s, W // s
    assert Ho == Hi and Wo == Wi
    if not downsampling and (Cin != PE or s != 1):
        raise ValueError("identity residual needs Cin == places*expansion and stride==1")

    cdt = jnp.bfloat16 if use_bf16 else jnp.float32
    Ci, Pp, PEp = _rup(Cin, LANE), _rup(P, LANE), _rup(PE, LANE)
    M1, M2 = N * H * W, N * Ho * Wo

    # ---- lane-dense (x128) channel padding; weights cast to matmul dtype ----
    def padw(a, r, c):
        return jnp.pad(a, ((0, r - a.shape[0]), (0, c - a.shape[1]))).astype(cdt)

    def padp(a, c):
        return jnp.pad(a, ((0, 0), (0, c - a.shape[1]))).astype(jnp.float32)

    w1 = padw(params["w1"], Ci, Pp)
    w2 = jnp.pad(params["w2f"],
                 ((0, 0), (0, 0), (0, Pp - P), (0, Pp - P))).astype(cdt).reshape(9, Pp, Pp)
    w3 = padw(params["w3"], Pp, PEp)
    g1, b1 = padp(params["g1"], Pp), padp(params["b1"], Pp)
    g2, b2 = padp(params["g2"], Pp), padp(params["b2"], Pp)
    g3, b3 = padp(params["g3"], PEp), padp(params["b3"], PEp)

    # ---- NCHW -> NHWC, channel pad, and (stride>1) spatial phase-split layout ----
    x_nhwc = jnp.transpose(x_nchw, (0, 2, 3, 1)).astype(jnp.float32)
    x_nhwc = jnp.pad(x_nhwc, ((0, 0), (0, 0), (0, 0), (0, Ci - Cin)))
    if s == 1:
        x_ps = x_nhwc
    else:
        x_ps = (x_nhwc.reshape(N, Hi, s, Wi, s, Ci)
                .transpose(0, 2, 4, 1, 3, 5)
                .reshape(N, s * s * Hi, Wi, Ci))
    x_ps_c = x_ps.astype(cdt)
    x_flat_c = x_ps_c.reshape(M1, Ci)

    cp = _compiler_params(1)

    # ---- sweep 1: conv1 partial batch statistics (row-tiled, "parallel") ----
    tm1 = _pick_rows(M1)
    T1 = M1 // tm1
    st1 = pl.pallas_call(
        _conv_stats_kernel,
        grid=(T1,),
        in_specs=[pl.BlockSpec((tm1, Ci), lambda i: (i, 0)),
                  pl.BlockSpec((Ci, Pp), lambda i: (0, 0))],
        out_specs=pl.BlockSpec((1, 2, Pp), lambda i: (i, 0, 0)),
        out_shape=jax.ShapeDtypeStruct((T1, 2, Pp), jnp.float32),
        compiler_params=cp,
    )(x_flat_c, w1)

    # ---- sweep 2: conv1-apply + BN1 + ReLU + 3x3/stride-s conv (no im2col in HBM) ----
    Hs = (H + s + 1) // s                 # padded, phase-split H extent
    Ws = _rup((W + s + 1) // s, 8)        # padded, phase-split W extent (sublane aligned)
    h2_raw, st2 = pl.pallas_call(
        _make_conv2_kernel(s, Hi, Wi, Ho, Wo, Pp, M1, cdt),
        grid=(N,),
        in_specs=[pl.BlockSpec((1, s * s * Hi, Wi, Ci), lambda n: (n, 0, 0, 0)),
                  pl.BlockSpec((Ci, Pp), lambda n: (0, 0)),
                  pl.BlockSpec((T1, 2, Pp), lambda n: (0, 0, 0)),
                  pl.BlockSpec((1, Pp), lambda n: (0, 0)),
                  pl.BlockSpec((1, Pp), lambda n: (0, 0)),
                  pl.BlockSpec((9, Pp, Pp), lambda n: (0, 0, 0))],
        out_specs=(pl.BlockSpec((1, Ho, Wo, Pp), lambda n: (n, 0, 0, 0)),
                   pl.BlockSpec((1, 2, Pp), lambda n: (n, 0, 0))),
        out_shape=(jax.ShapeDtypeStruct((N, Ho, Wo, Pp), jnp.float32),
                   jax.ShapeDtypeStruct((N, 2, Pp), jnp.float32)),
        scratch_shapes=[pltpu.VMEM((s * s, Hs, Ws, Pp), jnp.float32)],
        compiler_params=cp,
    )(x_ps_c, w1, st1, g1, b1, w2)

    # ---- sweep 3: BN2 + ReLU + expansion conv (+ downsample conv), with stats ----
    h2_flat = h2_raw.reshape(M2, Pp)
    tm2 = _pick_rows(M2)
    T2 = M2 // tm2
    if downsampling:
        wd = padw(params["wd"], Ci, PEp)
        gd, bd = padp(params["gd"], PEp), padp(params["bd"], PEp)
        # residual input = phase-(0,0) plane of the phase-split x (i.e. x[:, ::s, ::s])
        x_res_c = (x_ps_c[:, :Hi, :, :] if s > 1 else x_ps_c).reshape(M2, Ci)
        ins3 = (h2_flat, st2, g2, b2, w3, x_res_c, wd)
        in_specs3 = [pl.BlockSpec((tm2, Pp), lambda i: (i, 0)),
                     pl.BlockSpec((N, 2, Pp), lambda i: (0, 0, 0)),
                     pl.BlockSpec((1, Pp), lambda i: (0, 0)),
                     pl.BlockSpec((1, Pp), lambda i: (0, 0)),
                     pl.BlockSpec((Pp, PEp), lambda i: (0, 0)),
                     pl.BlockSpec((tm2, Ci), lambda i: (i, 0)),
                     pl.BlockSpec((Ci, PEp), lambda i: (0, 0))]
        out_shape3 = (jax.ShapeDtypeStruct((M2, PEp), jnp.float32),
                      jax.ShapeDtypeStruct((T2, 2, PEp), jnp.float32),
                      jax.ShapeDtypeStruct((M2, PEp), jnp.float32),
                      jax.ShapeDtypeStruct((T2, 2, PEp), jnp.float32))
        out_specs3 = (pl.BlockSpec((tm2, PEp), lambda i: (i, 0)),
                      pl.BlockSpec((1, 2, PEp), lambda i: (i, 0, 0)),
                      pl.BlockSpec((tm2, PEp), lambda i: (i, 0)),
                      pl.BlockSpec((1, 2, PEp), lambda i: (i, 0, 0)))
    else:
        ins3 = (h2_flat, st2, g2, b2, w3)
        in_specs3 = [pl.BlockSpec((tm2, Pp), lambda i: (i, 0)),
                     pl.BlockSpec((N, 2, Pp), lambda i: (0, 0, 0)),
                     pl.BlockSpec((1, Pp), lambda i: (0, 0)),
                     pl.BlockSpec((1, Pp), lambda i: (0, 0)),
                     pl.BlockSpec((Pp, PEp), lambda i: (0, 0))]
        out_shape3 = (jax.ShapeDtypeStruct((M2, PEp), jnp.float32),
                      jax.ShapeDtypeStruct((T2, 2, PEp), jnp.float32))
        out_specs3 = (pl.BlockSpec((tm2, PEp), lambda i: (i, 0)),
                      pl.BlockSpec((1, 2, PEp), lambda i: (i, 0, 0)))
    res3 = pl.pallas_call(
        _make_mid_kernel(downsampling, M2, cdt),
        grid=(T2,),
        in_specs=in_specs3, out_specs=out_specs3, out_shape=out_shape3,
        compiler_params=cp,
    )(*ins3)

    # ---- sweep 4: BN3 (+ BNd) + residual add + ReLU ----
    if downsampling:
        h3_raw, st3, hd_raw, std = res3
        ins4 = (h3_raw, st3, g3, b3, hd_raw, std, gd, bd)
        in_specs4 = [pl.BlockSpec((tm2, PEp), lambda i: (i, 0)),
                     pl.BlockSpec((T2, 2, PEp), lambda i: (0, 0, 0)),
                     pl.BlockSpec((1, PEp), lambda i: (0, 0)),
                     pl.BlockSpec((1, PEp), lambda i: (0, 0)),
                     pl.BlockSpec((tm2, PEp), lambda i: (i, 0)),
                     pl.BlockSpec((T2, 2, PEp), lambda i: (0, 0, 0)),
                     pl.BlockSpec((1, PEp), lambda i: (0, 0)),
                     pl.BlockSpec((1, PEp), lambda i: (0, 0))]
    else:
        h3_raw, st3 = res3
        x_res_f32 = x_ps.reshape(M1, Ci)          # identity residual kept in f32
        ins4 = (h3_raw, st3, g3, b3, x_res_f32)
        in_specs4 = [pl.BlockSpec((tm2, PEp), lambda i: (i, 0)),
                     pl.BlockSpec((T2, 2, PEp), lambda i: (0, 0, 0)),
                     pl.BlockSpec((1, PEp), lambda i: (0, 0)),
                     pl.BlockSpec((1, PEp), lambda i: (0, 0)),
                     pl.BlockSpec((tm2, Ci), lambda i: (i, 0))]
    out_flat = pl.pallas_call(
        _make_final_kernel(downsampling, M2),
        grid=(T2,),
        in_specs=in_specs4,
        out_specs=pl.BlockSpec((tm2, PEp), lambda i: (i, 0)),
        out_shape=jax.ShapeDtypeStruct((M2, PEp), jnp.float32),
        compiler_params=cp,
    )(*ins4)

    out = out_flat.reshape(N, Ho, Wo, PEp)[..., :PE]
    return jnp.transpose(out, (0, 3, 1, 2))        # back to NCHW


# ----------------------------- parameters (synthetic) -----------------------------

def init_params(key, in_places, places, expansion=4, downsampling=False):
    PE = places * expansion
    ks = jax.random.split(key, 4)
    p = {
        "w1": 0.1 * jax.random.normal(ks[0], (in_places, places), jnp.float32),
        "g1": jnp.ones((1, places), jnp.float32),
        "b1": jnp.zeros((1, places), jnp.float32),
        "w2f": 0.1 * jax.random.normal(ks[1], (3, 3, places, places), jnp.float32),
        "g2": jnp.ones((1, places), jnp.float32),
        "b2": jnp.zeros((1, places), jnp.float32),
        "w3": 0.1 * jax.random.normal(ks[2], (places, PE), jnp.float32),
        "g3": jnp.ones((1, PE), jnp.float32),
        "b3": jnp.zeros((1, PE), jnp.float32),
    }
    if downsampling:
        p["wd"] = 0.1 * jax.random.normal(ks[3], (in_places, PE), jnp.float32)
        p["gd"] = jnp.ones((1, PE), jnp.float32)
        p["bd"] = jnp.zeros((1, PE), jnp.float32)
    return p


# ----------------------------- pure-JAX reference -----------------------------

def ref_forward(x_nchw, params, stride=1, downsampling=False, expansion=4):
    s = stride
    dn = ("NHWC", "HWIO", "NHWC")
    x = jnp.transpose(x_nchw, (0, 2, 3, 1)).astype(jnp.float32)
    Cin = x.shape[-1]
    P = params["w1"].shape[1]
    PE = P * expansion

    def bn(y, g, b, eps=_EPS):
        mu = jnp.mean(y, axis=(0, 1, 2), keepdims=True)
        var = jnp.mean(jnp.square(y - mu), axis=(0, 1, 2), keepdims=True)
        return (y - mu) / jnp.sqrt(var + eps) * g.reshape(1, 1, 1, -1) + b.reshape(1, 1, 1, -1)

    h = lax.conv_general_dilated(x, params["w1"].reshape(1, 1, Cin, P),
                                 (1, 1), "VALID", dimension_numbers=dn)
    h = jnp.maximum(bn(h, params["g1"], params["b1"]), 0.0)
    h = lax.conv_general_dilated(h, params["w2f"], (s, s), ((1, 1), (1, 1)),
                                 dimension_numbers=dn)
    h = jnp.maximum(bn(h, params["g2"], params["b2"]), 0.0)
    h = lax.conv_general_dilated(h, params["w3"].reshape(1, 1, P, PE),
                                 (1, 1), "VALID", dimension_numbers=dn)
    h = bn(h, params["g3"], params["b3"])
    if downsampling:
        r = lax.conv_general_dilated(x, params["wd"].reshape(1, 1, Cin, PE),
                                     (s, s), "VALID", dimension_numbers=dn)
        r = bn(r, params["gd"], params["bd"])
    else:
        r = x
    out = jnp.maximum(h + r, 0.0)
    return jnp.transpose(out, (0, 3, 1, 2))


# ------------------------------------ main ------------------------------------

if __name__ == "__main__":
    key = jax.random.PRNGKey(0)
    kx1, kx2, kp1, kp2 = jax.random.split(key, 4)

    fwd = jax.jit(bottleneck_forward,
                  static_argnames=("stride", "downsampling", "expansion", "use_bf16"))

    # Config A: downsampling bottleneck (stride=2). x: NCHW (2,4,16,16) -> (2,16,8,8)
    xA = jax.random.normal(kx1, (2, 4, 16, 16), jnp.float32)
    pA = init_params(kp1, in_places=4, places=4, expansion=4, downsampling=True)
    refA = jax.block_until_ready(ref_forward(xA, pA, stride=2, downsampling=True))

    outA = jax.block_until_ready(fwd(xA, pA, stride=2, downsampling=True, use_bf16=False))
    assert outA.shape == (2, 16, 8, 8), outA.shape
    assert jnp.allclose(outA, refA, atol=1e-3, rtol=1e-3), \
        float(jnp.max(jnp.abs(outA - refA)))

    # Same config on the bf16-MXU fast path (looser sanity tolerance: bf16 operands
    # give ~1% relative error after three conv+BN stages; f32 path above is exact).
    outA16 = jax.block_until_ready(fwd(xA, pA, stride=2, downsampling=True, use_bf16=True))
    assert jnp.allclose(outA16, refA, atol=1e-1, rtol=1e-1), \
        float(jnp.max(jnp.abs(outA16 - refA)))

    # Config B: identity bottleneck (stride=1). x: NCHW (2,16,16,16) -> (2,16,16,16)
    xB = jax.random.normal(kx2, (2, 16, 16, 16), jnp.float32)
    pB = init_params(kp2, in_places=16, places=4, expansion=4, downsampling=False)
    refB = jax.block_until_ready(ref_forward(xB, pB, stride=1, downsampling=False))

    outB = jax.block_until_ready(fwd(xB, pB, stride=1, downsampling=False, use_bf16=False))
    assert outB.shape == (2, 16, 16, 16), outB.shape
    assert jnp.allclose(outB, refB, atol=1e-3, rtol=1e-3), \
        float(jnp.max(jnp.abs(outB - refB)))

    print("KERNEL_OK")
</pallas_src>

<mosaic_0001>
module attributes {stable_mosaic.version = 11 : i64} {
  func.func @_conv_stats_kernel(%arg0: i32, %arg1: memref<512x128xf32, #tpu.memory_space<vmem>>, %arg2: memref<128x128xf32, #tpu.memory_space<vmem>>, %arg3: memref<1x2x128xf32, #tpu.memory_space<vmem>>) attributes {dimension_semantics = [#tpu.dimension_semantics<parallel>], iteration_bounds = array<i64: 1>, scalar_prefetch = 0 : i64, scratch_operands = 0 : i64, tpu.core_type = #tpu.core_type<tc>, window_params = [{transform_indices = @transform_0, window_bounds = array<i64: 512, 128>}, {pipeline_mode = #tpu.pipeline_mode<synchronous>, transform_indices = @transform_1, window_bounds = array<i64: 128, 128>}, {transform_indices = @transform_2, window_bounds = array<i64: 1, 2, 128>}]} {
    %c0 = arith.constant 0 : index
    %c0_0 = arith.constant 0 : index
    %0 = vector.load %arg1[%c0, %c0_0] : memref<512x128xf32, #tpu.memory_space<vmem>>, vector<512x128xf32>
    %c0_1 = arith.constant 0 : index
    %c0_2 = arith.constant 0 : index
    %1 = vector.load %arg2[%c0_1, %c0_2] : memref<128x128xf32, #tpu.memory_space<vmem>>, vector<128x128xf32>
    %cst = arith.constant dense<0.000000e+00> : vector<512x128xf32>
    %2 = tpu.matmul %0, %1, %cst {dimension_numbers = #tpu.dot_dimension_numbers<[1], [0], [0], [1], [0, 0, 1, 1], [], []>} : vector<512x128xf32>, vector<128x128xf32>, vector<512x128xf32> -> vector<512x128xf32>
    %cst_3 = arith.constant dense<0.000000e+00> : vector<128xf32>
    %3 = vector.multi_reduction <add>, %2, %cst_3 [0] : vector<512x128xf32> to vector<128xf32>
    %4 = vector.shape_cast %3 : vector<128xf32> to vector<1x128xf32>
    %c0_4 = arith.constant 0 : index
    %c0_5 = arith.constant 0 : index
    %c0_6 = arith.constant 0 : index
    %5 = vector.load %arg3[%c0_4, %c0_5, %c0_6] : memref<1x2x128xf32, #tpu.memory_space<vmem>>, vector<1x1x128xf32>
    %6 = vector.shape_cast %5 : vector<1x1x128xf32> to vector<1x128xf32>
    %7 = vector.shape_cast %4 : vector<1x128xf32> to vector<1x1x128xf32>
    tpu.vector_store %arg3[%c0_4, %c0_5, %c0_6], %7 {strides = array<i32>} : memref<1x2x128xf32, #tpu.memory_space<vmem>>, vector<1x1x128xf32>,
    %8 = arith.mulf %2, %2 : vector<512x128xf32>
    %cst_7 = arith.constant dense<0.000000e+00> : vector<128xf32>
    %9 = vector.multi_reduction <add>, %8, %cst_7 [0] : vector<512x128xf32> to vector<128xf32>
    %10 = vector.shape_cast %9 : vector<128xf32> to vector<1x128xf32>
    %c0_8 = arith.constant 0 : index
    %c1 = arith.constant 1 : index
    %c0_9 = arith.constant 0 : index
    %11 = vector.load %arg3[%c0_8, %c1, %c0_9] : memref<1x2x128xf32, #tpu.memory_space<vmem>>, vector<1x1x128xf32>
    %12 = vector.shape_cast %11 : vector<1x1x128xf32> to vector<1x128xf32>
    %13 = vector.shape_cast %10 : vector<1x128xf32> to vector<1x1x128xf32>
    tpu.vector_store %arg3[%c0_8, %c1, %c0_9], %13 {strides = array<i32>} : memref<1x2x128xf32, #tpu.memory_space<vmem>>, vector<1x1x128xf32>,
    return
  }
  func.func @transform_0(%arg0: i32) -> (i32, i32) {
    %c0_i32 = arith.constant 0 : i32
    %c0_i32_0 = arith.constant 0 : i32
    return %arg0, %c0_i32 : i32, i32
  }
  func.func @transform_1(%arg0: i32) -> (i32, i32) {
    %c0_i32 = arith.constant 0 : i32
    %c0_i32_0 = arith.constant 0 : i32
    %c0_i32_1 = arith.constant 0 : i32
    return %c0_i32, %c0_i32_0 : i32, i32
  }
  func.func @transform_2(%arg0: i32) -> (i32, i32, i32) {
    %c0_i32 = arith.constant 0 : i32
    %c0_i32_0 = arith.constant 0 : i32
    %c0_i32_1 = arith.constant 0 : i32
    return %arg0, %c0_i32, %c0_i32_0 : i32, i32, i32
  }
}

module attributes {stable_mosaic.version = 11 : i64} {
  func.func @kernel(%arg0: i32, %arg1: memref<1x32x8x128xf32, #tpu.memory_space<vmem>>, %arg2: memref<128x128xf32, #tpu.memory_space<vmem>>, %arg3: memref<1x2x128xf32, #tpu.memory_space<vmem>>, %arg4: memref<1x128xf32, #tpu.memory_space<vmem>>, %arg5: memref<1x128xf32, #tpu.memory_space<vmem>>, %arg6: memref<9x128x128xf32, #tpu.memory_space<vmem>>, %arg7: memref<1x8x8x128xf32, #tpu.memory_space<vmem>>, %arg8: memref<1x2x128xf32, #tpu.memory_space<vmem>>, %arg9: memref<4x9x16x128xf32, #tpu.memory_space<vmem>>) attributes {dimension_semantics = [#tpu.dimension_semantics<parallel>], iteration_bounds = array<i64: 2>, scalar_prefetch = 0 : i64, scratch_operands = 1 : i64, tpu.core_type = #tpu.core_type<tc>, window_params = [{transform_indices = @transform_0, window_bounds = array<i64: 1, 32, 8, 128>}, {pipeline_mode = #tpu.pipeline_mode<synchronous>, transform_indices = @transform_1, window_bounds = array<i64: 128, 128>}, {pipeline_mode = #tpu.pipeline_mode<synchronous>, transform_indices = @transform_2, window_bounds = array<i64: 1, 2, 128>}, {pipeline_mode = #tpu.pipeline_mode<synchronous>, transform_indices = @transform_3, window_bounds = array<i64: 1, 128>}, {pipeline_mode = #tpu.pipeline_mode<synchronous>, transform_indices = @transform_4, window_bounds = array<i64: 1, 128>}, {pipeline_mode = #tpu.pipeline_mode<synchronous>, transform_indices = @transform_5, window_bounds = array<i64: 9, 128, 128>}, {transform_indices = @transform_6, window_bounds = array<i64: 1, 8, 8, 128>}, {transform_indices = @transform_7, window_bounds = array<i64: 1, 2, 128>}]} {
    %c0 = arith.constant 0 : index
    %c0_0 = arith.constant 0 : index
    %c0_1 = arith.constant 0 : index
    %0 = vector.load %arg3[%c0, %c0_0, %c0_1] : memref<1x2x128xf32, #tpu.memory_space<vmem>>, vector<1x2x128xf32>
    %c0_2 = arith.constant 0 : index
    %c0_3 = arith.constant 0 : index
    %1 = vector.load %arg4[%c0_2, %c0_3] : memref<1x128xf32, #tpu.memory_space<vmem>>, vector<1x128xf32>
    %c0_4 = arith.constant 0 : index
    %c0_5 = arith.constant 0 : index
    %2 = vector.load %arg5[%c0_4, %c0_5] : memref<1x128xf32, #tpu.memory_space<vmem>>, vector<1x128xf32>
    %cst = arith.constant dense<0.000000e+00> : vector<2x128xf32>
    %3 = vector.multi_reduction <add>, %0, %cst [0] : vector<1x2x128xf32> to vector<2x128xf32>
    %4 = vector.extract_strided_slice %3 {offsets = [0, 0], sizes = [1, 128], strides = [1, 1]} : vector<2x128xf32> to vector<1x128xf32>
    %cst_6 = arith.constant 0.001953125 : f32
    %5 = vector.broadcast %cst_6 : f32 to vector<1x128xf32>
    %6 = arith.mulf %4, %5 : vector<1x128xf32>
    %7 = vector.extract_strided_slice %3 {offsets = [1, 0], sizes = [1, 128], strides = [1, 1]} : vector<2x128xf32> to vector<1x128xf32>
    %cst_7 = arith.constant 0.001953125 : f32
    %8 = vector.broadcast %cst_7 : f32 to vector<1x128xf32>
    %9 = arith.mulf %7, %8 : vector<1x128xf32>
    %10 = arith.mulf %6, %6 : vector<1x128xf32>
    %11 = arith.subf %9, %10 : vector<1x128xf32>
    %cst_8 = arith.constant 9.99999974E-6 : f32
    %12 = vector.broadcast %cst_8 : f32 to vector<1x128xf32>
    %13 = arith.addf %11, %12 : vector<1x128xf32>
    %14 = math.rsqrt %13 : vector<1x128xf32>
    %15 = arith.mulf %1, %14 : vector<1x128xf32>
    %16 = arith.mulf %6, %15 : vector<1x128xf32>
    %17 = arith.subf %2, %16 : vector<1x128xf32>
    %c0_9 = arith.constant 0 : index
    %c0_10 = arith.constant 0 : index
    %c0_11 = arith.constant 0 : index
    %c0_12 = arith.constant 0 : index
    %18 = vector.load %arg1[%c0_9, %c0_10, %c0_11, %c0_12] : memref<1x32x8x128xf32, #tpu.memory_space<vmem>>, vector<1x32x8x128xf32>
    %19 = vector.shape_cast %18 : vector<1x32x8x128xf32> to vector<32x8x128xf32>
    %20 = vector.shape_cast %19 : vector<32x8x128xf32> to vector<256x128xf32>
    %c0_13 = arith.constant 0 : index
    %c0_14 = arith.constant 0 : index
    %21 = vector.load %arg2[%c0_13, %c0_14] : memref<128x128xf32, #tpu.memory_space<vmem>>, vector<128x128xf32>
    %cst_15 = arith.constant dense<0.000000e+00> : vector<256x128xf32>
    %22 = tpu.matmul %20, %21, %cst_15 {dimension_numbers = #tpu.dot_dimension_numbers<[1], [0], [0], [1], [0, 0, 1, 1], [], []>} : vector<256x128xf32>, vector<128x128xf32>, vector<256x128xf32> -> vector<256x128xf32>
    %23 = vector.broadcast %15 : vector<1x128xf32> to vector<256x128xf32>
    %24 = arith.mulf %22, %23 : vector<256x128xf32>
    %25 = vector.broadcast %17 : vector<1x128xf32> to vector<256x128xf32>
    %26 = arith.addf %24, %25 : vector<256x128xf32>
    %cst_16 = arith.constant 0.000000e+00 : f32
    %27 = vector.broadcast %cst_16 : f32 to vector<256x128xf32>
    %28 = arith.maximumf %26, %27 : vector<256x128xf32>
    %29 = vector.shape_cast %28 : vector<256x128xf32> to vector<4x8x8x128xf32>
    %cst_17 = arith.constant 0.000000e+00 : f32
    %30 = vector.broadcast %cst_17 : f32 to vector<4x9x16x128xf32>
    %c0_18 = arith.constant 0 : index
    %c0_19 = arith.constant 0 : index
    %c0_20 = arith.constant 0 : index
    %c0_21 = arith.constant 0 : index
    %31 = vector.load %arg9[%c0_18, %c0_19, %c0_20, %c0_21] : memref<4x9x16x128xf32, #tpu.memory_space<vmem>>, vector<4x9x16x128xf32>
    tpu.vector_store %arg9[%c0_18, %c0_19, %c0_20, %c0_21], %30 {strides = array<i32>} : memref<4x9x16x128xf32, #tpu.memory_space<vmem>>, vector<4x9x16x128xf32>,
    %32 = vector.extract_strided_slice %29 {offsets = [0, 0, 0, 0], sizes = [1, 8, 8, 128], strides = [1, 1, 1, 1]} : vector<4x8x8x128xf32> to vector<1x8x8x128xf32>
    %33 = vector.shape_cast %32 : vector<1x8x8x128xf32> to vector<8x8x128xf32>
    %c3 = arith.constant 3 : index
    %c0_22 = arith.constant 0 : index
    %c0_23 = arith.constant 0 : index
    %c0_24 = arith.constant 0 : index
    %34 = vector.load %arg9[%c3, %c0_22, %c0_23, %c0_24] : memref<4x9x16x128xf32, #tpu.memory_space<vmem>>, vector<1x8x8x128xf32>
    %35 = vector.shape_cast %34 : vector<1x8x8x128xf32> to vector<8x8x128xf32>
    %36 = vector.shape_cast %33 : vector<8x8x128xf32> to vector<1x8x8x128xf32>
    tpu.vector_store %arg9[%c3, %c0_22, %c0_23, %c0_24], %36 {strides = array<i32>} : memref<4x9x16x128xf32, #tpu.memory_space<vmem>>, vector<1x8x8x128xf32>,
    %37 = vector.extract_strided_slice %29 {offsets = [1, 0, 0, 0], sizes = [1, 8, 8, 128], strides = [1, 1, 1, 1]} : vector<4x8x8x128xf32> to vector<1x8x8x128xf32>
    %38 = vector.shape_cast %37 : vector<1x8x8x128xf32> to vector<8x8x128xf32>
    %c2 = arith.constant 2 : index
    %c0_25 = arith.constant 0 : index
    %c1 = arith.constant 1 : index
    %c0_26 = arith.constant 0 : index
    %39 = vector.load %arg9[%c2, %c0_25, %c1, %c0_26] : memref<4x9x16x128xf32, #tpu.memory_space<vmem>>, vector<1x8x8x128xf32>
    %40 = vector.shape_cast %39 : vector<1x8x8x128xf32> to vector<8x8x128xf32>
    %41 = vector.shape_cast %38 : vector<8x8x128xf32> to vector<1x8x8x128xf32>
    tpu.vector_store %arg9[%c2, %c0_25, %c1, %c0_26], %41 {strides = array<i32>} : memref<4x9x16x128xf32, #tpu.memory_space<vmem>>, vector<1x8x8x128xf32>,
    %42 = vector.extract_strided_slice %29 {offsets = [2, 0, 0, 0], sizes = [1, 8, 8, 128], strides = [1, 1, 1, 1]} : vector<4x8x8x128xf32> to vector<1x8x8x128xf32>
    %43 = vector.shape_cast %42 : vector<1x8x8x128xf32> to vector<8x8x128xf32>
    %c1_27 = arith.constant 1 : index
    %c1_28 = arith.constant 1 : index
    %c0_29 = arith.constant 0 : index
    %c0_30 = arith.constant 0 : index
    %44 = vector.load %arg9[%c1_27, %c1_28, %c0_29, %c0_30] : memref<4x9x16x128xf32, #tpu.memory_space<vmem>>, vector<1x8x8x128xf32>
    %45 = vector.shape_cast %44 : vector<1x8x8x128xf32> to vector<8x8x128xf32>
    %46 = vector.shape_cast %43 : vector<8x8x128xf32> to vector<1x8x8x128xf32>
    tpu.vector_store %arg9[%c1_27, %c1_28, %c0_29, %c0_30], %46 {strides = array<i32>} : memref<4x9x16x128xf32, #tpu.memory_space<vmem>>, vector<1x8x8x128xf32>,
    %47 = vector.extract_strided_slice %29 {offsets = [3, 0, 0, 0], sizes = [1, 8, 8, 128], strides = [1, 1, 1, 1]} : vector<4x8x8x128xf32> to vector<1x8x8x128xf32>
    %48 = vector.shape_cast %47 : vector<1x8x8x128xf32> to vector<8x8x128xf32>
    %c0_31 = arith.constant 0 : index
    %c1_32 = arith.constant 1 : index
    %c1_33 = arith.constant 1 : index
    %c0_34 = arith.constant 0 : index
    %49 = vector.load %arg9[%c0_31, %c1_32, %c1_33, %c0_34] : memref<4x9x16x128xf32, #tpu.memory_space<vmem>>, vector<1x8x8x128xf32>
    %50 = vector.shape_cast %49 : vector<1x8x8x128xf32> to vector<8x8x128xf32>
    %51 = vector.shape_cast %48 : vector<8x8x128xf32> to vector<1x8x8x128xf32>
    tpu.vector_store %arg9[%c0_31, %c1_32, %c1_33, %c0_34], %51 {strides = array<i32>} : memref<4x9x16x128xf32, #tpu.memory_space<vmem>>, vector<1x8x8x128xf32>,
    %cst_35 = arith.constant 0.000000e+00 : f32
    %52 = vector.broadcast %cst_35 : f32 to vector<64x128xf32>
    %c0_36 = arith.constant 0 : index
    %c0_37 = arith.constant 0 : index
    %c0_38 = arith.constant 0 : index
    %c0_39 = arith.constant 0 : index
    %53 = vector.load %arg9[%c0_36, %c0_37, %c0_38, %c0_39] : memref<4x9x16x128xf32, #tpu.memory_space<vmem>>, vector<1x8x8x128xf32>
    %54 = vector.shape_cast %53 : vector<1x8x8x128xf32> to vector<8x8x128xf32>
    %55 = vector.shape_cast %54 : vector<8x8x128xf32> to vector<64x128xf32>
    %c0_40 = arith.constant 0 : index
    %c0_41 = arith.constant 0 : index
    %c0_42 = arith.constant 0 : index
    %56 = vector.load %arg6[%c0_40, %c0_41, %c0_42] : memref<9x128x128xf32, #tpu.memory_space<vmem>>, vector<1x128x128xf32>
    %57 = vector.shape_cast %56 : vector<1x128x128xf32> to vector<128x128xf32>
    %cst_43 = arith.constant dense<0.000000e+00> : vector<64x128xf32>
    %58 = tpu.matmul %55, %57, %cst_43 {dimension_numbers = #tpu.dot_dimension_numbers<[1], [0], [0], [1], [0, 0, 1, 1], [], []>} : vector<64x128xf32>, vector<128x128xf32>, vector<64x128xf32> -> vector<64x128xf32>
    %59 = arith.addf %52, %58 : vector<64x128xf32>
    %c1_44 = arith.constant 1 : index
    %c0_45 = arith.constant 0 : index
    %c0_46 = arith.constant 0 : index
    %c0_47 = arith.constant 0 : index
    %60 = vector.load %arg9[%c1_44, %c0_45, %c0_46, %c0_47] : memref<4x9x16x128xf32, #tpu.memory_space<vmem>>, vector<1x8x8x128xf32>
    %61 = vector.shape_cast %60 : vector<1x8x8x128xf32> to vector<8x8x128xf32>
    %62 = vector.shape_cast %61 : vector<8x8x128xf32> to vector<64x128xf32>
    %c1_48 = arith.constant 1 : index
    %c0_49 = arith.constant 0 : index
    %c0_50 = arith.constant 0 : index
    %63 = vector.load %arg6[%c1_48, %c0_49, %c0_50] : memref<9x128x128xf32, #tpu.memory_space<vmem>>, vector<1x128x128xf32>
    %64 = vector.shape_cast %63 : vector<1x128x128xf32> to vector<128x128xf32>
    %cst_51 = arith.constant dense<0.000000e+00> : vector<64x128xf32>
    %65 = tpu.matmul %62, %64, %cst_51 {dimension_numbers = #tpu.dot_dimension_numbers<[1], [0], [0], [1], [0, 0, 1, 1], [], []>} : vector<64x128xf32>, vector<128x128xf32>, vector<64x128xf32> -> vector<64x128xf32>
    %66 = arith.addf %59, %65 : vector<64x128xf32>
    %c0_52 = arith.constant 0 : index
    %c0_53 = arith.constant 0 : index
    %c1_54 = arith.constant 1 : index
    %c0_55 = arith.constant 0 : index
    %67 = vector.load %arg9[%c0_52, %c0_53, %c1_54, %c0_55] : memref<4x9x16x128xf32, #tpu.memory_space<vmem>>, vector<1x8x8x128xf32>
    %68 = vector.shape_cast %67 : vector<1x8x8x128xf32> to vector<8x8x128xf32>
    %69 = vector.shape_cast %68 : vector<8x8x128xf32> to vector<64x128xf32>
    %c2_56 = arith.constant 2 : index
    %c0_57 = arith.constant 0 : index
    %c0_58 = arith.constant 0 : index
    %70 = vector.load %arg6[%c2_56, %c0_57, %c0_58] : memref<9x128x128xf32, #tpu.memory_space<vmem>>, vector<1x128x128xf32>
    %71 = vector.shape_cast %70 : vector<1x128x128xf32> to vector<128x128xf32>
    %cst_59 = arith.constant dense<0.000000e+00> : vector<64x128xf32>
    %72 = tpu.matmul %69, %71, %cst_59 {dimension_numbers = #tpu.dot_dimension_numbers<[1], [0], [0], [1], [0, 0, 1, 1], [], []>} : vector<64x128xf32>, vector<128x128xf32>, vector<64x128xf32> -> vector<64x128xf32>
    %73 = arith.addf %66, %72 : vector<64x128xf32>
    %c2_60 = arith.constant 2 : index
    %c0_61 = arith.constant 0 : index
    %c0_62 = arith.constant 0 : index
    %c0_63 = arith.constant 0 : index
    %74 = vector.load %arg9[%c2_60, %c0_61, %c0_62, %c0_63] : memref<4x9x16x128xf32, #tpu.memory_space<vmem>>, vector<1x8x8x128xf32>
    %75 = vector.shape_cast %74 : vector<1x8x8x128xf32> to vector<8x8x128xf32>
    %76 = vector.shape_cast %75 : vector<8x8x128xf32> to vector<64x128xf32>
    %c3_64 = arith.constant 3 : index
    %c0_65 = arith.constant 0 : index
    %c0_66 = arith.constant 0 : index
    %77 = vector.load %arg6[%c3_64, %c0_65, %c0_66] : memref<9x128x128xf32, #tpu.memory_space<vmem>>, vector<1x128x128xf32>
    %78 = vector.shape_cast %77 : vector<1x128x128xf32> to vector<128x128xf32>
    %cst_67 = arith.constant dense<0.000000e+00> : vector<64x128xf32>
    %79 = tpu.matmul %76, %78, %cst_67 {dimension_numbers = #tpu.dot_dimension_numbers<[1], [0], [0], [1], [0, 0, 1, 1], [], []>} : vector<64x128xf32>, vector<128x128xf32>, vector<64x128xf32> -> vector<64x128xf32>
    %80 = arith.addf %73, %79 : vector<64x128xf32>
    %c3_68 = arith.constant 3 : index
    %c0_69 = arith.constant 0 : index
    %c0_70 = arith.constant 0 : index
    %c0_71 = arith.constant 0 : index
    %81 = vector.load %arg9[%c3_68, %c0_69, %c0_70, %c0_71] : memref<4x9x16x128xf32, #tpu.memory_space<vmem>>, vector<1x8x8x128xf32>
    %82 = vector.shape_cast %81 : vector<1x8x8x128xf32> to vector<8x8x128xf32>
    %83 = vector.shape_cast %82 : vector<8x8x128xf32> to vector<64x128xf32>
    %c4 = arith.constant 4 : index
    %c0_72 = arith.constant 0 : index
    %c0_73 = arith.constant 0 : index
    %84 = vector.load %arg6[%c4, %c0_72, %c0_73] : memref<9x128x128xf32, #tpu.memory_space<vmem>>, vector<1x128x128xf32>
    %85 = vector.shape_cast %84 : vector<1x128x128xf32> to vector<128x128xf32>
    %cst_74 = arith.constant dense<0.000000e+00> : vector<64x128xf32>
    %86 = tpu.matmul %83, %85, %cst_74 {dimension_numbers = #tpu.dot_dimension_numbers<[1], [0], [0], [1], [0, 0, 1, 1], [], []>} : vector<64x128xf32>, vector<128x128xf32>, vector<64x128xf32> -> vector<64x128xf32>
    %87 = arith.addf %80, %86 : vector<64x128xf32>
    %c2_75 = arith.constant 2 : index
    %c0_76 = arith.constant 0 : index
    %c1_77 = arith.constant 1 : index
    %c0_78 = arith.constant 0 : index
    %88 = vector.load %arg9[%c2_75, %c0_76, %c1_77, %c0_78] : memref<4x9x16x128xf32, #tpu.memory_space<vmem>>, vector<1x8x8x128xf32>
    %89 = vector.shape_cast %88 : vector<1x8x8x128xf32> to vector<8x8x128xf32>
    %90 = vector.shape_cast %89 : vector<8x8x128xf32> to vector<64x128xf32>
    %c5 = arith.constant 5 : index
    %c0_79 = arith.constant 0 : index
    %c0_80 = arith.constant 0 : index
    %91 = vector.load %arg6[%c5, %c0_79, %c0_80] : memref<9x128x128xf32, #tpu.memory_space<vmem>>, vector<1x128x128xf32>
    %92 = vector.shape_cast %91 : vector<1x128x128xf32> to vector<128x128xf32>
    %cst_81 = arith.constant dense<0.000000e+00> : vector<64x128xf32>
    %93 = tpu.matmul %90, %92, %cst_81 {dimension_numbers = #tpu.dot_dimension_numbers<[1], [0], [0], [1], [0, 0, 1, 1], [], []>} : vector<64x128xf32>, vector<128x128xf32>, vector<64x128xf32> -> vector<64x128xf32>
    %94 = arith.addf %87, %93 : vector<64x128xf32>
    %c0_82 = arith.constant 0 : index
    %c1_83 = arith.constant 1 : index
    %c0_84 = arith.constant 0 : index
    %c0_85 = arith.constant 0 : index
    %95 = vector.load %arg9[%c0_82, %c1_83, %c0_84, %c0_85] : memref<4x9x16x128xf32, #tpu.memory_space<vmem>>, vector<1x8x8x128xf32>
    %96 = vector.shape_cast %95 : vector<1x8x8x128xf32> to vector<8x8x128xf32>
    %97 = vector.shape_cast %96 : vector<8x8x128xf32> to vector<64x128xf32>
    %c6 = arith.constant 6 : index
    %c0_86 = arith.constant 0 : index
    %c0_87 = arith.constant 0 : index
    %98 = vector.load %arg6[%c6, %c0_86, %c0_87] : memref<9x128x128xf32, #tpu.memory_space<vmem>>, vector<1x128x128xf32>
    %99 = vector.shape_cast %98 : vector<1x128x128xf32> to vector<128x128xf32>
    %cst_88 = arith.constant dense<0.000000e+00> : vector<64x128xf32>
    %100 = tpu.matmul %97, %99, %cst_88 {dimension_numbers = #tpu.dot_dimension_numbers<[1], [0], [0], [1], [0, 0, 1, 1], [], []>} : vector<64x128xf32>, vector<128x128xf32>, vector<64x128xf32> -> vector<64x128xf32>
    %101 = arith.addf %94, %100 : vector<64x128xf32>
    %c1_89 = arith.constant 1 : index
    %c1_90 = arith.constant 1 : index
    %c0_91 = arith.constant 0 : index
    %c0_92 = arith.constant 0 : index
    %102 = vector.load %arg9[%c1_89, %c1_90, %c0_91, %c0_92] : memref<4x9x16x128xf32, #tpu.memory_space<vmem>>, vector<1x8x8x128xf32>
    %103 = vector.shape_cast %102 : vector<1x8x8x128xf32> to vector<8x8x128xf32>
    %104 = vector.shape_cast %103 : vector<8x8x128xf32> to vector<64x128xf32>
    %c7 = arith.constant 7 : index
    %c0_93 = arith.constant 0 : index
    %c0_94 = arith.constant 0 : index
    %105 = vector.load %arg6[%c7, %c0_93, %c0_94] : memref<9x128x128xf32, #tpu.memory_space<vmem>>, vector<1x128x128xf32>
    %106 = vector.shape_cast %105 : vector<1x128x128xf32> to vector<128x128xf32>
    %cst_95 = arith.constant dense<0.000000e+00> : vector<64x128xf32>
    %107 = tpu.matmul %104, %106, %cst_95 {dimension_numbers = #tpu.dot_dimension_numbers<[1], [0], [0], [1], [0, 0, 1, 1], [], []>} : vector<64x128xf32>, vector<128x128xf32>, vector<64x128xf32> -> vector<64x128xf32>
    %108 = arith.addf %101, %107 : vector<64x128xf32>
    %c0_96 = arith.constant 0 : index
    %c1_97 = arith.constant 1 : index
    %c1_98 = arith.constant 1 : index
    %c0_99 = arith.constant 0 : index
    %109 = vector.load %arg9[%c0_96, %c1_97, %c1_98, %c0_99] : memref<4x9x16x128xf32, #tpu.memory_space<vmem>>, vector<1x8x8x128xf32>
    %110 = vector.shape_cast %109 : vector<1x8x8x128xf32> to vector<8x8x128xf32>
    %111 = vector.shape_cast %110 : vector<8x8x128xf32> to vector<64x128xf32>
    %c8 = arith.constant 8 : index
    %c0_100 = arith.constant 0 : index
    %c0_101 = arith.constant 0 : index
    %112 = vector.load %arg6[%c8, %c0_100, %c0_101] : memref<9x128x128xf32, #tpu.memory_space<vmem>>, vector<1x128x128xf32>
    %113 = vector.shape_cast %112 : vector<1x128x128xf32> to vector<128x128xf32>
    %cst_102 = arith.constant dense<0.000000e+00> : vector<64x128xf32>
    %114 = tpu.matmul %111, %113, %cst_102 {dimension_numbers = #tpu.dot_dimension_numbers<[1], [0], [0], [1], [0, 0, 1, 1], [], []>} : vector<64x128xf32>, vector<128x128xf32>, vector<64x128xf32> -> vector<64x128xf32>
    %115 = arith.addf %108, %114 : vector<64x128xf32>
    %116 = vector.shape_cast %115 : vector<64x128xf32> to vector<1x8x8x128xf32>
    %c0_103 = arith.constant 0 : index
    %c0_104 = arith.constant 0 : index
    %c0_105 = arith.constant 0 : index
    %c0_106 = arith.constant 0 : index
    %117 = vector.load %arg7[%c0_103, %c0_104, %c0_105, %c0_106] : memref<1x8x8x128xf32, #tpu.memory_space<vmem>>, vector<1x8x8x128xf32>
    tpu.vector_store %arg7[%c0_103, %c0_104, %c0_105, %c0_106], %116 {strides = array<i32>} : memref<1x8x8x128xf32, #tpu.memory_space<vmem>>, vector<1x8x8x128xf32>,
    %cst_107 = arith.constant dense<0.000000e+00> : vector<128xf32>
    %118 = vector.multi_reduction <add>, %115, %cst_107 [0] : vector<64x128xf32> to vector<128xf32>
    %119 = vector.shape_cast %118 : vector<128xf32> to vector<1x128xf32>
    %c0_108 = arith.constant 0 : index
    %c0_109 = arith.constant 0 : index
    %c0_110 = arith.constant 0 : index
    %120 = vector.load %arg8[%c0_108, %c0_109, %c0_110] : memref<1x2x128xf32, #tpu.memory_space<vmem>>, vector<1x1x128xf32>
    %121 = vector.shape_cast %120 : vector<1x1x128xf32> to vector<1x128xf32>
    %122 = vector.shape_cast %119 : vector<1x128xf32> to vector<1x1x128xf32>
    tpu.vector_store %arg8[%c0_108, %c0_109, %c0_110], %122 {strides = array<i32>} : memref<1x2x128xf32, #tpu.memory_space<vmem>>, vector<1x1x128xf32>,
    %123 = arith.mulf %115, %115 : vector<64x128xf32>
    %cst_111 = arith.constant dense<0.000000e+00> : vector<128xf32>
    %124 = vector.multi_reduction <add>, %123, %cst_111 [0] : vector<64x128xf32> to vector<128xf32>
    %125 = vector.shape_cast %124 : vector<128xf32> to vector<1x128xf32>
    %c0_112 = arith.constant 0 : index
    %c1_113 = arith.constant 1 : index
    %c0_114 = arith.constant 0 : index
    %126 = vector.load %arg8[%c0_112, %c1_113, %c0_114] : memref<1x2x128xf32, #tpu.memory_space<vmem>>, vector<1x1x128xf32>
    %127 = vector.shape_cast %126 : vector<1x1x128xf32> to vector<1x128xf32>
    %128 = vector.shape_cast %125 : vector<1x128xf32> to vector<1x1x128xf32>
    tpu.vector_store %arg8[%c0_112, %c1_113, %c0_114], %128 {strides = array<i32>} : memref<1x2x128xf32, #tpu.memory_space<vmem>>, vector<1x1x128xf32>,
    return
  }
  func.func @transform_0(%arg0: i32) -> (i32, i32, i32, i32) {
    %c0_i32 = arith.constant 0 : i32
    %c0_i32_0 = arith.constant 0 : i32
    %c0_i32_1 = arith.constant 0 : i32
    %c0_i32_2 = arith.constant 0 : i32
    return %arg0, %c0_i32, %c0_i32_0, %c0_i32_1 : i32, i32, i32, i32
  }
  func.func @transform_1(%arg0: i32) -> (i32, i32) {
    %c0_i32 = arith.constant 0 : i32
    %c0_i32_0 = arith.constant 0 : i32
    %c0_i32_1 = arith.constant 0 : i32
    return %c0_i32, %c0_i32_0 : i32, i32
  }
  func.func @transform_2(%arg0: i32) -> (i32, i32, i32) {
    %c0_i32 = arith.constant 0 : i32
    %c0_i32_0 = arith.constant 0 : i32
    %c0_i32_1 = arith.constant 0 : i32
    %c0_i32_2 = arith.constant 0 : i32
    return %c0_i32, %c0_i32_0, %c0_i32_1 : i32, i32, i32
  }
  func.func @transform_3(%arg0: i32) -> (i32, i32) {
    %c0_i32 = arith.constant 0 : i32
    %c0_i32_0 = arith.constant 0 : i32
    %c0_i32_1 = arith.constant 0 : i32
    return %c0_i32, %c0_i32_0 : i32, i32
  }
  func.func @transform_4(%arg0: i32) -> (i32, i32) {
    %c0_i32 = arith.constant 0 : i32
    %c0_i32_0 = arith.constant 0 : i32
    %c0_i32_1 = arith.constant 0 : i32
    return %c0_i32, %c0_i32_0 : i32, i32
  }
  func.func @transform_5(%arg0: i32) -> (i32, i32, i32) {
    %c0_i32 = arith.constant 0 : i32
    %c0_i32_0 = arith.constant 0 : i32
    %c0_i32_1 = arith.constant 0 : i32
    %c0_i32_2 = arith.constant 0 : i32
    return %c0_i32, %c0_i32_0, %c0_i32_1 : i32, i32, i32
  }
  func.func @transform_6(%arg0: i32) -> (i32, i32, i32, i32) {
    %c0_i32 = arith.constant 0 : i32
    %c0_i32_0 = arith.constant 0 : i32
    %c0_i32_1 = arith.constant 0 : i32
    %c0_i32_2 = arith.constant 0 : i32
    return %arg0, %c0_i32, %c0_i32_0, %c0_i32_1 : i32, i32, i32, i32
  }
  func.func @transform_7(%arg0: i32) -> (i32, i32, i32) {
    %c0_i32 = arith.constant 0 : i32
    %c0_i32_0 = arith.constant 0 : i32
    %c0_i32_1 = arith.constant 0 : i32
    return %arg0, %c0_i32, %c0_i32_0 : i32, i32, i32
  }
}

module attributes {stable_mosaic.version = 11 : i64} {
  func.func @kernel(%arg0: i32, %arg1: memref<128x128xf32, #tpu.memory_space<vmem>>, %arg2: memref<2x2x128xf32, #tpu.memory_space<vmem>>, %arg3: memref<1x128xf32, #tpu.memory_space<vmem>>, %arg4: memref<1x128xf32, #tpu.memory_space<vmem>>, %arg5: memref<128x128xf32, #tpu.memory_space<vmem>>, %arg6: memref<128x128xf32, #tpu.memory_space<vmem>>, %arg7: memref<128x128xf32, #tpu.memory_space<vmem>>, %arg8: memref<128x128xf32, #tpu.memory_space<vmem>>, %arg9: memref<1x2x128xf32, #tpu.memory_space<vmem>>, %arg10: memref<128x128xf32, #tpu.memory_space<vmem>>, %arg11: memref<1x2x128xf32, #tpu.memory_space<vmem>>) attributes {dimension_semantics = [#tpu.dimension_semantics<parallel>], iteration_bounds = array<i64: 1>, scalar_prefetch = 0 : i64, scratch_operands = 0 : i64, tpu.core_type = #tpu.core_type<tc>, window_params = [{transform_indices = @transform_0, window_bounds = array<i64: 128, 128>}, {pipeline_mode = #tpu.pipeline_mode<synchronous>, transform_indices = @transform_1, window_bounds = array<i64: 2, 2, 128>}, {pipeline_mode = #tpu.pipeline_mode<synchronous>, transform_indices = @transform_2, window_bounds = array<i64: 1, 128>}, {pipeline_mode = #tpu.pipeline_mode<synchronous>, transform_indices = @transform_3, window_bounds = array<i64: 1, 128>}, {pipeline_mode = #tpu.pipeline_mode<synchronous>, transform_indices = @transform_4, window_bounds = array<i64: 128, 128>}, {transform_indices = @transform_5, window_bounds = array<i64: 128, 128>}, {pipeline_mode = #tpu.pipeline_mode<synchronous>, transform_indices = @transform_6, window_bounds = array<i64: 128, 128>}, {transform_indices = @transform_7, window_bounds = array<i64: 128, 128>}, {transform_indices = @transform_8, window_bounds = array<i64: 1, 2, 128>}, {transform_indices = @transform_9, window_bounds = array<i64: 128, 128>}, {transform_indices = @transform_10, window_bounds = array<i64: 1, 2, 128>}]} {
    %c0 = arith.constant 0 : index
    %c0_0 = arith.constant 0 : index
    %c0_1 = arith.constant 0 : index
    %0 = vector.load %arg2[%c0, %c0_0, %c0_1] : memref<2x2x128xf32, #tpu.memory_space<vmem>>, vector<2x2x128xf32>
    %c0_2 = arith.constant 0 : index
    %c0_3 = arith.constant 0 : index
    %1 = vector.load %arg3[%c0_2, %c0_3] : memref<1x128xf32, #tpu.memory_space<vmem>>, vector<1x128xf32>
    %c0_4 = arith.constant 0 : index
    %c0_5 = arith.constant 0 : index
    %2 = vector.load %arg4[%c0_4, %c0_5] : memref<1x128xf32, #tpu.memory_space<vmem>>, vector<1x128xf32>
    %cst = arith.constant dense<0.000000e+00> : vector<2x128xf32>
    %3 = vector.multi_reduction <add>, %0, %cst [0] : vector<2x2x128xf32> to vector<2x128xf32>
    %4 = vector.extract_strided_slice %3 {offsets = [0, 0], sizes = [1, 128], strides = [1, 1]} : vector<2x128xf32> to vector<1x128xf32>
    %cst_6 = arith.constant 7.812500e-03 : f32
    %5 = vector.broadcast %cst_6 : f32 to vector<1x128xf32>
    %6 = arith.mulf %4, %5 : vector<1x128xf32>
    %7 = vector.extract_strided_slice %3 {offsets = [1, 0], sizes = [1, 128], strides = [1, 1]} : vector<2x128xf32> to vector<1x128xf32>
    %cst_7 = arith.constant 7.812500e-03 : f32
    %8 = vector.broadcast %cst_7 : f32 to vector<1x128xf32>
    %9 = arith.mulf %7, %8 : vector<1x128xf32>
    %10 = arith.mulf %6, %6 : vector<1x128xf32>
    %11 = arith.subf %9, %10 : vector<1x128xf32>
    %cst_8 = arith.constant 9.99999974E-6 : f32
    %12 = vector.broadcast %cst_8 : f32 to vector<1x128xf32>
    %13 = arith.addf %11, %12 : vector<1x128xf32>
    %14 = math.rsqrt %13 : vector<1x128xf32>
    %15 = arith.mulf %1, %14 : vector<1x128xf32>
    %16 = arith.mulf %6, %15 : vector<1x128xf32>
    %17 = arith.subf %2, %16 : vector<1x128xf32>
    %c0_9 = arith.constant 0 : index
    %c0_10 = arith.constant 0 : index
    %18 = vector.load %arg1[%c0_9, %c0_10] : memref<128x128xf32, #tpu.memory_space<vmem>>, vector<128x128xf32>
    %19 = vector.broadcast %15 : vector<1x128xf32> to vector<128x128xf32>
    %20 = arith.mulf %18, %19 : vector<128x128xf32>
    %21 = vector.broadcast %17 : vector<1x128xf32> to vector<128x128xf32>
    %22 = arith.addf %20, %21 : vector<128x128xf32>
    %cst_11 = arith.constant 0.000000e+00 : f32
    %23 = vector.broadcast %cst_11 : f32 to vector<128x128xf32>
    %24 = arith.maximumf %22, %23 : vector<128x128xf32>
    %c0_12 = arith.constant 0 : index
    %c0_13 = arith.constant 0 : index
    %25 = vector.load %arg5[%c0_12, %c0_13] : memref<128x128xf32, #tpu.memory_space<vmem>>, vector<128x128xf32>
    %cst_14 = arith.constant dense<0.000000e+00> : vector<128x128xf32>
    %26 = tpu.matmul %24, %25, %cst_14 {dimension_numbers = #tpu.dot_dimension_numbers<[1], [0], [0], [1], [0, 0, 1, 1], [], []>} : vector<128x128xf32>, vector<128x128xf32>, vector<128x128xf32> -> vector<128x128xf32>
    %c0_15 = arith.constant 0 : index
    %c0_16 = arith.constant 0 : index
    %27 = vector.load %arg8[%c0_15, %c0_16] : memref<128x128xf32, #tpu.memory_space<vmem>>, vector<128x128xf32>
    tpu.vector_store %arg8[%c0_15, %c0_16], %26 {strides = array<i32>} : memref<128x128xf32, #tpu.memory_space<vmem>>, vector<128x128xf32>,
    %cst_17 = arith.constant dense<0.000000e+00> : vector<128xf32>
    %28 = vector.multi_reduction <add>, %26, %cst_17 [0] : vector<128x128xf32> to vector<128xf32>
    %29 = vector.shape_cast %28 : vector<128xf32> to vector<1x128xf32>
    %c0_18 = arith.constant 0 : index
    %c0_19 = arith.constant 0 : index
    %c0_20 = arith.constant 0 : index
    %30 = vector.load %arg9[%c0_18, %c0_19, %c0_20] : memref<1x2x128xf32, #tpu.memory_space<vmem>>, vector<1x1x128xf32>
    %31 = vector.shape_cast %30 : vector<1x1x128xf32> to vector<1x128xf32>
    %32 = vector.shape_cast %29 : vector<1x128xf32> to vector<1x1x128xf32>
    tpu.vector_store %arg9[%c0_18, %c0_19, %c0_20], %32 {strides = array<i32>} : memref<1x2x128xf32, #tpu.memory_space<vmem>>, vector<1x1x128xf32>,
    %33 = arith.mulf %26, %26 : vector<128x128xf32>
    %cst_21 = arith.constant dense<0.000000e+00> : vector<128xf32>
    %34 = vector.multi_reduction <add>, %33, %cst_21 [0] : vector<128x128xf32> to vector<128xf32>
    %35 = vector.shape_cast %34 : vector<128xf32> to vector<1x128xf32>
    %c0_22 = arith.constant 0 : index
    %c1 = arith.constant 1 : index
    %c0_23 = arith.constant 0 : index
    %36 = vector.load %arg9[%c0_22, %c1, %c0_23] : memref<1x2x128xf32, #tpu.memory_space<vmem>>, vector<1x1x128xf32>
    %37 = vector.shape_cast %36 : vector<1x1x128xf32> to vector<1x128xf32>
    %38 = vector.shape_cast %35 : vector<1x128xf32> to vector<1x1x128xf32>
    tpu.vector_store %arg9[%c0_22, %c1, %c0_23], %38 {strides = array<i32>} : memref<1x2x128xf32, #tpu.memory_space<vmem>>, vector<1x1x128xf32>,
    %c0_24 = arith.constant 0 : index
    %c0_25 = arith.constant 0 : index
    %39 = vector.load %arg6[%c0_24, %c0_25] : memref<128x128xf32, #tpu.memory_space<vmem>>, vector<128x128xf32>
    %c0_26 = arith.constant 0 : index
    %c0_27 = arith.constant 0 : index
    %40 = vector.load %arg7[%c0_26, %c0_27] : memref<128x128xf32, #tpu.memory_space<vmem>>, vector<128x128xf32>
    %cst_28 = arith.constant dense<0.000000e+00> : vector<128x128xf32>
    %41 = tpu.matmul %39, %40, %cst_28 {dimension_numbers = #tpu.dot_dimension_numbers<[1], [0], [0], [1], [0, 0, 1, 1], [], []>} : vector<128x128xf32>, vector<128x128xf32>, vector<128x128xf32> -> vector<128x128xf32>
    %c0_29 = arith.constant 0 : index
    %c0_30 = arith.constant 0 : index
    %42 = vector.load %arg10[%c0_29, %c0_30] : memref<128x128xf32, #tpu.memory_space<vmem>>, vector<128x128xf32>
    tpu.vector_store %arg10[%c0_29, %c0_30], %41 {strides = array<i32>} : memref<128x128xf32, #tpu.memory_space<vmem>>, vector<128x128xf32>,
    %cst_31 = arith.constant dense<0.000000e+00> : vector<128xf32>
    %43 = vector.multi_reduction <add>, %41, %cst_31 [0] : vector<128x128xf32> to vector<128xf32>
    %44 = vector.shape_cast %43 : vector<128xf32> to vector<1x128xf32>
    %c0_32 = arith.constant 0 : index
    %c0_33 = arith.constant 0 : index
    %c0_34 = arith.constant 0 : index
    %45 = vector.load %arg11[%c0_32, %c0_33, %c0_34] : memref<1x2x128xf32, #tpu.memory_space<vmem>>, vector<1x1x128xf32>
    %46 = vector.shape_cast %45 : vector<1x1x128xf32> to vector<1x128xf32>
    %47 = vector.shape_cast %44 : vector<1x128xf32> to vector<1x1x128xf32>
    tpu.vector_store %arg11[%c0_32, %c0_33, %c0_34], %47 {strides = array<i32>} : memref<1x2x128xf32, #tpu.memory_space<vmem>>, vector<1x1x128xf32>,
    %48 = arith.mulf %41, %41 : vector<128x128xf32>
    %cst_35 = arith.constant dense<0.000000e+00> : vector<128xf32>
    %49 = vector.multi_reduction <add>, %48, %cst_35 [0] : vector<128x128xf32> to vector<128xf32>
    %50 = vector.shape_cast %49 : vector<128xf32> to vector<1x128xf32>
    %c0_36 = arith.constant 0 : index
    %c1_37 = arith.constant 1 : index
    %c0_38 = arith.constant 0 : index
    %51 = vector.load %arg11[%c0_36, %c1_37, %c0_38] : memref<1x2x128xf32, #tpu.memory_space<vmem>>, vector<1x1x128xf32>
    %52 = vector.shape_cast %51 : vector<1x1x128xf32> to vector<1x128xf32>
    %53 = vector.shape_cast %50 : vector<1x128xf32> to vector<1x1x128xf32>
    tpu.vector_store %arg11[%c0_36, %c1_37, %c0_38], %53 {strides = array<i32>} : memref<1x2x128xf32, #tpu.memory_space<vmem>>, vector<1x1x128xf32>,
    return
  }
  func.func @transform_0(%arg0: i32) -> (i32, i32) {
    %c0_i32 = arith.constant 0 : i32
    %c0_i32_0 = arith.constant 0 : i32
    return %arg0, %c0_i32 : i32, i32
  }
  func.func @transform_1(%arg0: i32) -> (i32, i32, i32) {
    %c0_i32 = arith.constant 0 : i32
    %c0_i32_0 = arith.constant 0 : i32
    %c0_i32_1 = arith.constant 0 : i32
    %c0_i32_2 = arith.constant 0 : i32
    return %c0_i32, %c0_i32_0, %c0_i32_1 : i32, i32, i32
  }
  func.func @transform_2(%arg0: i32) -> (i32, i32) {
    %c0_i32 = arith.constant 0 : i32
    %c0_i32_0 = arith.constant 0 : i32
    %c0_i32_1 = arith.constant 0 : i32
    return %c0_i32, %c0_i32_0 : i32, i32
  }
  func.func @transform_3(%arg0: i32) -> (i32, i32) {
    %c0_i32 = arith.constant 0 : i32
    %c0_i32_0 = arith.constant 0 : i32
    %c0_i32_1 = arith.constant 0 : i32
    return %c0_i32, %c0_i32_0 : i32, i32
  }
  func.func @transform_4(%arg0: i32) -> (i32, i32) {
    %c0_i32 = arith.constant 0 : i32
    %c0_i32_0 = arith.constant 0 : i32
    %c0_i32_1 = arith.constant 0 : i32
    return %c0_i32, %c0_i32_0 : i32, i32
  }
  func.func @transform_5(%arg0: i32) -> (i32, i32) {
    %c0_i32 = arith.constant 0 : i32
    %c0_i32_0 = arith.constant 0 : i32
    return %arg0, %c0_i32 : i32, i32
  }
  func.func @transform_6(%arg0: i32) -> (i32, i32) {
    %c0_i32 = arith.constant 0 : i32
    %c0_i32_0 = arith.constant 0 : i32
    %c0_i32_1 = arith.constant 0 : i32
    return %c0_i32, %c0_i32_0 : i32, i32
  }
  func.func @transform_7(%arg0: i32) -> (i32, i32) {
    %c0_i32 = arith.constant 0 : i32
    %c0_i32_0 = arith.constant 0 : i32
    return %arg0, %c0_i32 : i32, i32
  }
  func.func @transform_8(%arg0: i32) -> (i32, i32, i32) {
    %c0_i32 = arith.constant 0 : i32
    %c0_i32_0 = arith.constant 0 : i32
    %c0_i32_1 = arith.constant 0 : i32
    return %arg0, %c0_i32, %c0_i32_0 : i32, i32, i32
  }
  func.func @transform_9(%arg0: i32) -> (i32, i32) {
    %c0_i32 = arith.constant 0 : i32
    %c0_i32_0 = arith.constant 0 : i32
    return %arg0, %c0_i32 : i32, i32
  }
  func.func @transform_10(%arg0: i32) -> (i32, i32, i32) {
    %c0_i32 = arith.constant 0 : i32
    %c0_i32_0 = arith.constant 0 : i32
    %c0_i32_1 = arith.constant 0 : i32
    return %arg0, %c0_i32, %c0_i32_0 : i32, i32, i32
  }
}

module attributes {stable_mosaic.version = 11 : i64} {
  func.func @kernel(%arg0: i32, %arg1: memref<128x128xf32, #tpu.memory_space<vmem>>, %arg2: memref<1x2x128xf32, #tpu.memory_space<vmem>>, %arg3: memref<1x128xf32, #tpu.memory_space<vmem>>, %arg4: memref<1x128xf32, #tpu.memory_space<vmem>>, %arg5: memref<128x128xf32, #tpu.memory_space<vmem>>, %arg6: memref<1x2x128xf32, #tpu.memory_space<vmem>>, %arg7: memref<1x128xf32, #tpu.memory_space<vmem>>, %arg8: memref<1x128xf32, #tpu.memory_space<vmem>>, %arg9: memref<128x128xf32, #tpu.memory_space<vmem>>) attributes {dimension_semantics = [#tpu.dimension_semantics<parallel>], iteration_bounds = array<i64: 1>, scalar_prefetch = 0 : i64, scratch_operands = 0 : i64, tpu.core_type = #tpu.core_type<tc>, window_params = [{transform_indices = @transform_0, window_bounds = array<i64: 128, 128>}, {pipeline_mode = #tpu.pipeline_mode<synchronous>, transform_indices = @transform_1, window_bounds = array<i64: 1, 2, 128>}, {pipeline_mode = #tpu.pipeline_mode<synchronous>, transform_indices = @transform_2, window_bounds = array<i64: 1, 128>}, {pipeline_mode = #tpu.pipeline_mode<synchronous>, transform_indices = @transform_3, window_bounds = array<i64: 1, 128>}, {transform_indices = @transform_4, window_bounds = array<i64: 128, 128>}, {pipeline_mode = #tpu.pipeline_mode<synchronous>, transform_indices = @transform_5, window_bounds = array<i64: 1, 2, 128>}, {pipeline_mode = #tpu.pipeline_mode<synchronous>, transform_indices = @transform_6, window_bounds = array<i64: 1, 128>}, {pipeline_mode = #tpu.pipeline_mode<synchronous>, transform_indices = @transform_7, window_bounds = array<i64: 1, 128>}, {transform_indices = @transform_8, window_bounds = array<i64: 128, 128>}]} {
    %c0 = arith.constant 0 : index
    %c0_0 = arith.constant 0 : index
    %c0_1 = arith.constant 0 : index
    %0 = vector.load %arg6[%c0, %c0_0, %c0_1] : memref<1x2x128xf32, #tpu.memory_space<vmem>>, vector<1x2x128xf32>
    %c0_2 = arith.constant 0 : index
    %c0_3 = arith.constant 0 : index
    %1 = vector.load %arg7[%c0_2, %c0_3] : memref<1x128xf32, #tpu.memory_space<vmem>>, vector<1x128xf32>
    %c0_4 = arith.constant 0 : index
    %c0_5 = arith.constant 0 : index
    %2 = vector.load %arg8[%c0_4, %c0_5] : memref<1x128xf32, #tpu.memory_space<vmem>>, vector<1x128xf32>
    %cst = arith.constant dense<0.000000e+00> : vector<2x128xf32>
    %3 = vector.multi_reduction <add>, %0, %cst [0] : vector<1x2x128xf32> to vector<2x128xf32>
    %4 = vector.extract_strided_slice %3 {offsets = [0, 0], sizes = [1, 128], strides = [1, 1]} : vector<2x128xf32> to vector<1x128xf32>
    %cst_6 = arith.constant 7.812500e-03 : f32
    %5 = vector.broadcast %cst_6 : f32 to vector<1x128xf32>
    %6 = arith.mulf %4, %5 : vector<1x128xf32>
    %7 = vector.extract_strided_slice %3 {offsets = [1, 0], sizes = [1, 128], strides = [1, 1]} : vector<2x128xf32> to vector<1x128xf32>
    %cst_7 = arith.constant 7.812500e-03 : f32
    %8 = vector.broadcast %cst_7 : f32 to vector<1x128xf32>
    %9 = arith.mulf %7, %8 : vector<1x128xf32>
    %10 = arith.mulf %6, %6 : vector<1x128xf32>
    %11 = arith.subf %9, %10 : vector<1x128xf32>
    %cst_8 = arith.constant 9.99999974E-6 : f32
    %12 = vector.broadcast %cst_8 : f32 to vector<1x128xf32>
    %13 = arith.addf %11, %12 : vector<1x128xf32>
    %14 = math.rsqrt %13 : vector<1x128xf32>
    %15 = arith.mulf %1, %14 : vector<1x128xf32>
    %16 = arith.mulf %6, %15 : vector<1x128xf32>
    %17 = arith.subf %2, %16 : vector<1x128xf32>
    %c0_9 = arith.constant 0 : index
    %c0_10 = arith.constant 0 : index
    %18 = vector.load %arg5[%c0_9, %c0_10] : memref<128x128xf32, #tpu.memory_space<vmem>>, vector<128x128xf32>
    %19 = vector.broadcast %15 : vector<1x128xf32> to vector<128x128xf32>
    %20 = arith.mulf %18, %19 : vector<128x128xf32>
    %21 = vector.broadcast %17 : vector<1x128xf32> to vector<128x128xf32>
    %22 = arith.addf %20, %21 : vector<128x128xf32>
    %c0_11 = arith.constant 0 : index
    %c0_12 = arith.constant 0 : index
    %c0_13 = arith.constant 0 : index
    %23 = vector.load %arg2[%c0_11, %c0_12, %c0_13] : memref<1x2x128xf32, #tpu.memory_space<vmem>>, vector<1x2x128xf32>
    %c0_14 = arith.constant 0 : index
    %c0_15 = arith.constant 0 : index
    %24 = vector.load %arg3[%c0_14, %c0_15] : memref<1x128xf32, #tpu.memory_space<vmem>>, vector<1x128xf32>
    %c0_16 = arith.constant 0 : index
    %c0_17 = arith.constant 0 : index
    %25 = vector.load %arg4[%c0_16, %c0_17] : memref<1x128xf32, #tpu.memory_space<vmem>>, vector<1x128xf32>
    %cst_18 = arith.constant dense<0.000000e+00> : vector<2x128xf32>
    %26 = vector.multi_reduction <add>, %23, %cst_18 [0] : vector<1x2x128xf32> to vector<2x128xf32>
    %27 = vector.extract_strided_slice %26 {offsets = [0, 0], sizes = [1, 128], strides = [1, 1]} : vector<2x128xf32> to vector<1x128xf32>
    %cst_19 = arith.constant 7.812500e-03 : f32
    %28 = vector.broadcast %cst_19 : f32 to vector<1x128xf32>
    %29 = arith.mulf %27, %28 : vector<1x128xf32>
    %30 = vector.extract_strided_slice %26 {offsets = [1, 0], sizes = [1, 128], strides = [1, 1]} : vector<2x128xf32> to vector<1x128xf32>
    %cst_20 = arith.constant 7.812500e-03 : f32
    %31 = vector.broadcast %cst_20 : f32 to vector<1x128xf32>
    %32 = arith.mulf %30, %31 : vector<1x128xf32>
    %33 = arith.mulf %29, %29 : vector<1x128xf32>
    %34 = arith.subf %32, %33 : vector<1x128xf32>
    %cst_21 = arith.constant 9.99999974E-6 : f32
    %35 = vector.broadcast %cst_21 : f32 to vector<1x128xf32>
    %36 = arith.addf %34, %35 : vector<1x128xf32>
    %37 = math.rsqrt %36 : vector<1x128xf32>
    %38 = arith.mulf %24, %37 : vector<1x128xf32>
    %39 = arith.mulf %29, %38 : vector<1x128xf32>
    %40 = arith.subf %25, %39 : vector<1x128xf32>
    %c0_22 = arith.constant 0 : index
    %c0_23 = arith.constant 0 : index
    %41 = vector.load %arg1[%c0_22, %c0_23] : memref<128x128xf32, #tpu.memory_space<vmem>>, vector<128x128xf32>
    %42 = vector.broadcast %38 : vector<1x128xf32> to vector<128x128xf32>
    %43 = arith.mulf %41, %42 : vector<128x128xf32>
    %44 = vector.broadcast %40 : vector<1x128xf32> to vector<128x128xf32>
    %45 = arith.addf %43, %44 : vector<128x128xf32>
    %46 = arith.addf %45, %22 : vector<128x128xf32>
    %cst_24 = arith.constant 0.000000e+00 : f32
    %47 = vector.broadcast %cst_24 : f32 to vector<128x128xf32>
    %48 = arith.maximumf %46, %47 : vector<128x128xf32>
    %c0_25 = arith.constant 0 : index
    %c0_26 = arith.constant 0 : index
    %49 = vector.load %arg9[%c0_25, %c0_26] : memref<128x128xf32, #tpu.memory_space<vmem>>, vector<128x128xf32>
    tpu.vector_store %arg9[%c0_25, %c0_26], %48 {strides = array<i32>} : memref<128x128xf32, #tpu.memory_space<vmem>>, vector<128x128xf32>,
    return
  }
  func.func @transform_0(%arg0: i32) -> (i32, i32) {
    %c0_i32 = arith.constant 0 : i32
    %c0_i32_0 = arith.constant 0 : i32
    return %arg0, %c0_i32 : i32, i32
  }
  func.func @transform_1(%arg0: i32) -> (i32, i32, i32) {
    %c0_i32 = arith.constant 0 : i32
    %c0_i32_0 = arith.constant 0 : i32
    %c0_i32_1 = arith.constant 0 : i32
    %c0_i32_2 = arith.constant 0 : i32
    return %c0_i32, %c0_i32_0, %c0_i32_1 : i32, i32, i32
  }
  func.func @transform_2(%arg0: i32) -> (i32, i32) {
    %c0_i32 = arith.constant 0 : i32
    %c0_i32_0 = arith.constant 0 : i32
    %c0_i32_1 = arith.constant 0 : i32
    return %c0_i32, %c0_i32_0 : i32, i32
  }
  func.func @transform_3(%arg0: i32) -> (i32, i32) {
    %c0_i32 = arith.constant 0 : i32
    %c0_i32_0 = arith.constant 0 : i32
    %c0_i32_1 = arith.constant 0 : i32
    return %c0_i32, %c0_i32_0 : i32, i32
  }
  func.func @transform_4(%arg0: i32) -> (i32, i32) {
    %c0_i32 = arith.constant 0 : i32
    %c0_i32_0 = arith.constant 0 : i32
    return %arg0, %c0_i32 : i32, i32
  }
  func.func @transform_5(%arg0: i32) -> (i32, i32, i32) {
    %c0_i32 = arith.constant 0 : i32
    %c0_i32_0 = arith.constant 0 : i32
    %c0_i32_1 = arith.constant 0 : i32
    %c0_i32_2 = arith.constant 0 : i32
    return %c0_i32, %c0_i32_0, %c0_i32_1 : i32, i32, i32
  }
  func.func @transform_6(%arg0: i32) -> (i32, i32) {
    %c0_i32 = arith.constant 0 : i32
    %c0_i32_0 = arith.constant 0 : i32
    %c0_i32_1 = arith.constant 0 : i32
    return %c0_i32, %c0_i32_0 : i32, i32
  }
  func.func @transform_7(%arg0: i32) -> (i32, i32) {
    %c0_i32 = arith.constant 0 : i32
    %c0_i32_0 = arith.constant 0 : i32
    %c0_i32_1 = arith.constant 0 : i32
    return %c0_i32, %c0_i32_0 : i32, i32
  }
  func.func @transform_8(%arg0: i32) -> (i32, i32) {
    %c0_i32 = arith.constant 0 : i32
    %c0_i32_0 = arith.constant 0 : i32
    return %arg0, %c0_i32 : i32, i32
  }
}

</mosaic_0001>

<llo_original>
// kernel: bottleneck_forward.7
$region0: #{bottleneck_forward.7}
  #allocation0 [shape = 'u32[]', space=smem, size = 0x4, offset = 0x4, fixed_abs, tag = 'smem constant byte address 0x4 - core index']
  #allocation1 [shape = 'u32[144,128]{1,0:T(1,128)}', space=vmem, size = 0x12000, scoped, tag = 'internal scratch']
  %s0 = inlined_call_operand.vmem [shape: f32[128,128], index: 0, kind: input, shape index: {}]
  %s1 = inlined_call_operand.vmem [shape: f32[1,2,128], index: 1, kind: input, shape index: {}]
  %s2 = inlined_call_operand.vmem [shape: f32[1,128], index: 2, kind: input, shape index: {}]
  %s3 = inlined_call_operand.vmem [shape: f32[1,128], index: 3, kind: input, shape index: {}]
  %s4 = inlined_call_operand.vmem [shape: f32[128,128], index: 4, kind: input, shape index: {}]
  %s5 = inlined_call_operand.vmem [shape: f32[1,2,128], index: 5, kind: input, shape index: {}]
  %s6 = inlined_call_operand.vmem [shape: f32[1,128], index: 6, kind: input, shape index: {}]
  %s7 = inlined_call_operand.vmem [shape: f32[1,128], index: 7, kind: input, shape index: {}]
  %s8 = inlined_call_operand.vmem [shape: f32[128,128], index: 8, kind: output, shape index: {}]
  %s9 = sld [smem:[#allocation0]]
  $region42: #{bottleneck_forward.7} parent=0
    _
  %s11 = ssub.s32 1, %s9
  %s12 = scalar_select 0, %s11, %s9
  // Predicated region
  $region2: #{bottleneck_forward.7} parent=0 // pred_check
    _
  $region3: #{bottleneck_forward.7} parent=0 // pred_check_branch
    %14 = sbr.rel (0) target = $region5
  $region4: #{bottleneck_forward.7} parent=0 // pred_region
    _
  $region5: #{bottleneck_forward.7} parent=0 // pred_fallthru
    _
  // Predicated region
  $region6: #{bottleneck_forward.7} parent=0 // pred_check
    _
  $region7: #{bottleneck_forward.7} parent=0 // pred_check_branch
    %16 = sbr.rel (0) target = $region9
  $region8: #{bottleneck_forward.7} parent=0 // pred_region
    _
  $region9: #{bottleneck_forward.7} parent=0 // pred_fallthru
    _
  // Predicated region
  $region10: #{bottleneck_forward.7} parent=0 // pred_check
    _
  $region11: #{bottleneck_forward.7} parent=0 // pred_check_branch
    %18 = sbr.rel (0) target = $region13
  $region12: #{bottleneck_forward.7} parent=0 // pred_region
    _
  $region13: #{bottleneck_forward.7} parent=0 // pred_fallthru
    _
  // Predicated region
  $region14: #{bottleneck_forward.7} parent=0 // pred_check
    _
  $region15: #{bottleneck_forward.7} parent=0 // pred_check_branch
    %20 = sbr.rel (0) target = $region17
  $region16: #{bottleneck_forward.7} parent=0 // pred_region
    _
  $region17: #{bottleneck_forward.7} parent=0 // pred_fallthru
    _
  // Predicated region
  $region18: #{bottleneck_forward.7} parent=0 // pred_check
    _
  $region19: #{bottleneck_forward.7} parent=0 // pred_check_branch
    %22 = sbr.rel (0) target = $region21
  $region20: #{bottleneck_forward.7} parent=0 // pred_region
    _
  $region21: #{bottleneck_forward.7} parent=0 // pred_fallthru
    _
  // Predicated region
  $region22: #{bottleneck_forward.7} parent=0 // pred_check
    _
  $region23: #{bottleneck_forward.7} parent=0 // pred_check_branch
    %24 = sbr.rel (0) target = $region25
  $region24: #{bottleneck_forward.7} parent=0 // pred_region
    _
  $region25: #{bottleneck_forward.7} parent=0 // pred_fallthru
    _
  // Predicated region
  $region26: #{bottleneck_forward.7} parent=0 // pred_check
    _
  $region27: #{bottleneck_forward.7} parent=0 // pred_check_branch
    %26 = sbr.rel (0) target = $region29
  $region28: #{bottleneck_forward.7} parent=0 // pred_region
    _
  $region29: #{bottleneck_forward.7} parent=0 // pred_fallthru
    _
  // Predicated region
  $region30: #{bottleneck_forward.7} parent=0 // pred_check
    _
  $region31: #{bottleneck_forward.7} parent=0 // pred_check_branch
    %28 = sbr.rel (0) target = $region33
  $region32: #{bottleneck_forward.7} parent=0 // pred_region
    _
  $region33: #{bottleneck_forward.7} parent=0 // pred_fallthru
    _
  %v29 = vld [vmem:[%s5] sm:$0x3]
  %v30 = vld [vmem:[%s6] sm:$0x1]
  %v31 = vld [vmem:[%s7] sm:$0x1]
  %v32 = vadd.f32 %v29, 0.0
  %v33 = vmul.f32 %v32, 0.0078125
  %v34 = vmul.f32 %v33, %v33
  %v36 = vrot.slane %v34, 7
  %v38 = vsub.f32 %v33, %v36
  %v39 = vadd.f32 %v38, 1e-05
  %v40 = vrsqrt.pop %v39
  %v43 = vunpack.c.l.s4 1966171168
  %v44 = vunpack.c.0.s8 %v43
  %v45 = vlaneseq
  %v46 = vshrl.u32 %v45, 7
  %v47 = vsub.s32 %v44, %v46
  %v48 = vrot.slane %v40, %v47
  %v49 = vcombine.high %v48, %v48
  %v51 = vunpack.c.l.s4 1966171168
  %v52 = vunpack.c.0.s8 %v51
  %v53 = vlaneseq
  %v54 = vshrl.u32 %v53, 7
  %v55 = vsub.s32 %v52, %v54
  %v56 = vrot.slane %v49, %v55
  %v58 = vmul.f32 %v30, %v56
  %v59 = vmul.f32 %v33, %v58
  %v60 = vsub.f32 %v31, %v59
  %v61 = vld [vmem:[%s4] sm:$0xff]
  %v62 = vld [vmem:[%s4 + $0x8] sm:$0xff]
  %v63 = vld [vmem:[%s4 + $0x10] sm:$0xff]
  %v64 = vld [vmem:[%s4 + $0x18] sm:$0xff]
  %v65 = vld [vmem:[%s4 + $0x20] sm:$0xff]
  %v66 = vld [vmem:[%s4 + $0x28] sm:$0xff]
  %v67 = vld [vmem:[%s4 + $0x30] sm:$0xff]
  %v68 = vld [vmem:[%s4 + $0x38] sm:$0xff]
  %v69 = vld [vmem:[%s4 + $0x40] sm:$0xff]
  %v70 = vld [vmem:[%s4 + $0x48] sm:$0xff]
  %v71 = vld [vmem:[%s4 + $0x50] sm:$0xff]
  %v72 = vld [vmem:[%s4 + $0x58] sm:$0xff]
  %v73 = vld [vmem:[%s4 + $0x60] sm:$0xff]
  %v74 = vld [vmem:[%s4 + $0x68] sm:$0xff]
  %v75 = vld [vmem:[%s4 + $0x70] sm:$0xff]
  %v76 = vld [vmem:[%s4 + $0x78] sm:$0xff]
  %v78 = vlaneseq
  %v79 = vshrl.u32 %v78, 7
  %v80 = vsub.s32 0, %v79
  %v81 = vrot.slane %v58, %v80
  %v83 = vmul.f32 %v61, %v81
  %v84 = vmul.f32 %v62, %v81
  %v85 = vmul.f32 %v63, %v81
  %v86 = vmul.f32 %v64, %v81
  %v87 = vmul.f32 %v65, %v81
  %v88 = vmul.f32 %v66, %v81
  %v89 = vmul.f32 %v67, %v81
  %v90 = vmul.f32 %v68, %v81
  %v91 = vmul.f32 %v69, %v81
  %v92 = vmul.f32 %v70, %v81
  %v93 = vmul.f32 %v71, %v81
  %v94 = vmul.f32 %v72, %v81
  %v95 = vmul.f32 %v73, %v81
  %v96 = vmul.f32 %v74, %v81
  %v97 = vmul.f32 %v75, %v81
  %v98 = vmul.f32 %v76, %v81
  %v100 = vlaneseq
  %v101 = vshrl.u32 %v100, 7
  %v102 = vsub.s32 0, %v101
  %v103 = vrot.slane %v60, %v102
  %v105 = vadd.f32 %v83, %v103
  %v106 = vadd.f32 %v84, %v103
  %v107 = vadd.f32 %v85, %v103
  %v108 = vadd.f32 %v86, %v103
  %v109 = vadd.f32 %v87, %v103
  %v110 = vadd.f32 %v88, %v103
  %v111 = vadd.f32 %v89, %v103
  %v112 = vadd.f32 %v90, %v103
  %v113 = vadd.f32 %v91, %v103
  %v114 = vadd.f32 %v92, %v103
  %v115 = vadd.f32 %v93, %v103
  %v116 = vadd.f32 %v94, %v103
  %v117 = vadd.f32 %v95, %v103
  %v118 = vadd.f32 %v96, %v103
  %v119 = vadd.f32 %v97, %v103
  %v120 = vadd.f32 %v98, %v103
  %v121 = vld [vmem:[%s1] sm:$0x3]
  %v122 = vld [vmem:[%s2] sm:$0x1]
  %v123 = vld [vmem:[%s3] sm:$0x1]
  %v124 = vadd.f32 %v121, 0.0
  %v125 = vmul.f32 %v124, 0.0078125
  %v126 = vmul.f32 %v125, %v125
  %v128 = vrot.slane %v126, 7
  %v130 = vsub.f32 %v125, %v128
  %v131 = vadd.f32 %v130, 1e-05
  %v132 = vrsqrt.pop %v131
  %v135 = vunpack.c.l.s4 1966171168
  %v136 = vunpack.c.0.s8 %v135
  %v137 = vlaneseq
  %v138 = vshrl.u32 %v137, 7
  %v139 = vsub.s32 %v136, %v138
  %v140 = vrot.slane %v132, %v139
  %v141 = vcombine.high %v140, %v140
  %v143 = vunpack.c.l.s4 1966171168
  %v144 = vunpack.c.0.s8 %v143
  %v145 = vlaneseq
  %v146 = vshrl.u32 %v145, 7
  %v147 = vsub.s32 %v144, %v146
  %v148 = vrot.slane %v141, %v147
  %v150 = vmul.f32 %v122, %v148
  %v151 = vmul.f32 %v125, %v150
  %v152 = vsub.f32 %v123, %v151
  %v153 = vld [vmem:[%s0] sm:$0xff]
  %v154 = vld [vmem:[%s0 + $0x8] sm:$0xff]
  %v155 = vld [vmem:[%s0 + $0x10] sm:$0xff]
  %v156 = vld [vmem:[%s0 + $0x18] sm:$0xff]
  %v157 = vld [vmem:[%s0 + $0x20] sm:$0xff]
  %v158 = vld [vmem:[%s0 + $0x28] sm:$0xff]
  %v159 = vld [vmem:[%s0 + $0x30] sm:$0xff]
  %v160 = vld [vmem:[%s0 + $0x38] sm:$0xff]
  %v161 = vld [vmem:[%s0 + $0x40] sm:$0xff]
  %v162 = vld [vmem:[%s0 + $0x48] sm:$0xff]
  %v163 = vld [vmem:[%s0 + $0x50] sm:$0xff]
  %v164 = vld [vmem:[%s0 + $0x58] sm:$0xff]
  %v165 = vld [vmem:[%s0 + $0x60] sm:$0xff]
  %v166 = vld [vmem:[%s0 + $0x68] sm:$0xff]
  %v167 = vld [vmem:[%s0 + $0x70] sm:$0xff]
  %v168 = vld [vmem:[%s0 + $0x78] sm:$0xff]
  %v170 = vlaneseq
  %v171 = vshrl.u32 %v170, 7
  %v172 = vsub.s32 0, %v171
  %v173 = vrot.slane %v150, %v172
  %v175 = vmul.f32 %v153, %v173
  %v176 = vmul.f32 %v154, %v173
  %v177 = vmul.f32 %v155, %v173
  %v178 = vmul.f32 %v156, %v173
  %v179 = vmul.f32 %v157, %v173
  %v180 = vmul.f32 %v158, %v173
  %v181 = vmul.f32 %v159, %v173
  %v182 = vmul.f32 %v160, %v173
  %v183 = vmul.f32 %v161, %v173
  %v184 = vmul.f32 %v162, %v173
  %v185 = vmul.f32 %v163, %v173
  %v186 = vmul.f32 %v164, %v173
  %v187 = vmul.f32 %v165, %v173
  %v188 = vmul.f32 %v166, %v173
  %v189 = vmul.f32 %v167, %v173
  %v190 = vmul.f32 %v168, %v173
  %v192 = vlaneseq
  %v193 = vshrl.u32 %v192, 7
  %v194 = vsub.s32 0, %v193
  %v195 = vrot.slane %v152, %v194
  %v197 = vadd.f32 %v175, %v195
  %v198 = vadd.f32 %v176, %v195
  %v199 = vadd.f32 %v177, %v195
  %v200 = vadd.f32 %v178, %v195
  %v201 = vadd.f32 %v179, %v195
  %v202 = vadd.f32 %v180, %v195
  %v203 = vadd.f32 %v181, %v195
  %v204 = vadd.f32 %v182, %v195
  %v205 = vadd.f32 %v183, %v195
  %v206 = vadd.f32 %v184, %v195
  %v207 = vadd.f32 %v185, %v195
  %v208 = vadd.f32 %v186, %v195
  %v209 = vadd.f32 %v187, %v195
  %v210 = vadd.f32 %v188, %v195
  %v211 = vadd.f32 %v189, %v195
  %v212 = vadd.f32 %v190, %v195
  %v213 = vadd.f32 %v197, %v105
  %v214 = vadd.f32 %v198, %v106
  %v215 = vadd.f32 %v199, %v107
  %v216 = vadd.f32 %v200, %v108
  %v217 = vadd.f32 %v201, %v109
  %v218 = vadd.f32 %v202, %v110
  %v219 = vadd.f32 %v203, %v111
  %v220 = vadd.f32 %v204, %v112
  %v221 = vadd.f32 %v205, %v113
  %v222 = vadd.f32 %v206, %v114
  %v223 = vadd.f32 %v207, %v115
  %v224 = vadd.f32 %v208, %v116
  %v225 = vadd.f32 %v209, %v117
  %v226 = vadd.f32 %v210, %v118
  %v227 = vadd.f32 %v211, %v119
  %v228 = vadd.f32 %v212, %v120
  %v229 = vmax.f32 %v213, 0.0
  %v230 = vmax.f32 %v214, 0.0
  %v231 = vmax.f32 %v215, 0.0
  %v232 = vmax.f32 %v216, 0.0
  %v233 = vmax.f32 %v217, 0.0
  %v234 = vmax.f32 %v218, 0.0
  %v235 = vmax.f32 %v219, 0.0
  %v236 = vmax.f32 %v220, 0.0
  %v237 = vmax.f32 %v221, 0.0
  %v238 = vmax.f32 %v222, 0.0
  %v239 = vmax.f32 %v223, 0.0
  %v240 = vmax.f32 %v224, 0.0
  %v241 = vmax.f32 %v225, 0.0
  %v242 = vmax.f32 %v226, 0.0
  %v243 = vmax.f32 %v227, 0.0
  %v244 = vmax.f32 %v228, 0.0
  %245 = vst [vmem:[%s8] sm:$0xff] %v229
  %246 = vst [vmem:[%s8 + $0x8] sm:$0xff] %v230
  %247 = vst [vmem:[%s8 + $0x10] sm:$0xff] %v231
  %248 = vst [vmem:[%s8 + $0x18] sm:$0xff] %v232
  %249 = vst [vmem:[%s8 + $0x20] sm:$0xff] %v233
  %250 = vst [vmem:[%s8 + $0x28] sm:$0xff] %v234
  %251 = vst [vmem:[%s8 + $0x30] sm:$0xff] %v235
  %252 = vst [vmem:[%s8 + $0x38] sm:$0xff] %v236
  %253 = vst [vmem:[%s8 + $0x40] sm:$0xff] %v237
  %254 = vst [vmem:[%s8 + $0x48] sm:$0xff] %v238
  %255 = vst [vmem:[%s8 + $0x50] sm:$0xff] %v239
  %256 = vst [vmem:[%s8 + $0x58] sm:$0xff] %v240
  %257 = vst [vmem:[%s8 + $0x60] sm:$0xff] %v241
  %258 = vst [vmem:[%s8 + $0x68] sm:$0xff] %v242
  %259 = vst [vmem:[%s8 + $0x70] sm:$0xff] %v243
  %260 = vst [vmem:[%s8 + $0x78] sm:$0xff] %v244
  // Predicated region
  $region34: #{bottleneck_forward.7} parent=0 // pred_check
    _
  $region35: #{bottleneck_forward.7} parent=0 // pred_check_branch
    %262 = sbr.rel (0) target = $region37
  $region36: #{bottleneck_forward.7} parent=0 // pred_region
    _
  $region37: #{bottleneck_forward.7} parent=0 // pred_fallthru
    _
  // Predicated region
  $region38: #{bottleneck_forward.7} parent=0 // pred_check
    _
  $region39: #{bottleneck_forward.7} parent=0 // pred_check_branch
    %264 = sbr.rel (0) target = $region41
  $region40: #{bottleneck_forward.7} parent=0 // pred_region
    _
  $region41: #{bottleneck_forward.7} parent=0 // pred_fallthru
    _

// kernel: bottleneck_forward.6
$region0: #{bottleneck_forward.6}
  #allocation0 [shape = 'u32[]', space=smem, size = 0x4, offset = 0x4, fixed_abs, tag = 'smem constant byte address 0x4 - core index']
  #allocation1 [shape = 'u32[144,128]{1,0:T(1,128)}', space=vmem, size = 0x12000, scoped, tag = 'internal scratch']
  %s0 = inlined_call_operand.vmem [shape: f32[128,128], index: 0, kind: input, shape index: {}]
  %s1 = inlined_call_operand.vmem [shape: f32[2,2,128], index: 1, kind: input, shape index: {}]
  %s2 = inlined_call_operand.vmem [shape: f32[1,128], index: 2, kind: input, shape index: {}]
  %s3 = inlined_call_operand.vmem [shape: f32[1,128], index: 3, kind: input, shape index: {}]
  %s4 = inlined_call_operand.vmem [shape: f32[128,128], index: 4, kind: input, shape index: {}]
  %s5 = inlined_call_operand.vmem [shape: f32[128,128], index: 5, kind: input, shape index: {}]
  %s6 = inlined_call_operand.vmem [shape: f32[128,128], index: 6, kind: input, shape index: {}]
  %s7 = inlined_call_operand.vmem [shape: f32[128,128], index: 7, kind: output, shape index: {0}]
  %s8 = inlined_call_operand.vmem [shape: f32[1,2,128], index: 8, kind: output, shape index: {1}]
  %s9 = inlined_call_operand.vmem [shape: f32[128,128], index: 9, kind: output, shape index: {2}]
  %s10 = inlined_call_operand.vmem [shape: f32[1,2,128], index: 10, kind: output, shape index: {3}]
  %11 = xla_tuple %s7, %s8, %s9, %s10
  %s12 = sld [smem:[#allocation0]]
  $region62: #{bottleneck_forward.6} parent=0
    _
  %s14 = ssub.s32 1, %s12
  %s15 = scalar_select 0, %s14, %s12
  // Predicated region
  $region2: #{bottleneck_forward.6} parent=0 // pred_check
    _
  $region3: #{bottleneck_forward.6} parent=0 // pred_check_branch
    %17 = sbr.rel (0) target = $region5
  $region4: #{bottleneck_forward.6} parent=0 // pred_region
    _
  $region5: #{bottleneck_forward.6} parent=0 // pred_fallthru
    _
  // Predicated region
  $region6: #{bottleneck_forward.6} parent=0 // pred_check
    _
  $region7: #{bottleneck_forward.6} parent=0 // pred_check_branch
    %19 = sbr.rel (0) target = $region9
  $region8: #{bottleneck_forward.6} parent=0 // pred_region
    _
  $region9: #{bottleneck_forward.6} parent=0 // pred_fallthru
    _
  // Predicated region
  $region10: #{bottleneck_forward.6} parent=0 // pred_check
    _
  $region11: #{bottleneck_forward.6} parent=0 // pred_check_branch
    %21 = sbr.rel (0) target = $region13
  $region12: #{bottleneck_forward.6} parent=0 // pred_region
    _
  $region13: #{bottleneck_forward.6} parent=0 // pred_fallthru
    _
  // Predicated region
  $region14: #{bottleneck_forward.6} parent=0 // pred_check
    _
  $region15: #{bottleneck_forward.6} parent=0 // pred_check_branch
    %23 = sbr.rel (0) target = $region17
  $region16: #{bottleneck_forward.6} parent=0 // pred_region
    _
  $region17: #{bottleneck_forward.6} parent=0 // pred_fallthru
    _
  // Predicated region
  $region18: #{bottleneck_forward.6} parent=0 // pred_check
    _
  $region19: #{bottleneck_forward.6} parent=0 // pred_check_branch
    %25 = sbr.rel (0) target = $region21
  $region20: #{bottleneck_forward.6} parent=0 // pred_region
    _
  $region21: #{bottleneck_forward.6} parent=0 // pred_fallthru
    _
  // Predicated region
  $region22: #{bottleneck_forward.6} parent=0 // pred_check
    _
  $region23: #{bottleneck_forward.6} parent=0 // pred_check_branch
    %27 = sbr.rel (0) target = $region25
  $region24: #{bottleneck_forward.6} parent=0 // pred_region
    _
  $region25: #{bottleneck_forward.6} parent=0 // pred_fallthru
    _
  // Predicated region
  $region26: #{bottleneck_forward.6} parent=0 // pred_check
    _
  $region27: #{bottleneck_forward.6} parent=0 // pred_check_branch
    %29 = sbr.rel (0) target = $region29
  $region28: #{bottleneck_forward.6} parent=0 // pred_region
    _
  $region29: #{bottleneck_forward.6} parent=0 // pred_fallthru
    _
  %v30 = vld [vmem:[%s1] sm:$0x3]
  %v31 = vld [vmem:[%s1 + $0x2] sm:$0x3]
  %v32 = vld [vmem:[%s2] sm:$0x1]
  %v33 = vld [vmem:[%s3] sm:$0x1]
  %vm34 = vcmask 1041408
  %v35 = vsel %vm34, %v30, 0.0
  %v36 = vsel %vm34, %v31, 0.0
  %v37 = vadd.f32 %v35, %v36
  %v38 = vmul.f32 %v37, 0.0078125
  %v39 = vmul.f32 %v38, %v38
  %v41 = vrot.slane %v39, 7
  %v43 = vsub.f32 %v38, %v41
  %v44 = vadd.f32 %v43, 1e-05
  %v45 = vrsqrt.pop %v44
  %v48 = vunpack.c.l.s4 1966171168
  %v49 = vunpack.c.0.s8 %v48
  %v50 = vlaneseq
  %v51 = vshrl.u32 %v50, 7
  %v52 = vsub.s32 %v49, %v51
  %v53 = vrot.slane %v45, %v52
  %v54 = vcombine.high %v53, %v53
  %v56 = vunpack.c.l.s4 1966171168
  %v57 = vunpack.c.0.s8 %v56
  %v58 = vlaneseq
  %v59 = vshrl.u32 %v58, 7
  %v60 = vsub.s32 %v57, %v59
  %v61 = vrot.slane %v54, %v60
  %v63 = vmul.f32 %v32, %v61
  %v64 = vmul.f32 %v38, %v63
  %v65 = vsub.f32 %v33, %v64
  %v66 = vld [vmem:[%s0] sm:$0xff]
  %v67 = vld [vmem:[%s0 + $0x8] sm:$0xff]
  %v68 = vld [vmem:[%s0 + $0x10] sm:$0xff]
  %v69 = vld [vmem:[%s0 + $0x18] sm:$0xff]
  %v70 = vld [vmem:[%s0 + $0x20] sm:$0xff]
  %v71 = vld [vmem:[%s0 + $0x28] sm:$0xff]
  %v72 = vld [vmem:[%s0 + $0x30] sm:$0xff]
  %v73 = vld [vmem:[%s0 + $0x38] sm:$0xff]
  %v74 = vld [vmem:[%s0 + $0x40] sm:$0xff]
  %v75 = vld [vmem:[%s0 + $0x48] sm:$0xff]
  %v76 = vld [vmem:[%s0 + $0x50] sm:$0xff]
  %v77 = vld [vmem:[%s0 + $0x58] sm:$0xff]
  %v78 = vld [vmem:[%s0 + $0x60] sm:$0xff]
  %v79 = vld [vmem:[%s0 + $0x68] sm:$0xff]
  %v80 = vld [vmem:[%s0 + $0x70] sm:$0xff]
  %v81 = vld [vmem:[%s0 + $0x78] sm:$0xff]
  %v83 = vlaneseq
  %v84 = vshrl.u32 %v83, 7
  %v85 = vsub.s32 0, %v84
  %v86 = vrot.slane %v63, %v85
  %v88 = vmul.f32 %v66, %v86
  %v89 = vmul.f32 %v67, %v86
  %v90 = vmul.f32 %v68, %v86
  %v91 = vmul.f32 %v69, %v86
  %v92 = vmul.f32 %v70, %v86
  %v93 = vmul.f32 %v71, %v86
  %v94 = vmul.f32 %v72, %v86
  %v95 = vmul.f32 %v73, %v86
  %v96 = vmul.f32 %v74, %v86
  %v97 = vmul.f32 %v75, %v86
  %v98 = vmul.f32 %v76, %v86
  %v99 = vmul.f32 %v77, %v86
  %v100 = vmul.f32 %v78, %v86
  %v101 = vmul.f32 %v79, %v86
  %v102 = vmul.f32 %v80, %v86
  %v103 = vmul.f32 %v81, %v86
  %v105 = vlaneseq
  %v106 = vshrl.u32 %v105, 7
  %v107 = vsub.s32 0, %v106
  %v108 = vrot.slane %v65, %v107
  %v110 = vadd.f32 %v88, %v108
  %v111 = vadd.f32 %v89, %v108
  %v112 = vadd.f32 %v90, %v108
  %v113 = vadd.f32 %v91, %v108
  %v114 = vadd.f32 %v92, %v108
  %v115 = vadd.f32 %v93, %v108
  %v116 = vadd.f32 %v94, %v108
  %v117 = vadd.f32 %v95, %v108
  %v118 = vadd.f32 %v96, %v108
  %v119 = vadd.f32 %v97, %v108
  %v120 = vadd.f32 %v98, %v108
  %v121 = vadd.f32 %v99, %v108
  %v122 = vadd.f32 %v100, %v108
  %v123 = vadd.f32 %v101, %v108
  %v124 = vadd.f32 %v102, %v108
  %v125 = vadd.f32 %v103, %v108
  %v126 = vmax.f32 %v110, 0.0
  %v127 = vmax.f32 %v111, 0.0
  %v128 = vmax.f32 %v112, 0.0
  %v129 = vmax.f32 %v113, 0.0
  %v130 = vmax.f32 %v114, 0.0
  %v131 = vmax.f32 %v115, 0.0
  %v132 = vmax.f32 %v116, 0.0
  %v133 = vmax.f32 %v117, 0.0
  %v134 = vmax.f32 %v118, 0.0
  %v135 = vmax.f32 %v119, 0.0
  %v136 = vmax.f32 %v120, 0.0
  %v137 = vmax.f32 %v121, 0.0
  %v138 = vmax.f32 %v122, 0.0
  %v139 = vmax.f32 %v123, 0.0
  %v140 = vmax.f32 %v124, 0.0
  %v141 = vmax.f32 %v125, 0.0
  %v142 = vld [vmem:[%s4] sm:$0xff]
  %v143 = vld [vmem:[%s4 + $0x8] sm:$0xff]
  %v144 = vld [vmem:[%s4 + $0x10] sm:$0xff]
  %v145 = vld [vmem:[%s4 + $0x18] sm:$0xff]
  %v146 = vld [vmem:[%s4 + $0x20] sm:$0xff]
  %v147 = vld [vmem:[%s4 + $0x28] sm:$0xff]
  %v148 = vld [vmem:[%s4 + $0x30] sm:$0xff]
  %v149 = vld [vmem:[%s4 + $0x38] sm:$0xff]
  %v150 = vld [vmem:[%s4 + $0x40] sm:$0xff]
  %v151 = vld [vmem:[%s4 + $0x48] sm:$0xff]
  %v152 = vld [vmem:[%s4 + $0x50] sm:$0xff]
  %v153 = vld [vmem:[%s4 + $0x58] sm:$0xff]
  %v154 = vld [vmem:[%s4 + $0x60] sm:$0xff]
  %v155 = vld [vmem:[%s4 + $0x68] sm:$0xff]
  %v156 = vld [vmem:[%s4 + $0x70] sm:$0xff]
  %v157 = vld [vmem:[%s4 + $0x78] sm:$0xff]
  %158 = vmatprep.subr.mxu0 0.0
  %159 = vmatpush1.msra.mxu0 %v157
  %160 = vmatprep.subr.mxu0 0.0
  %161 = vmatpush1.msra.mxu0 %v156
  %162 = vmatprep.subr.mxu0 0.0
  %163 = vmatpush1.msra.mxu0 %v155
  %164 = vmatprep.subr.mxu0 0.0
  %165 = vmatpush1.msra.mxu0 %v154
  %166 = vmatprep.subr.mxu0 0.0
  %167 = vmatpush1.msra.mxu0 %v153
  %168 = vmatprep.subr.mxu0 0.0
  %169 = vmatpush1.msra.mxu0 %v152
  %170 = vmatprep.subr.mxu0 0.0
  %171 = vmatpush1.msra.mxu0 %v151
  %172 = vmatprep.subr.mxu0 0.0
  %173 = vmatpush1.msra.mxu0 %v150
  %174 = vmatprep.subr.mxu0 0.0
  %175 = vmatpush1.msra.mxu0 %v149
  %176 = vmatprep.subr.mxu0 0.0
  %177 = vmatpush1.msra.mxu0 %v148
  %178 = vmatprep.subr.mxu0 0.0
  %179 = vmatpush1.msra.mxu0 %v147
  %180 = vmatprep.subr.mxu0 0.0
  %181 = vmatpush1.msra.mxu0 %v146
  %182 = vmatprep.subr.mxu0 0.0
  %183 = vmatpush1.msra.mxu0 %v145
  %184 = vmatprep.subr.mxu0 0.0
  %185 = vmatpush1.msra.mxu0 %v144
  %186 = vmatprep.subr.mxu0 0.0
  %187 = vmatpush1.msra.mxu0 %v143
  %188 = vmatprep.subr.mxu0 0.0
  %189 = vmatpush1.msra.mxu0 %v142
  %190 = vmatprep.subr.mxu0 0.0
  %191 = vmatpush2.msra.mxu0 0.0
  %192 = vmatprep.subr.mxu0 0.0
  %193 = vmatpush2.msra.mxu0 0.0
  %194 = vmatprep.subr.mxu0 0.0
  %195 = vmatpush2.msra.mxu0 0.0
  %196 = vmatprep.subr.mxu0 0.0
  %197 = vmatpush2.msra.mxu0 0.0
  %198 = vmatprep.subr.mxu0 0.0
  %199 = vmatpush2.msra.mxu0 0.0
  %200 = vmatprep.subr.mxu0 0.0
  %201 = vmatpush2.msra.mxu0 0.0
  %202 = vmatprep.subr.mxu0 0.0
  %203 = vmatpush2.msra.mxu0 0.0
  %204 = vmatprep.subr.mxu0 0.0
  %205 = vmatpush2.msra.mxu0 0.0
  %206 = vmatprep.subr.mxu0 0.0
  %207 = vmatpush2.msra.mxu0 0.0
  %208 = vmatprep.subr.mxu0 0.0
  %209 = vmatpush2.msra.mxu0 0.0
  %210 = vmatprep.subr.mxu0 0.0
  %211 = vmatpush2.msra.mxu0 0.0
  %212 = vmatprep.subr.mxu0 0.0
  %213 = vmatpush2.msra.mxu0 0.0
  %214 = vmatprep.subr.mxu0 0.0
  %215 = vmatpush2.msra.mxu0 0.0
  %216 = vmatprep.subr.mxu0 0.0
  %217 = vmatpush2.msra.mxu0 0.0
  %218 = vmatprep.subr.mxu0 0.0
  %219 = vmatpush2.msra.mxu0 0.0
  %220 = vmatprep.subr.mxu0 0.0
  %221 = vmatpush2.msra.mxu0 0.0
  %222 = vmatprep.mubr.f32.mxu0 0.0
  %223 = vmatmul.mubr.f32.gmra.mxu0 %v126
  %v224 = vpop.f32.mrf.mxu0
  %v225 = vadd.f32 0.0, %v224
  %v226 = vpop.f32.mrf.mxu0
  %227 = vmatprep.mubr.f32.mxu0 0.0
  %228 = vmatmul.mubr.f32.gmra.mxu0 %v127
  %v229 = vpop.f32.mrf.mxu0
  %v230 = vadd.f32 0.0, %v229
  %v231 = vpop.f32.mrf.mxu0
  %232 = vmatprep.mubr.f32.mxu0 0.0
  %233 = vmatmul.mubr.f32.gmra.mxu0 %v128
  %v234 = vpop.f32.mrf.mxu0
  %v235 = vadd.f32 0.0, %v234
  %v236 = vpop.f32.mrf.mxu0
  %237 = vmatprep.mubr.f32.mxu0 0.0
  %238 = vmatmul.mubr.f32.gmra.mxu0 %v129
  %v239 = vpop.f32.mrf.mxu0
  %v240 = vadd.f32 0.0, %v239
  %v241 = vpop.f32.mrf.mxu0
  %242 = vmatprep.mubr.f32.mxu0 0.0
  %243 = vmatmul.mubr.f32.gmra.mxu0 %v130
  %v244 = vpop.f32.mrf.mxu0
  %v245 = vadd.f32 0.0, %v244
  %v246 = vpop.f32.mrf.mxu0
  %247 = vmatprep.mubr.f32.mxu0 0.0
  %248 = vmatmul.mubr.f32.gmra.mxu0 %v131
  %v249 = vpop.f32.mrf.mxu0
  %v250 = vadd.f32 0.0, %v249
  %v251 = vpop.f32.mrf.mxu0
  %252 = vmatprep.mubr.f32.mxu0 0.0
  %253 = vmatmul.mubr.f32.gmra.mxu0 %v132
  %v254 = vpop.f32.mrf.mxu0
  %v255 = vadd.f32 0.0, %v254
  %v256 = vpop.f32.mrf.mxu0
  %257 = vmatprep.mubr.f32.mxu0 0.0
  %258 = vmatmul.mubr.f32.gmra.mxu0 %v133
  %v259 = vpop.f32.mrf.mxu0
  %v260 = vadd.f32 0.0, %v259
  %v261 = vpop.f32.mrf.mxu0
  %262 = vmatprep.mubr.f32.mxu0 0.0
  %263 = vmatmul.mubr.f32.gmra.mxu0 %v134
  %v264 = vpop.f32.mrf.mxu0
  %v265 = vadd.f32 0.0, %v264
  %v266 = vpop.f32.mrf.mxu0
  %267 = vmatprep.mubr.f32.mxu0 0.0
  %268 = vmatmul.mubr.f32.gmra.mxu0 %v135
  %v269 = vpop.f32.mrf.mxu0
  %v270 = vadd.f32 0.0, %v269
  %v271 = vpop.f32.mrf.mxu0
  %272 = vmatprep.mubr.f32.mxu0 0.0
  %273 = vmatmul.mubr.f32.gmra.mxu0 %v136
  %v274 = vpop.f32.mrf.mxu0
  %v275 = vadd.f32 0.0, %v274
  %v276 = vpop.f32.mrf.mxu0
  %277 = vmatprep.mubr.f32.mxu0 0.0
  %278 = vmatmul.mubr.f32.gmra.mxu0 %v137
  %v279 = vpop.f32.mrf.mxu0
  %v280 = vadd.f32 0.0, %v279
  %v281 = vpop.f32.mrf.mxu0
  %282 = vmatprep.mubr.f32.mxu0 0.0
  %283 = vmatmul.mubr.f32.gmra.mxu0 %v138
  %v284 = vpop.f32.mrf.mxu0
  %v285 = vadd.f32 0.0, %v284
  %v286 = vpop.f32.mrf.mxu0
  %287 = vmatprep.mubr.f32.mxu0 0.0
  %288 = vmatmul.mubr.f32.gmra.mxu0 %v139
  %v289 = vpop.f32.mrf.mxu0
  %v290 = vadd.f32 0.0, %v289
  %v291 = vpop.f32.mrf.mxu0
  %292 = vmatprep.mubr.f32.mxu0 0.0
  %293 = vmatmul.mubr.f32.gmra.mxu0 %v140
  %v294 = vpop.f32.mrf.mxu0
  %v295 = vadd.f32 0.0, %v294
  %v296 = vpop.f32.mrf.mxu0
  %297 = vmatprep.mubr.f32.mxu0 0.0
  %298 = vmatmul.mubr.f32.gmra.mxu0 %v141
  %v299 = vpop.f32.mrf.mxu0
  %v300 = vadd.f32 0.0, %v299
  %v301 = vpop.f32.mrf.mxu0
  %302 = vdwg.mxu0
  %303 = vst [vmem:[%s7] sm:$0xff] %v225
  %304 = vst [vmem:[%s7 + $0x8] sm:$0xff] %v230
  %305 = vst [vmem:[%s7 + $0x10] sm:$0xff] %v235
  %306 = vst [vmem:[%s7 + $0x18] sm:$0xff] %v240
  %307 = vst [vmem:[%s7 + $0x20] sm:$0xff] %v245
  %308 = vst [vmem:[%s7 + $0x28] sm:$0xff] %v250
  %309 = vst [vmem:[%s7 + $0x30] sm:$0xff] %v255
  %310 = vst [vmem:[%s7 + $0x38] sm:$0xff] %v260
  %311 = vst [vmem:[%s7 + $0x40] sm:$0xff] %v265
  %312 = vst [vmem:[%s7 + $0x48] sm:$0xff] %v270
  %313 = vst [vmem:[%s7 + $0x50] sm:$0xff] %v275
  %314 = vst [vmem:[%s7 + $0x58] sm:$0xff] %v280
  %315 = vst [vmem:[%s7 + $0x60] sm:$0xff] %v285
  %316 = vst [vmem:[%s7 + $0x68] sm:$0xff] %v290
  %317 = vst [vmem:[%s7 + $0x70] sm:$0xff] %v295
  %318 = vst [vmem:[%s7 + $0x78] sm:$0xff] %v300
  %v319 = vadd.f32 %v225, %v230
  %v320 = vadd.f32 %v319, %v235
  %v321 = vadd.f32 %v320, %v240
  %v322 = vadd.f32 %v321, %v245
  %v323 = vadd.f32 %v322, %v250
  %v324 = vadd.f32 %v323, %v255
  %v325 = vadd.f32 %v324, %v260
  %v326 = vadd.f32 %v325, %v265
  %v327 = vadd.f32 %v326, %v270
  %v328 = vadd.f32 %v327, %v275
  %v329 = vadd.f32 %v328, %v280
  %v330 = vadd.f32 %v329, %v285
  %v331 = vadd.f32 %v330, %v290
  %v332 = vadd.f32 %v331, %v295
  %v333 = vadd.f32 %v332, %v300
  %v334 = vrot.slane %v333, 4
  %v335 = vadd.f32 %v333, %v334
  %v336 = vrot.slane %v335, 2
  %v337 = vadd.f32 %v335, %v336
  %v338 = vrot.slane %v337, 1
  %v339 = vadd.f32 %v337, %v338
  %340 = vst [vmem:[%s8] sm:$0x1] %v339
  %v341 = vmul.f32 %v225, %v225
  %v342 = vmul.f32 %v230, %v230
  %v343 = vmul.f32 %v235, %v235
  %v344 = vmul.f32 %v240, %v240
  %v345 = vmul.f32 %v245, %v245
  %v346 = vmul.f32 %v250, %v250
  %v347 = vmul.f32 %v255, %v255
  %v348 = vmul.f32 %v260, %v260
  %v349 = vmul.f32 %v265, %v265
  %v350 = vmul.f32 %v270, %v270
  %v351 = vmul.f32 %v275, %v275
  %v352 = vmul.f32 %v280, %v280
  %v353 = vmul.f32 %v285, %v285
  %v354 = vmul.f32 %v290, %v290
  %v355 = vmul.f32 %v295, %v295
  %v356 = vmul.f32 %v300, %v300
  %v357 = vadd.f32 %v341, %v342
  %v358 = vadd.f32 %v357, %v343
  %v359 = vadd.f32 %v358, %v344
  %v360 = vadd.f32 %v359, %v345
  %v361 = vadd.f32 %v360, %v346
  %v362 = vadd.f32 %v361, %v347
  %v363 = vadd.f32 %v362, %v348
  %v364 = vadd.f32 %v363, %v349
  %v365 = vadd.f32 %v364, %v350
  %v366 = vadd.f32 %v365, %v351
  %v367 = vadd.f32 %v366, %v352
  %v368 = vadd.f32 %v367, %v353
  %v369 = vadd.f32 %v368, %v354
  %v370 = vadd.f32 %v369, %v355
  %v371 = vadd.f32 %v370, %v356
  %v372 = vrot.slane %v371, 4
  %v373 = vadd.f32 %v371, %v372
  %v374 = vrot.slane %v373, 2
  %v375 = vadd.f32 %v373, %v374
  %v376 = vrot.slane %v375, 1
  %v377 = vadd.f32 %v375, %v376
  %378 = vst [vmem:[%s8 + $0x1] sm:$0x1] %v377
  %v379 = vld [vmem:[%s5] sm:$0xff]
  %v380 = vld [vmem:[%s5 + $0x8] sm:$0xff]
  %v381 = vld [vmem:[%s5 + $0x10] sm:$0xff]
  %v382 = vld [vmem:[%s5 + $0x18] sm:$0xff]
  %v383 = vld [vmem:[%s5 + $0x20] sm:$0xff]
  %v384 = vld [vmem:[%s5 + $0x28] sm:$0xff]
  %v385 = vld [vmem:[%s5 + $0x30] sm:$0xff]
  %v386 = vld [vmem:[%s5 + $0x38] sm:$0xff]
  %v387 = vld [vmem:[%s5 + $0x40] sm:$0xff]
  %v388 = vld [vmem:[%s5 + $0x48] sm:$0xff]
  %v389 = vld [vmem:[%s5 + $0x50] sm:$0xff]
  %v390 = vld [vmem:[%s5 + $0x58] sm:$0xff]
  %v391 = vld [vmem:[%s5 + $0x60] sm:$0xff]
  %v392 = vld [vmem:[%s5 + $0x68] sm:$0xff]
  %v393 = vld [vmem:[%s5 + $0x70] sm:$0xff]
  %v394 = vld [vmem:[%s5 + $0x78] sm:$0xff]
  %v395 = vld [vmem:[%s6] sm:$0xff]
  %v396 = vld [vmem:[%s6 + $0x8] sm:$0xff]
  %v397 = vld [vmem:[%s6 + $0x10] sm:$0xff]
  %v398 = vld [vmem:[%s6 + $0x18] sm:$0xff]
  %v399 = vld [vmem:[%s6 + $0x20] sm:$0xff]
  %v400 = vld [vmem:[%s6 + $0x28] sm:$0xff]
  %v401 = vld [vmem:[%s6 + $0x30] sm:$0xff]
  %v402 = vld [vmem:[%s6 + $0x38] sm:$0xff]
  %v403 = vld [vmem:[%s6 + $0x40] sm:$0xff]
  %v404 = vld [vmem:[%s6 + $0x48] sm:$0xff]
  %v405 = vld [vmem:[%s6 + $0x50] sm:$0xff]
  %v406 = vld [vmem:[%s6 + $0x58] sm:$0xff]
  %v407 = vld [vmem:[%s6 + $0x60] sm:$0xff]
  %v408 = vld [vmem:[%s6 + $0x68] sm:$0xff]
  %v409 = vld [vmem:[%s6 + $0x70] sm:$0xff]
  %v410 = vld [vmem:[%s6 + $0x78] sm:$0xff]
  %411 = vmatprep.subr.mxu0 0.0
  %412 = vmatpush1.msra.mxu0 %v410
  %413 = vmatprep.subr.mxu0 0.0
  %414 = vmatpush1.msra.mxu0 %v409
  %415 = vmatprep.subr.mxu0 0.0
  %416 = vmatpush1.msra.mxu0 %v408
  %417 = vmatprep.subr.mxu0 0.0
  %418 = vmatpush1.msra.mxu0 %v407
  %419 = vmatprep.subr.mxu0 0.0
  %420 = vmatpush1.msra.mxu0 %v406
  %421 = vmatprep.subr.mxu0 0.0
  %422 = vmatpush1.msra.mxu0 %v405
  %423 = vmatprep.subr.mxu0 0.0
  %424 = vmatpush1.msra.mxu0 %v404
  %425 = vmatprep.subr.mxu0 0.0
  %426 = vmatpush1.msra.mxu0 %v403
  %427 = vmatprep.subr.mxu0 0.0
  %428 = vmatpush1.msra.mxu0 %v402
  %429 = vmatprep.subr.mxu0 0.0
  %430 = vmatpush1.msra.mxu0 %v401
  %431 = vmatprep.subr.mxu0 0.0
  %432 = vmatpush1.msra.mxu0 %v400
  %433 = vmatprep.subr.mxu0 0.0
  %434 = vmatpush1.msra.mxu0 %v399
  %435 = vmatprep.subr.mxu0 0.0
  %436 = vmatpush1.msra.mxu0 %v398
  %437 = vmatprep.subr.mxu0 0.0
  %438 = vmatpush1.msra.mxu0 %v397
  %439 = vmatprep.subr.mxu0 0.0
  %440 = vmatpush1.msra.mxu0 %v396
  %441 = vmatprep.subr.mxu0 0.0
  %442 = vmatpush1.msra.mxu0 %v395
  %443 = vmatprep.subr.mxu0 0.0
  %444 = vmatpush2.msra.mxu0 0.0
  %445 = vmatprep.subr.mxu0 0.0
  %446 = vmatpush2.msra.mxu0 0.0
  %447 = vmatprep.subr.mxu0 0.0
  %448 = vmatpush2.msra.mxu0 0.0
  %449 = vmatprep.subr.mxu0 0.0
  %450 = vmatpush2.msra.mxu0 0.0
  %451 = vmatprep.subr.mxu0 0.0
  %452 = vmatpush2.msra.mxu0 0.0
  %453 = vmatprep.subr.mxu0 0.0
  %454 = vmatpush2.msra.mxu0 0.0
  %455 = vmatprep.subr.mxu0 0.0
  %456 = vmatpush2.msra.mxu0 0.0
  %457 = vmatprep.subr.mxu0 0.0
  %458 = vmatpush2.msra.mxu0 0.0
  %459 = vmatprep.subr.mxu0 0.0
  %460 = vmatpush2.msra.mxu0 0.0
  %461 = vmatprep.subr.mxu0 0.0
  %462 = vmatpush2.msra.mxu0 0.0
  %463 = vmatprep.subr.mxu0 0.0
  %464 = vmatpush2.msra.mxu0 0.0
  %465 = vmatprep.subr.mxu0 0.0
  %466 = vmatpush2.msra.mxu0 0.0
  %467 = vmatprep.subr.mxu0 0.0
  %468 = vmatpush2.msra.mxu0 0.0
  %469 = vmatprep.subr.mxu0 0.0
  %470 = vmatpush2.msra.mxu0 0.0
  %471 = vmatprep.subr.mxu0 0.0
  %472 = vmatpush2.msra.mxu0 0.0
  %473 = vmatprep.subr.mxu0 0.0
  %474 = vmatpush2.msra.mxu0 0.0
  %475 = vmatprep.mubr.f32.mxu0 0.0
  %476 = vmatmul.mubr.f32.gmra.mxu0 %v379
  %v477 = vpop.f32.mrf.mxu0
  %v478 = vadd.f32 0.0, %v477
  %v479 = vpop.f32.mrf.mxu0
  %480 = vmatprep.mubr.f32.mxu0 0.0
  %481 = vmatmul.mubr.f32.gmra.mxu0 %v380
  %v482 = vpop.f32.mrf.mxu0
  %v483 = vadd.f32 0.0, %v482
  %v484 = vpop.f32.mrf.mxu0
  %485 = vmatprep.mubr.f32.mxu0 0.0
  %486 = vmatmul.mubr.f32.gmra.mxu0 %v381
  %v487 = vpop.f32.mrf.mxu0
  %v488 = vadd.f32 0.0, %v487
  %v489 = vpop.f32.mrf.mxu0
  %490 = vmatprep.mubr.f32.mxu0 0.0
  %491 = vmatmul.mubr.f32.gmra.mxu0 %v382
  %v492 = vpop.f32.mrf.mxu0
  %v493 = vadd.f32 0.0, %v492
  %v494 = vpop.f32.mrf.mxu0
  %495 = vmatprep.mubr.f32.mxu0 0.0
  %496 = vmatmul.mubr.f32.gmra.mxu0 %v383
  %v497 = vpop.f32.mrf.mxu0
  %v498 = vadd.f32 0.0, %v497
  %v499 = vpop.f32.mrf.mxu0
  %500 = vmatprep.mubr.f32.mxu0 0.0
  %501 = vmatmul.mubr.f32.gmra.mxu0 %v384
  %v502 = vpop.f32.mrf.mxu0
  %v503 = vadd.f32 0.0, %v502
  %v504 = vpop.f32.mrf.mxu0
  %505 = vmatprep.mubr.f32.mxu0 0.0
  %506 = vmatmul.mubr.f32.gmra.mxu0 %v385
  %v507 = vpop.f32.mrf.mxu0
  %v508 = vadd.f32 0.0, %v507
  %v509 = vpop.f32.mrf.mxu0
  %510 = vmatprep.mubr.f32.mxu0 0.0
  %511 = vmatmul.mubr.f32.gmra.mxu0 %v386
  %v512 = vpop.f32.mrf.mxu0
  %v513 = vadd.f32 0.0, %v512
  %v514 = vpop.f32.mrf.mxu0
  %515 = vmatprep.mubr.f32.mxu0 0.0
  %516 = vmatmul.mubr.f32.gmra.mxu0 %v387
  %v517 = vpop.f32.mrf.mxu0
  %v518 = vadd.f32 0.0, %v517
  %v519 = vpop.f32.mrf.mxu0
  %520 = vmatprep.mubr.f32.mxu0 0.0
  %521 = vmatmul.mubr.f32.gmra.mxu0 %v388
  %v522 = vpop.f32.mrf.mxu0
  %v523 = vadd.f32 0.0, %v522
  %v524 = vpop.f32.mrf.mxu0
  %525 = vmatprep.mubr.f32.mxu0 0.0
  %526 = vmatmul.mubr.f32.gmra.mxu0 %v389
  %v527 = vpop.f32.mrf.mxu0
  %v528 = vadd.f32 0.0, %v527
  %v529 = vpop.f32.mrf.mxu0
  %530 = vmatprep.mubr.f32.mxu0 0.0
  %531 = vmatmul.mubr.f32.gmra.mxu0 %v390
  %v532 = vpop.f32.mrf.mxu0
  %v533 = vadd.f32 0.0, %v532
  %v534 = vpop.f32.mrf.mxu0
  %535 = vmatprep.mubr.f32.mxu0 0.0
  %536 = vmatmul.mubr.f32.gmra.mxu0 %v391
  %v537 = vpop.f32.mrf.mxu0
  %v538 = vadd.f32 0.0, %v537
  %v539 = vpop.f32.mrf.mxu0
  %540 = vmatprep.mubr.f32.mxu0 0.0
  %541 = vmatmul.mubr.f32.gmra.mxu0 %v392
  %v542 = vpop.f32.mrf.mxu0
  %v543 = vadd.f32 0.0, %v542
  %v544 = vpop.f32.mrf.mxu0
  %545 = vmatprep.mubr.f32.mxu0 0.0
  %546 = vmatmul.mubr.f32.gmra.mxu0 %v393
  %v547 = vpop.f32.mrf.mxu0
  %v548 = vadd.f32 0.0, %v547
  %v549 = vpop.f32.mrf.mxu0
  %550 = vmatprep.mubr.f32.mxu0 0.0
  %551 = vmatmul.mubr.f32.gmra.mxu0 %v394
  %v552 = vpop.f32.mrf.mxu0
  %v553 = vadd.f32 0.0, %v552
  %v554 = vpop.f32.mrf.mxu0
  %555 = vdwg.mxu0
  %556 = vst [vmem:[%s9] sm:$0xff] %v478
  %557 = vst [vmem:[%s9 + $0x8] sm:$0xff] %v483
  %558 = vst [vmem:[%s9 + $0x10] sm:$0xff] %v488
  %559 = vst [vmem:[%s9 + $0x18] sm:$0xff] %v493
  %560 = vst [vmem:[%s9 + $0x20] sm:$0xff] %v498
  %561 = vst [vmem:[%s9 + $0x28] sm:$0xff] %v503
  %562 = vst [vmem:[%s9 + $0x30] sm:$0xff] %v508
  %563 = vst [vmem:[%s9 + $0x38] sm:$0xff] %v513
  %564 = vst [vmem:[%s9 + $0x40] sm:$0xff] %v518
  %565 = vst [vmem:[%s9 + $0x48] sm:$0xff] %v523
  %566 = vst [vmem:[%s9 + $0x50] sm:$0xff] %v528
  %567 = vst [vmem:[%s9 + $0x58] sm:$0xff] %v533
  %568 = vst [vmem:[%s9 + $0x60] sm:$0xff] %v538
  %569 = vst [vmem:[%s9 + $0x68] sm:$0xff] %v543
  %570 = vst [vmem:[%s9 + $0x70] sm:$0xff] %v548
  %571 = vst [vmem:[%s9 + $0x78] sm:$0xff] %v553
  %v572 = vadd.f32 %v478, %v483
  %v573 = vadd.f32 %v572, %v488
  %v574 = vadd.f32 %v573, %v493
  %v575 = vadd.f32 %v574, %v498
  %v576 = vadd.f32 %v575, %v503
  %v577 = vadd.f32 %v576, %v508
  %v578 = vadd.f32 %v577, %v513
  %v579 = vadd.f32 %v578, %v518
  %v580 = vadd.f32 %v579, %v523
  %v581 = vadd.f32 %v580, %v528
  %v582 = vadd.f32 %v581, %v533
  %v583 = vadd.f32 %v582, %v538
  %v584 = vadd.f32 %v583, %v543
  %v585 = vadd.f32 %v584, %v548
  %v586 = vadd.f32 %v585, %v553
  %v587 = vrot.slane %v586, 4
  %v588 = vadd.f32 %v586, %v587
  %v589 = vrot.slane %v588, 2
  %v590 = vadd.f32 %v588, %v589
  %v591 = vrot.slane %v590, 1
  %v592 = vadd.f32 %v590, %v591
  %593 = vst [vmem:[%s10] sm:$0x1] %v592
  %v594 = vmul.f32 %v478, %v478
  %v595 = vmul.f32 %v483, %v483
  %v596 = vmul.f32 %v488, %v488
  %v597 = vmul.f32 %v493, %v493
  %v598 = vmul.f32 %v498, %v498
  %v599 = vmul.f32 %v503, %v503
  %v600 = vmul.f32 %v508, %v508
  %v601 = vmul.f32 %v513, %v513
  %v602 = vmul.f32 %v518, %v518
  %v603 = vmul.f32 %v523, %v523
  %v604 = vmul.f32 %v528, %v528
  %v605 = vmul.f32 %v533, %v533
  %v606 = vmul.f32 %v538, %v538
  %v607 = vmul.f32 %v543, %v543
  %v608 = vmul.f32 %v548, %v548
  %v609 = vmul.f32 %v553, %v553
  %v610 = vadd.f32 %v594, %v595
  %v611 = vadd.f32 %v610, %v596
  %v612 = vadd.f32 %v611, %v597
  %v613 = vadd.f32 %v612, %v598
  %v614 = vadd.f32 %v613, %v599
  %v615 = vadd.f32 %v614, %v600
  %v616 = vadd.f32 %v615, %v601
  %v617 = vadd.f32 %v616, %v602
  %v618 = vadd.f32 %v617, %v603
  %v619 = vadd.f32 %v618, %v604
  %v620 = vadd.f32 %v619, %v605
  %v621 = vadd.f32 %v620, %v606
  %v622 = vadd.f32 %v621, %v607
  %v623 = vadd.f32 %v622, %v608
  %v624 = vadd.f32 %v623, %v609
  %v625 = vrot.slane %v624, 4
  %v626 = vadd.f32 %v624, %v625
  %v627 = vrot.slane %v626, 2
  %v628 = vadd.f32 %v626, %v627
  %v629 = vrot.slane %v628, 1
  %v630 = vadd.f32 %v628, %v629
  %631 = vst [vmem:[%s10 + $0x1] sm:$0x1] %v630
  // Predicated region
  $region30: #{bottleneck_forward.6} parent=0 // pred_check
    _
  $region31: #{bottleneck_forward.6} parent=0 // pred_check_branch
    %633 = sbr.rel (0) target = $region33
  $region32: #{bottleneck_forward.6} parent=0 // pred_region
    _
  $region33: #{bottleneck_forward.6} parent=0 // pred_fallthru
    _
  // Predicated region
  $region34: #{bottleneck_forward.6} parent=0 // pred_check
    _
  $region35: #{bottleneck_forward.6} parent=0 // pred_check_branch
    %635 = sbr.rel (0) target = $region37
  $region36: #{bottleneck_forward.6} parent=0 // pred_region
    _
  $region37: #{bottleneck_forward.6} parent=0 // pred_fallthru
    _
  // Predicated region
  $region38: #{bottleneck_forward.6} parent=0 // pred_check
    _
  $region39: #{bottleneck_forward.6} parent=0 // pred_check_branch
    %637 = sbr.rel (0) target = $region41
  $region40: #{bottleneck_forward.6} parent=0 // pred_region
    _
  $region41: #{bottleneck_forward.6} parent=0 // pred_fallthru
    _
  // Predicated region
  $region42: #{bottleneck_forward.6} parent=0 // pred_check
    _
  $region43: #{bottleneck_forward.6} parent=0 // pred_check_branch
    %639 = sbr.rel (0) target = $region45
  $region44: #{bottleneck_forward.6} parent=0 // pred_region
    _
  $region45: #{bottleneck_forward.6} parent=0 // pred_fallthru
    _
  // Predicated region
  $region46: #{bottleneck_forward.6} parent=0 // pred_check
    _
  $region47: #{bottleneck_forward.6} parent=0 // pred_check_branch
    %641 = sbr.rel (0) target = $region49
  $region48: #{bottleneck_forward.6} parent=0 // pred_region
    _
  $region49: #{bottleneck_forward.6} parent=0 // pred_fallthru
    _
  // Predicated region
  $region50: #{bottleneck_forward.6} parent=0 // pred_check
    _
  $region51: #{bottleneck_forward.6} parent=0 // pred_check_branch
    %643 = sbr.rel (0) target = $region53
  $region52: #{bottleneck_forward.6} parent=0 // pred_region
    _
  $region53: #{bottleneck_forward.6} parent=0 // pred_fallthru
    _
  // Predicated region
  $region54: #{bottleneck_forward.6} parent=0 // pred_check
    _
  $region55: #{bottleneck_forward.6} parent=0 // pred_check_branch
    %645 = sbr.rel (0) target = $region57
  $region56: #{bottleneck_forward.6} parent=0 // pred_region
    _
  $region57: #{bottleneck_forward.6} parent=0 // pred_fallthru
    _
  // Predicated region
  $region58: #{bottleneck_forward.6} parent=0 // pred_check
    _
  $region59: #{bottleneck_forward.6} parent=0 // pred_check_branch
    %647 = sbr.rel (0) target = $region61
  $region60: #{bottleneck_forward.6} parent=0 // pred_region
    _
  $region61: #{bottleneck_forward.6} parent=0 // pred_fallthru
    _

// kernel: bottleneck_forward.4
$region0: #{bottleneck_forward.4}
  #allocation0 [shape = 'u32[]', space=smem, size = 0x4, offset = 0x4, fixed_abs, tag = 'smem constant byte address 0x4 - core index']
  #allocation1 [shape = 'u32[144,128]{1,0:T(1,128)}', space=vmem, size = 0x12000, scoped, tag = 'internal scratch']
  %s0 = inlined_call_operand.vmem [shape: f32[512,128], index: 0, kind: input, shape index: {}]
  %s1 = inlined_call_operand.vmem [shape: f32[128,128], index: 1, kind: input, shape index: {}]
  %s2 = inlined_call_operand.vmem [shape: f32[1,2,128], index: 2, kind: output, shape index: {}]
  %s3 = sld [smem:[#allocation0]]
  $region18: #{bottleneck_forward.4} parent=0
    _
  %s5 = ssub.s32 1, %s3
  %s6 = scalar_select 0, %s5, %s3
  // Predicated region
  $region2: #{bottleneck_forward.4} parent=0 // pred_check
    _
  $region3: #{bottleneck_forward.4} parent=0 // pred_check_branch
    %8 = sbr.rel (0) target = $region5
  $region4: #{bottleneck_forward.4} parent=0 // pred_region
    _
  $region5: #{bottleneck_forward.4} parent=0 // pred_fallthru
    _
  // Predicated region
  $region6: #{bottleneck_forward.4} parent=0 // pred_check
    _
  $region7: #{bottleneck_forward.4} parent=0 // pred_check_branch
    %10 = sbr.rel (0) target = $region9
  $region8: #{bottleneck_forward.4} parent=0 // pred_region
    _
  $region9: #{bottleneck_forward.4} parent=0 // pred_fallthru
    _
  %v11 = vld [vmem:[%s0] sm:$0xff]
  %v12 = vld [vmem:[%s0 + $0x8] sm:$0xff]
  %v13 = vld [vmem:[%s0 + $0x10] sm:$0xff]
  %v14 = vld [vmem:[%s0 + $0x18] sm:$0xff]
  %v15 = vld [vmem:[%s0 + $0x20] sm:$0xff]
  %v16 = vld [vmem:[%s0 + $0x28] sm:$0xff]
  %v17 = vld [vmem:[%s0 + $0x30] sm:$0xff]
  %v18 = vld [vmem:[%s0 + $0x38] sm:$0xff]
  %v19 = vld [vmem:[%s0 + $0x40] sm:$0xff]
  %v20 = vld [vmem:[%s0 + $0x48] sm:$0xff]
  %v21 = vld [vmem:[%s0 + $0x50] sm:$0xff]
  %v22 = vld [vmem:[%s0 + $0x58] sm:$0xff]
  %v23 = vld [vmem:[%s0 + $0x60] sm:$0xff]
  %v24 = vld [vmem:[%s0 + $0x68] sm:$0xff]
  %v25 = vld [vmem:[%s0 + $0x70] sm:$0xff]
  %v26 = vld [vmem:[%s0 + $0x78] sm:$0xff]
  %v27 = vld [vmem:[%s0 + $0x80] sm:$0xff]
  %v28 = vld [vmem:[%s0 + $0x88] sm:$0xff]
  %v29 = vld [vmem:[%s0 + $0x90] sm:$0xff]
  %v30 = vld [vmem:[%s0 + $0x98] sm:$0xff]
  %v31 = vld [vmem:[%s0 + $0xa0] sm:$0xff]
  %v32 = vld [vmem:[%s0 + $0xa8] sm:$0xff]
  %v33 = vld [vmem:[%s0 + $0xb0] sm:$0xff]
  %v34 = vld [vmem:[%s0 + $0xb8] sm:$0xff]
  %v35 = vld [vmem:[%s0 + $0xc0] sm:$0xff]
  %v36 = vld [vmem:[%s0 + $0xc8] sm:$0xff]
  %v37 = vld [vmem:[%s0 + $0xd0] sm:$0xff]
  %v38 = vld [vmem:[%s0 + $0xd8] sm:$0xff]
  %v39 = vld [vmem:[%s0 + $0xe0] sm:$0xff]
  %v40 = vld [vmem:[%s0 + $0xe8] sm:$0xff]
  %v41 = vld [vmem:[%s0 + $0xf0] sm:$0xff]
  %v42 = vld [vmem:[%s0 + $0xf8] sm:$0xff]
  %v43 = vld [vmem:[%s0 + $0x100] sm:$0xff]
  %v44 = vld [vmem:[%s0 + $0x108] sm:$0xff]
  %v45 = vld [vmem:[%s0 + $0x110] sm:$0xff]
  %v46 = vld [vmem:[%s0 + $0x118] sm:$0xff]
  %v47 = vld [vmem:[%s0 + $0x120] sm:$0xff]
  %v48 = vld [vmem:[%s0 + $0x128] sm:$0xff]
  %v49 = vld [vmem:[%s0 + $0x130] sm:$0xff]
  %v50 = vld [vmem:[%s0 + $0x138] sm:$0xff]
  %v51 = vld [vmem:[%s0 + $0x140] sm:$0xff]
  %v52 = vld [vmem:[%s0 + $0x148] sm:$0xff]
  %v53 = vld [vmem:[%s0 + $0x150] sm:$0xff]
  %v54 = vld [vmem:[%s0 + $0x158] sm:$0xff]
  %v55 = vld [vmem:[%s0 + $0x160] sm:$0xff]
  %v56 = vld [vmem:[%s0 + $0x168] sm:$0xff]
  %v57 = vld [vmem:[%s0 + $0x170] sm:$0xff]
  %v58 = vld [vmem:[%s0 + $0x178] sm:$0xff]
  %v59 = vld [vmem:[%s0 + $0x180] sm:$0xff]
  %v60 = vld [vmem:[%s0 + $0x188] sm:$0xff]
  %v61 = vld [vmem:[%s0 + $0x190] sm:$0xff]
  %v62 = vld [vmem:[%s0 + $0x198] sm:$0xff]
  %v63 = vld [vmem:[%s0 + $0x1a0] sm:$0xff]
  %v64 = vld [vmem:[%s0 + $0x1a8] sm:$0xff]
  %v65 = vld [vmem:[%s0 + $0x1b0] sm:$0xff]
  %v66 = vld [vmem:[%s0 + $0x1b8] sm:$0xff]
  %v67 = vld [vmem:[%s0 + $0x1c0] sm:$0xff]
  %v68 = vld [vmem:[%s0 + $0x1c8] sm:$0xff]
  %v69 = vld [vmem:[%s0 + $0x1d0] sm:$0xff]
  %v70 = vld [vmem:[%s0 + $0x1d8] sm:$0xff]
  %v71 = vld [vmem:[%s0 + $0x1e0] sm:$0xff]
  %v72 = vld [vmem:[%s0 + $0x1e8] sm:$0xff]
  %v73 = vld [vmem:[%s0 + $0x1f0] sm:$0xff]
  %v74 = vld [vmem:[%s0 + $0x1f8] sm:$0xff]
  %v75 = vld [vmem:[%s1] sm:$0xff]
  %v76 = vld [vmem:[%s1 + $0x8] sm:$0xff]
  %v77 = vld [vmem:[%s1 + $0x10] sm:$0xff]
  %v78 = vld [vmem:[%s1 + $0x18] sm:$0xff]
  %v79 = vld [vmem:[%s1 + $0x20] sm:$0xff]
  %v80 = vld [vmem:[%s1 + $0x28] sm:$0xff]
  %v81 = vld [vmem:[%s1 + $0x30] sm:$0xff]
  %v82 = vld [vmem:[%s1 + $0x38] sm:$0xff]
  %v83 = vld [vmem:[%s1 + $0x40] sm:$0xff]
  %v84 = vld [vmem:[%s1 + $0x48] sm:$0xff]
  %v85 = vld [vmem:[%s1 + $0x50] sm:$0xff]
  %v86 = vld [vmem:[%s1 + $0x58] sm:$0xff]
  %v87 = vld [vmem:[%s1 + $0x60] sm:$0xff]
  %v88 = vld [vmem:[%s1 + $0x68] sm:$0xff]
  %v89 = vld [vmem:[%s1 + $0x70] sm:$0xff]
  %v90 = vld [vmem:[%s1 + $0x78] sm:$0xff]
  %91 = vmatprep.subr.mxu0 0.0
  %92 = vmatpush1.msra.mxu0 %v90
  %93 = vmatprep.subr.mxu0 0.0
  %94 = vmatpush1.msra.mxu0 %v89
  %95 = vmatprep.subr.mxu0 0.0
  %96 = vmatpush1.msra.mxu0 %v88
  %97 = vmatprep.subr.mxu0 0.0
  %98 = vmatpush1.msra.mxu0 %v87
  %99 = vmatprep.subr.mxu0 0.0
  %100 = vmatpush1.msra.mxu0 %v86
  %101 = vmatprep.subr.mxu0 0.0
  %102 = vmatpush1.msra.mxu0 %v85
  %103 = vmatprep.subr.mxu0 0.0
  %104 = vmatpush1.msra.mxu0 %v84
  %105 = vmatprep.subr.mxu0 0.0
  %106 = vmatpush1.msra.mxu0 %v83
  %107 = vmatprep.subr.mxu0 0.0
  %108 = vmatpush1.msra.mxu0 %v82
  %109 = vmatprep.subr.mxu0 0.0
  %110 = vmatpush1.msra.mxu0 %v81
  %111 = vmatprep.subr.mxu0 0.0
  %112 = vmatpush1.msra.mxu0 %v80
  %113 = vmatprep.subr.mxu0 0.0
  %114 = vmatpush1.msra.mxu0 %v79
  %115 = vmatprep.subr.mxu0 0.0
  %116 = vmatpush1.msra.mxu0 %v78
  %117 = vmatprep.subr.mxu0 0.0
  %118 = vmatpush1.msra.mxu0 %v77
  %119 = vmatprep.subr.mxu0 0.0
  %120 = vmatpush1.msra.mxu0 %v76
  %121 = vmatprep.subr.mxu0 0.0
  %122 = vmatpush1.msra.mxu0 %v75
  %123 = vmatprep.subr.mxu0 0.0
  %124 = vmatpush2.msra.mxu0 0.0
  %125 = vmatprep.subr.mxu0 0.0
  %126 = vmatpush2.msra.mxu0 0.0
  %127 = vmatprep.subr.mxu0 0.0
  %128 = vmatpush2.msra.mxu0 0.0
  %129 = vmatprep.subr.mxu0 0.0
  %130 = vmatpush2.msra.mxu0 0.0
  %131 = vmatprep.subr.mxu0 0.0
  %132 = vmatpush2.msra.mxu0 0.0
  %133 = vmatprep.subr.mxu0 0.0
  %134 = vmatpush2.msra.mxu0 0.0
  %135 = vmatprep.subr.mxu0 0.0
  %136 = vmatpush2.msra.mxu0 0.0
  %137 = vmatprep.subr.mxu0 0.0
  %138 = vmatpush2.msra.mxu0 0.0
  %139 = vmatprep.subr.mxu0 0.0
  %140 = vmatpush2.msra.mxu0 0.0
  %141 = vmatprep.subr.mxu0 0.0
  %142 = vmatpush2.msra.mxu0 0.0
  %143 = vmatprep.subr.mxu0 0.0
  %144 = vmatpush2.msra.mxu0 0.0
  %145 = vmatprep.subr.mxu0 0.0
  %146 = vmatpush2.msra.mxu0 0.0
  %147 = vmatprep.subr.mxu0 0.0
  %148 = vmatpush2.msra.mxu0 0.0
  %149 = vmatprep.subr.mxu0 0.0
  %150 = vmatpush2.msra.mxu0 0.0
  %151 = vmatprep.subr.mxu0 0.0
  %152 = vmatpush2.msra.mxu0 0.0
  %153 = vmatprep.subr.mxu0 0.0
  %154 = vmatpush2.msra.mxu0 0.0
  %155 = vmatprep.mubr.f32.mxu0 0.0
  %156 = vmatmul.mubr.f32.gmra.mxu0 %v11
  %v157 = vpop.f32.mrf.mxu0
  %v158 = vadd.f32 0.0, %v157
  %v159 = vpop.f32.mrf.mxu0
  %160 = vmatprep.mubr.f32.mxu0 0.0
  %161 = vmatmul.mubr.f32.gmra.mxu0 %v12
  %v162 = vpop.f32.mrf.mxu0
  %v163 = vadd.f32 0.0, %v162
  %v164 = vpop.f32.mrf.mxu0
  %165 = vmatprep.mubr.f32.mxu0 0.0
  %166 = vmatmul.mubr.f32.gmra.mxu0 %v13
  %v167 = vpop.f32.mrf.mxu0
  %v168 = vadd.f32 0.0, %v167
  %v169 = vpop.f32.mrf.mxu0
  %170 = vmatprep.mubr.f32.mxu0 0.0
  %171 = vmatmul.mubr.f32.gmra.mxu0 %v14
  %v172 = vpop.f32.mrf.mxu0
  %v173 = vadd.f32 0.0, %v172
  %v174 = vpop.f32.mrf.mxu0
  %175 = vmatprep.mubr.f32.mxu0 0.0
  %176 = vmatmul.mubr.f32.gmra.mxu0 %v15
  %v177 = vpop.f32.mrf.mxu0
  %v178 = vadd.f32 0.0, %v177
  %v179 = vpop.f32.mrf.mxu0
  %180 = vmatprep.mubr.f32.mxu0 0.0
  %181 = vmatmul.mubr.f32.gmra.mxu0 %v16
  %v182 = vpop.f32.mrf.mxu0
  %v183 = vadd.f32 0.0, %v182
  %v184 = vpop.f32.mrf.mxu0
  %185 = vmatprep.mubr.f32.mxu0 0.0
  %186 = vmatmul.mubr.f32.gmra.mxu0 %v17
  %v187 = vpop.f32.mrf.mxu0
  %v188 = vadd.f32 0.0, %v187
  %v189 = vpop.f32.mrf.mxu0
  %190 = vmatprep.mubr.f32.mxu0 0.0
  %191 = vmatmul.mubr.f32.gmra.mxu0 %v18
  %v192 = vpop.f32.mrf.mxu0
  %v193 = vadd.f32 0.0, %v192
  %v194 = vpop.f32.mrf.mxu0
  %195 = vmatprep.mubr.f32.mxu0 0.0
  %196 = vmatmul.mubr.f32.gmra.mxu0 %v19
  %v197 = vpop.f32.mrf.mxu0
  %v198 = vadd.f32 0.0, %v197
  %v199 = vpop.f32.mrf.mxu0
  %200 = vmatprep.mubr.f32.mxu0 0.0
  %201 = vmatmul.mubr.f32.gmra.mxu0 %v20
  %v202 = vpop.f32.mrf.mxu0
  %v203 = vadd.f32 0.0, %v202
  %v204 = vpop.f32.mrf.mxu0
  %205 = vmatprep.mubr.f32.mxu0 0.0
  %206 = vmatmul.mubr.f32.gmra.mxu0 %v21
  %v207 = vpop.f32.mrf.mxu0
  %v208 = vadd.f32 0.0, %v207
  %v209 = vpop.f32.mrf.mxu0
  %210 = vmatprep.mubr.f32.mxu0 0.0
  %211 = vmatmul.mubr.f32.gmra.mxu0 %v22
  %v212 = vpop.f32.mrf.mxu0
  %v213 = vadd.f32 0.0, %v212
  %v214 = vpop.f32.mrf.mxu0
  %215 = vmatprep.mubr.f32.mxu0 0.0
  %216 = vmatmul.mubr.f32.gmra.mxu0 %v23
  %v217 = vpop.f32.mrf.mxu0
  %v218 = vadd.f32 0.0, %v217
  %v219 = vpop.f32.mrf.mxu0
  %220 = vmatprep.mubr.f32.mxu0 0.0
  %221 = vmatmul.mubr.f32.gmra.mxu0 %v24
  %v222 = vpop.f32.mrf.mxu0
  %v223 = vadd.f32 0.0, %v222
  %v224 = vpop.f32.mrf.mxu0
  %225 = vmatprep.mubr.f32.mxu0 0.0
  %226 = vmatmul.mubr.f32.gmra.mxu0 %v25
  %v227 = vpop.f32.mrf.mxu0
  %v228 = vadd.f32 0.0, %v227
  %v229 = vpop.f32.mrf.mxu0
  %230 = vmatprep.mubr.f32.mxu0 0.0
  %231 = vmatmul.mubr.f32.gmra.mxu0 %v26
  %v232 = vpop.f32.mrf.mxu0
  %v233 = vadd.f32 0.0, %v232
  %v234 = vpop.f32.mrf.mxu0
  %235 = vmatprep.mubr.f32.mxu0 0.0
  %236 = vmatmul.mubr.f32.gmra.mxu0 %v27
  %v237 = vpop.f32.mrf.mxu0
  %v238 = vadd.f32 0.0, %v237
  %v239 = vpop.f32.mrf.mxu0
  %240 = vmatprep.mubr.f32.mxu0 0.0
  %241 = vmatmul.mubr.f32.gmra.mxu0 %v28
  %v242 = vpop.f32.mrf.mxu0
  %v243 = vadd.f32 0.0, %v242
  %v244 = vpop.f32.mrf.mxu0
  %245 = vmatprep.mubr.f32.mxu0 0.0
  %246 = vmatmul.mubr.f32.gmra.mxu0 %v29
  %v247 = vpop.f32.mrf.mxu0
  %v248 = vadd.f32 0.0, %v247
  %v249 = vpop.f32.mrf.mxu0
  %250 = vmatprep.mubr.f32.mxu0 0.0
  %251 = vmatmul.mubr.f32.gmra.mxu0 %v30
  %v252 = vpop.f32.mrf.mxu0
  %v253 = vadd.f32 0.0, %v252
  %v254 = vpop.f32.mrf.mxu0
  %255 = vmatprep.mubr.f32.mxu0 0.0
  %256 = vmatmul.mubr.f32.gmra.mxu0 %v31
  %v257 = vpop.f32.mrf.mxu0
  %v258 = vadd.f32 0.0, %v257
  %v259 = vpop.f32.mrf.mxu0
  %260 = vmatprep.mubr.f32.mxu0 0.0
  %261 = vmatmul.mubr.f32.gmra.mxu0 %v32
  %v262 = vpop.f32.mrf.mxu0
  %v263 = vadd.f32 0.0, %v262
  %v264 = vpop.f32.mrf.mxu0
  %265 = vmatprep.mubr.f32.mxu0 0.0
  %266 = vmatmul.mubr.f32.gmra.mxu0 %v33
  %v267 = vpop.f32.mrf.mxu0
  %v268 = vadd.f32 0.0, %v267
  %v269 = vpop.f32.mrf.mxu0
  %270 = vmatprep.mubr.f32.mxu0 0.0
  %271 = vmatmul.mubr.f32.gmra.mxu0 %v34
  %v272 = vpop.f32.mrf.mxu0
  %v273 = vadd.f32 0.0, %v272
  %v274 = vpop.f32.mrf.mxu0
  %275 = vmatprep.mubr.f32.mxu0 0.0
  %276 = vmatmul.mubr.f32.gmra.mxu0 %v35
  %v277 = vpop.f32.mrf.mxu0
  %v278 = vadd.f32 0.0, %v277
  %v279 = vpop.f32.mrf.mxu0
  %280 = vmatprep.mubr.f32.mxu0 0.0
  %281 = vmatmul.mubr.f32.gmra.mxu0 %v36
  %v282 = vpop.f32.mrf.mxu0
  %v283 = vadd.f32 0.0, %v282
  %v284 = vpop.f32.mrf.mxu0
  %285 = vmatprep.mubr.f32.mxu0 0.0
  %286 = vmatmul.mubr.f32.gmra.mxu0 %v37
  %v287 = vpop.f32.mrf.mxu0
  %v288 = vadd.f32 0.0, %v287
  %v289 = vpop.f32.mrf.mxu0
  %290 = vmatprep.mubr.f32.mxu0 0.0
  %291 = vmatmul.mubr.f32.gmra.mxu0 %v38
  %v292 = vpop.f32.mrf.mxu0
  %v293 = vadd.f32 0.0, %v292
  %v294 = vpop.f32.mrf.mxu0
  %295 = vmatprep.mubr.f32.mxu0 0.0
  %296 = vmatmul.mubr.f32.gmra.mxu0 %v39
  %v297 = vpop.f32.mrf.mxu0
  %v298 = vadd.f32 0.0, %v297
  %v299 = vpop.f32.mrf.mxu0
  %300 = vmatprep.mubr.f32.mxu0 0.0
  %301 = vmatmul.mubr.f32.gmra.mxu0 %v40
  %v302 = vpop.f32.mrf.mxu0
  %v303 = vadd.f32 0.0, %v302
  %v304 = vpop.f32.mrf.mxu0
  %305 = vmatprep.mubr.f32.mxu0 0.0
  %306 = vmatmul.mubr.f32.gmra.mxu0 %v41
  %v307 = vpop.f32.mrf.mxu0
  %v308 = vadd.f32 0.0, %v307
  %v309 = vpop.f32.mrf.mxu0
  %310 = vmatprep.mubr.f32.mxu0 0.0
  %311 = vmatmul.mubr.f32.gmra.mxu0 %v42
  %v312 = vpop.f32.mrf.mxu0
  %v313 = vadd.f32 0.0, %v312
  %v314 = vpop.f32.mrf.mxu0
  %315 = vmatprep.mubr.f32.mxu0 0.0
  %316 = vmatmul.mubr.f32.gmra.mxu0 %v43
  %v317 = vpop.f32.mrf.mxu0
  %v318 = vadd.f32 0.0, %v317
  %v319 = vpop.f32.mrf.mxu0
  %320 = vmatprep.mubr.f32.mxu0 0.0
  %321 = vmatmul.mubr.f32.gmra.mxu0 %v44
  %v322 = vpop.f32.mrf.mxu0
  %v323 = vadd.f32 0.0, %v322
  %v324 = vpop.f32.mrf.mxu0
  %325 = vmatprep.mubr.f32.mxu0 0.0
  %326 = vmatmul.mubr.f32.gmra.mxu0 %v45
  %v327 = vpop.f32.mrf.mxu0
  %v328 = vadd.f32 0.0, %v327
  %v329 = vpop.f32.mrf.mxu0
  %330 = vmatprep.mubr.f32.mxu0 0.0
  %331 = vmatmul.mubr.f32.gmra.mxu0 %v46
  %v332 = vpop.f32.mrf.mxu0
  %v333 = vadd.f32 0.0, %v332
  %v334 = vpop.f32.mrf.mxu0
  %335 = vmatprep.mubr.f32.mxu0 0.0
  %336 = vmatmul.mubr.f32.gmra.mxu0 %v47
  %v337 = vpop.f32.mrf.mxu0
  %v338 = vadd.f32 0.0, %v337
  %v339 = vpop.f32.mrf.mxu0
  %340 = vmatprep.mubr.f32.mxu0 0.0
  %341 = vmatmul.mubr.f32.gmra.mxu0 %v48
  %v342 = vpop.f32.mrf.mxu0
  %v343 = vadd.f32 0.0, %v342
  %v344 = vpop.f32.mrf.mxu0
  %345 = vmatprep.mubr.f32.mxu0 0.0
  %346 = vmatmul.mubr.f32.gmra.mxu0 %v49
  %v347 = vpop.f32.mrf.mxu0
  %v348 = vadd.f32 0.0, %v347
  %v349 = vpop.f32.mrf.mxu0
  %350 = vmatprep.mubr.f32.mxu0 0.0
  %351 = vmatmul.mubr.f32.gmra.mxu0 %v50
  %v352 = vpop.f32.mrf.mxu0
  %v353 = vadd.f32 0.0, %v352
  %v354 = vpop.f32.mrf.mxu0
  %355 = vmatprep.mubr.f32.mxu0 0.0
  %356 = vmatmul.mubr.f32.gmra.mxu0 %v51
  %v357 = vpop.f32.mrf.mxu0
  %v358 = vadd.f32 0.0, %v357
  %v359 = vpop.f32.mrf.mxu0
  %360 = vmatprep.mubr.f32.mxu0 0.0
  %361 = vmatmul.mubr.f32.gmra.mxu0 %v52
  %v362 = vpop.f32.mrf.mxu0
  %v363 = vadd.f32 0.0, %v362
  %v364 = vpop.f32.mrf.mxu0
  %365 = vmatprep.mubr.f32.mxu0 0.0
  %366 = vmatmul.mubr.f32.gmra.mxu0 %v53
  %v367 = vpop.f32.mrf.mxu0
  %v368 = vadd.f32 0.0, %v367
  %v369 = vpop.f32.mrf.mxu0
  %370 = vmatprep.mubr.f32.mxu0 0.0
  %371 = vmatmul.mubr.f32.gmra.mxu0 %v54
  %v372 = vpop.f32.mrf.mxu0
  %v373 = vadd.f32 0.0, %v372
  %v374 = vpop.f32.mrf.mxu0
  %375 = vmatprep.mubr.f32.mxu0 0.0
  %376 = vmatmul.mubr.f32.gmra.mxu0 %v55
  %v377 = vpop.f32.mrf.mxu0
  %v378 = vadd.f32 0.0, %v377
  %v379 = vpop.f32.mrf.mxu0
  %380 = vmatprep.mubr.f32.mxu0 0.0
  %381 = vmatmul.mubr.f32.gmra.mxu0 %v56
  %v382 = vpop.f32.mrf.mxu0
  %v383 = vadd.f32 0.0, %v382
  %v384 = vpop.f32.mrf.mxu0
  %385 = vmatprep.mubr.f32.mxu0 0.0
  %386 = vmatmul.mubr.f32.gmra.mxu0 %v57
  %v387 = vpop.f32.mrf.mxu0
  %v388 = vadd.f32 0.0, %v387
  %v389 = vpop.f32.mrf.mxu0
  %390 = vmatprep.mubr.f32.mxu0 0.0
  %391 = vmatmul.mubr.f32.gmra.mxu0 %v58
  %v392 = vpop.f32.mrf.mxu0
  %v393 = vadd.f32 0.0, %v392
  %v394 = vpop.f32.mrf.mxu0
  %395 = vmatprep.mubr.f32.mxu0 0.0
  %396 = vmatmul.mubr.f32.gmra.mxu0 %v59
  %v397 = vpop.f32.mrf.mxu0
  %v398 = vadd.f32 0.0, %v397
  %v399 = vpop.f32.mrf.mxu0
  %400 = vmatprep.mubr.f32.mxu0 0.0
  %401 = vmatmul.mubr.f32.gmra.mxu0 %v60
  %v402 = vpop.f32.mrf.mxu0
  %v403 = vadd.f32 0.0, %v402
  %v404 = vpop.f32.mrf.mxu0
  %405 = vmatprep.mubr.f32.mxu0 0.0
  %406 = vmatmul.mubr.f32.gmra.mxu0 %v61
  %v407 = vpop.f32.mrf.mxu0
  %v408 = vadd.f32 0.0, %v407
  %v409 = vpop.f32.mrf.mxu0
  %410 = vmatprep.mubr.f32.mxu0 0.0
  %411 = vmatmul.mubr.f32.gmra.mxu0 %v62
  %v412 = vpop.f32.mrf.mxu0
  %v413 = vadd.f32 0.0, %v412
  %v414 = vpop.f32.mrf.mxu0
  %415 = vmatprep.mubr.f32.mxu0 0.0
  %416 = vmatmul.mubr.f32.gmra.mxu0 %v63
  %v417 = vpop.f32.mrf.mxu0
  %v418 = vadd.f32 0.0, %v417
  %v419 = vpop.f32.mrf.mxu0
  %420 = vmatprep.mubr.f32.mxu0 0.0
  %421 = vmatmul.mubr.f32.gmra.mxu0 %v64
  %v422 = vpop.f32.mrf.mxu0
  %v423 = vadd.f32 0.0, %v422
  %v424 = vpop.f32.mrf.mxu0
  %425 = vmatprep.mubr.f32.mxu0 0.0
  %426 = vmatmul.mubr.f32.gmra.mxu0 %v65
  %v427 = vpop.f32.mrf.mxu0
  %v428 = vadd.f32 0.0, %v427
  %v429 = vpop.f32.mrf.mxu0
  %430 = vmatprep.mubr.f32.mxu0 0.0
  %431 = vmatmul.mubr.f32.gmra.mxu0 %v66
  %v432 = vpop.f32.mrf.mxu0
  %v433 = vadd.f32 0.0, %v432
  %v434 = vpop.f32.mrf.mxu0
  %435 = vmatprep.mubr.f32.mxu0 0.0
  %436 = vmatmul.mubr.f32.gmra.mxu0 %v67
  %v437 = vpop.f32.mrf.mxu0
  %v438 = vadd.f32 0.0, %v437
  %v439 = vpop.f32.mrf.mxu0
  %440 = vmatprep.mubr.f32.mxu0 0.0
  %441 = vmatmul.mubr.f32.gmra.mxu0 %v68
  %v442 = vpop.f32.mrf.mxu0
  %v443 = vadd.f32 0.0, %v442
  %v444 = vpop.f32.mrf.mxu0
  %445 = vmatprep.mubr.f32.mxu0 0.0
  %446 = vmatmul.mubr.f32.gmra.mxu0 %v69
  %v447 = vpop.f32.mrf.mxu0
  %v448 = vadd.f32 0.0, %v447
  %v449 = vpop.f32.mrf.mxu0
  %450 = vmatprep.mubr.f32.mxu0 0.0
  %451 = vmatmul.mubr.f32.gmra.mxu0 %v70
  %v452 = vpop.f32.mrf.mxu0
  %v453 = vadd.f32 0.0, %v452
  %v454 = vpop.f32.mrf.mxu0
  %455 = vmatprep.mubr.f32.mxu0 0.0
  %456 = vmatmul.mubr.f32.gmra.mxu0 %v71
  %v457 = vpop.f32.mrf.mxu0
  %v458 = vadd.f32 0.0, %v457
  %v459 = vpop.f32.mrf.mxu0
  %460 = vmatprep.mubr.f32.mxu0 0.0
  %461 = vmatmul.mubr.f32.gmra.mxu0 %v72
  %v462 = vpop.f32.mrf.mxu0
  %v463 = vadd.f32 0.0, %v462
  %v464 = vpop.f32.mrf.mxu0
  %465 = vmatprep.mubr.f32.mxu0 0.0
  %466 = vmatmul.mubr.f32.gmra.mxu0 %v73
  %v467 = vpop.f32.mrf.mxu0
  %v468 = vadd.f32 0.0, %v467
  %v469 = vpop.f32.mrf.mxu0
  %470 = vmatprep.mubr.f32.mxu0 0.0
  %471 = vmatmul.mubr.f32.gmra.mxu0 %v74
  %v472 = vpop.f32.mrf.mxu0
  %v473 = vadd.f32 0.0, %v472
  %v474 = vpop.f32.mrf.mxu0
  %475 = vdwg.mxu0
  %v476 = vadd.f32 %v158, %v163
  %v477 = vadd.f32 %v476, %v168
  %v478 = vadd.f32 %v477, %v173
  %v479 = vadd.f32 %v478, %v178
  %v480 = vadd.f32 %v479, %v183
  %v481 = vadd.f32 %v480, %v188
  %v482 = vadd.f32 %v481, %v193
  %v483 = vadd.f32 %v482, %v198
  %v484 = vadd.f32 %v483, %v203
  %v485 = vadd.f32 %v484, %v208
  %v486 = vadd.f32 %v485, %v213
  %v487 = vadd.f32 %v486, %v218
  %v488 = vadd.f32 %v487, %v223
  %v489 = vadd.f32 %v488, %v228
  %v490 = vadd.f32 %v489, %v233
  %v491 = vadd.f32 %v490, %v238
  %v492 = vadd.f32 %v491, %v243
  %v493 = vadd.f32 %v492, %v248
  %v494 = vadd.f32 %v493, %v253
  %v495 = vadd.f32 %v494, %v258
  %v496 = vadd.f32 %v495, %v263
  %v497 = vadd.f32 %v496, %v268
  %v498 = vadd.f32 %v497, %v273
  %v499 = vadd.f32 %v498, %v278
  %v500 = vadd.f32 %v499, %v283
  %v501 = vadd.f32 %v500, %v288
  %v502 = vadd.f32 %v501, %v293
  %v503 = vadd.f32 %v502, %v298
  %v504 = vadd.f32 %v503, %v303
  %v505 = vadd.f32 %v504, %v308
  %v506 = vadd.f32 %v505, %v313
  %v507 = vadd.f32 %v506, %v318
  %v508 = vadd.f32 %v507, %v323
  %v509 = vadd.f32 %v508, %v328
  %v510 = vadd.f32 %v509, %v333
  %v511 = vadd.f32 %v510, %v338
  %v512 = vadd.f32 %v511, %v343
  %v513 = vadd.f32 %v512, %v348
  %v514 = vadd.f32 %v513, %v353
  %v515 = vadd.f32 %v514, %v358
  %v516 = vadd.f32 %v515, %v363
  %v517 = vadd.f32 %v516, %v368
  %v518 = vadd.f32 %v517, %v373
  %v519 = vadd.f32 %v518, %v378
  %v520 = vadd.f32 %v519, %v383
  %v521 = vadd.f32 %v520, %v388
  %v522 = vadd.f32 %v521, %v393
  %v523 = vadd.f32 %v522, %v398
  %v524 = vadd.f32 %v523, %v403
  %v525 = vadd.f32 %v524, %v408
  %v526 = vadd.f32 %v525, %v413
  %v527 = vadd.f32 %v526, %v418
  %v528 = vadd.f32 %v527, %v423
  %v529 = vadd.f32 %v528, %v428
  %v530 = vadd.f32 %v529, %v433
  %v531 = vadd.f32 %v530, %v438
  %v532 = vadd.f32 %v531, %v443
  %v533 = vadd.f32 %v532, %v448
  %v534 = vadd.f32 %v533, %v453
  %v535 = vadd.f32 %v534, %v458
  %v536 = vadd.f32 %v535, %v463
  %v537 = vadd.f32 %v536, %v468
  %v538 = vadd.f32 %v537, %v473
  %v539 = vrot.slane %v538, 4
  %v540 = vadd.f32 %v538, %v539
  %v541 = vrot.slane %v540, 2
  %v542 = vadd.f32 %v540, %v541
  %v543 = vrot.slane %v542, 1
  %v544 = vadd.f32 %v542, %v543
  %545 = vst [vmem:[%s2] sm:$0x1] %v544
  %v546 = vmul.f32 %v158, %v158
  %v547 = vmul.f32 %v163, %v163
  %v548 = vmul.f32 %v168, %v168
  %v549 = vmul.f32 %v173, %v173
  %v550 = vmul.f32 %v178, %v178
  %v551 = vmul.f32 %v183, %v183
  %v552 = vmul.f32 %v188, %v188
  %v553 = vmul.f32 %v193, %v193
  %v554 = vmul.f32 %v198, %v198
  %v555 = vmul.f32 %v203, %v203
  %v556 = vmul.f32 %v208, %v208
  %v557 = vmul.f32 %v213, %v213
  %v558 = vmul.f32 %v218, %v218
  %v559 = vmul.f32 %v223, %v223
  %v560 = vmul.f32 %v228, %v228
  %v561 = vmul.f32 %v233, %v233
  %v562 = vmul.f32 %v238, %v238
  %v563 = vmul.f32 %v243, %v243
  %v564 = vmul.f32 %v248, %v248
  %v565 = vmul.f32 %v253, %v253
  %v566 = vmul.f32 %v258, %v258
  %v567 = vmul.f32 %v263, %v263
  %v568 = vmul.f32 %v268, %v268
  %v569 = vmul.f32 %v273, %v273
  %v570 = vmul.f32 %v278, %v278
  %v571 = vmul.f32 %v283, %v283
  %v572 = vmul.f32 %v288, %v288
  %v573 = vmul.f32 %v293, %v293
  %v574 = vmul.f32 %v298, %v298
  %v575 = vmul.f32 %v303, %v303
  %v576 = vmul.f32 %v308, %v308
  %v577 = vmul.f32 %v313, %v313
  %v578 = vmul.f32 %v318, %v318
  %v579 = vmul.f32 %v323, %v323
  %v580 = vmul.f32 %v328, %v328
  %v581 = vmul.f32 %v333, %v333
  %v582 = vmul.f32 %v338, %v338
  %v583 = vmul.f32 %v343, %v343
  %v584 = vmul.f32 %v348, %v348
  %v585 = vmul.f32 %v353, %v353
  %v586 = vmul.f32 %v358, %v358
  %v587 = vmul.f32 %v363, %v363
  %v588 = vmul.f32 %v368, %v368
  %v589 = vmul.f32 %v373, %v373
  %v590 = vmul.f32 %v378, %v378
  %v591 = vmul.f32 %v383, %v383
  %v592 = vmul.f32 %v388, %v388
  %v593 = vmul.f32 %v393, %v393
  %v594 = vmul.f32 %v398, %v398
  %v595 = vmul.f32 %v403, %v403
  %v596 = vmul.f32 %v408, %v408
  %v597 = vmul.f32 %v413, %v413
  %v598 = vmul.f32 %v418, %v418
  %v599 = vmul.f32 %v423, %v423
  %v600 = vmul.f32 %v428, %v428
  %v601 = vmul.f32 %v433, %v433
  %v602 = vmul.f32 %v438, %v438
  %v603 = vmul.f32 %v443, %v443
  %v604 = vmul.f32 %v448, %v448
  %v605 = vmul.f32 %v453, %v453
  %v606 = vmul.f32 %v458, %v458
  %v607 = vmul.f32 %v463, %v463
  %v608 = vmul.f32 %v468, %v468
  %v609 = vmul.f32 %v473, %v473
  %v610 = vadd.f32 %v546, %v547
  %v611 = vadd.f32 %v610, %v548
  %v612 = vadd.f32 %v611, %v549
  %v613 = vadd.f32 %v612, %v550
  %v614 = vadd.f32 %v613, %v551
  %v615 = vadd.f32 %v614, %v552
  %v616 = vadd.f32 %v615, %v553
  %v617 = vadd.f32 %v616, %v554
  %v618 = vadd.f32 %v617, %v555
  %v619 = vadd.f32 %v618, %v556
  %v620 = vadd.f32 %v619, %v557
  %v621 = vadd.f32 %v620, %v558
  %v622 = vadd.f32 %v621, %v559
  %v623 = vadd.f32 %v622, %v560
  %v624 = vadd.f32 %v623, %v561
  %v625 = vadd.f32 %v624, %v562
  %v626 = vadd.f32 %v625, %v563
  %v627 = vadd.f32 %v626, %v564
  %v628 = vadd.f32 %v627, %v565
  %v629 = vadd.f32 %v628, %v566
  %v630 = vadd.f32 %v629, %v567
  %v631 = vadd.f32 %v630, %v568
  %v632 = vadd.f32 %v631, %v569
  %v633 = vadd.f32 %v632, %v570
  %v634 = vadd.f32 %v633, %v571
  %v635 = vadd.f32 %v634, %v572
  %v636 = vadd.f32 %v635, %v573
  %v637 = vadd.f32 %v636, %v574
  %v638 = vadd.f32 %v637, %v575
  %v639 = vadd.f32 %v638, %v576
  %v640 = vadd.f32 %v639, %v577
  %v641 = vadd.f32 %v640, %v578
  %v642 = vadd.f32 %v641, %v579
  %v643 = vadd.f32 %v642, %v580
  %v644 = vadd.f32 %v643, %v581
  %v645 = vadd.f32 %v644, %v582
  %v646 = vadd.f32 %v645, %v583
  %v647 = vadd.f32 %v646, %v584
  %v648 = vadd.f32 %v647, %v585
  %v649 = vadd.f32 %v648, %v586
  %v650 = vadd.f32 %v649, %v587
  %v651 = vadd.f32 %v650, %v588
  %v652 = vadd.f32 %v651, %v589
  %v653 = vadd.f32 %v652, %v590
  %v654 = vadd.f32 %v653, %v591
  %v655 = vadd.f32 %v654, %v592
  %v656 = vadd.f32 %v655, %v593
  %v657 = vadd.f32 %v656, %v594
  %v658 = vadd.f32 %v657, %v595
  %v659 = vadd.f32 %v658, %v596
  %v660 = vadd.f32 %v659, %v597
  %v661 = vadd.f32 %v660, %v598
  %v662 = vadd.f32 %v661, %v599
  %v663 = vadd.f32 %v662, %v600
  %v664 = vadd.f32 %v663, %v601
  %v665 = vadd.f32 %v664, %v602
  %v666 = vadd.f32 %v665, %v603
  %v667 = vadd.f32 %v666, %v604
  %v668 = vadd.f32 %v667, %v605
  %v669 = vadd.f32 %v668, %v606
  %v670 = vadd.f32 %v669, %v607
  %v671 = vadd.f32 %v670, %v608
  %v672 = vadd.f32 %v671, %v609
  %v673 = vrot.slane %v672, 4
  %v674 = vadd.f32 %v672, %v673
  %v675 = vrot.slane %v674, 2
  %v676 = vadd.f32 %v674, %v675
  %v677 = vrot.slane %v676, 1
  %v678 = vadd.f32 %v676, %v677
  %679 = vst [vmem:[%s2 + $0x1] sm:$0x1] %v678
  // Predicated region
  $region10: #{bottleneck_forward.4} parent=0 // pred_check
    _
  $region11: #{bottleneck_forward.4} parent=0 // pred_check_branch
    %681 = sbr.rel (0) target = $region13
  $region12: #{bottleneck_forward.4} parent=0 // pred_region
    _
  $region13: #{bottleneck_forward.4} parent=0 // pred_fallthru
    _
  // Predicated region
  $region14: #{bottleneck_forward.4} parent=0 // pred_check
    _
  $region15: #{bottleneck_forward.4} parent=0 // pred_check_branch
    %683 = sbr.rel (0) target = $region17
  $region16: #{bottleneck_forward.4} parent=0 // pred_region
    _
  $region17: #{bottleneck_forward.4} parent=0 // pred_fallthru
    _

// kernel: bottleneck_forward.5
$region0: #{bottleneck_forward.5}
  #allocation0 [shape = 'u32[]', space=smem, size = 0x4, offset = 0x4, fixed_abs, tag = 'smem constant byte address 0x4 - core index']
  #allocation1 [shape = 'u32[144,128]{1,0:T(1,128)}', space=vmem, size = 0x12000, scoped, tag = 'internal scratch']
  #allocation2 [shape = 'f32[4,9,16,128]{3,2,1,0:T(8,128)}', space=vmem, size = 0x48000, scoped, tag = 'scratch operand']
  %s0 = inlined_call_operand.vmem [shape: f32[2,32,8,128], index: 0, kind: input, shape index: {}]
  %s1 = inlined_call_operand.vmem [shape: f32[128,128], index: 1, kind: input, shape index: {}]
  %s2 = inlined_call_operand.vmem [shape: f32[1,2,128], index: 2, kind: input, shape index: {}]
  %s3 = inlined_call_operand.vmem [shape: f32[1,128], index: 3, kind: input, shape index: {}]
  %s4 = inlined_call_operand.vmem [shape: f32[1,128], index: 4, kind: input, shape index: {}]
  %s5 = inlined_call_operand.vmem [shape: f32[9,128,128], index: 5, kind: input, shape index: {}]
  %s6 = inlined_call_operand.vmem [shape: f32[2,8,8,128], index: 6, kind: output, shape index: {0}]
  %s7 = inlined_call_operand.vmem [shape: f32[2,2,128], index: 7, kind: output, shape index: {1}]
  %8 = xla_tuple %s6, %s7
  %s9 = sld [smem:[#allocation0]]
  $region65: #{bottleneck_forward.5} parent=0
    _
  %s11 = ssub.s32 1, %s9
  %s12 = scalar_select 0, %s11, %s9
  loop: start=0, step=1, limit=4
  $region2: #{bottleneck_forward.5} parent=0 // loop_pre_header
    _
  $region3: #{bottleneck_forward.5} parent=0 // loop_header
    %s14 = sphi 0, %s18
    %p15 = scmp.ge.s32.totalorder %s14, 4
    %s24 = sphi 0, %s26
    %s27 = sphi 0, %s24
    %s28 = sphi 0, %s27
    %s44 = sphi 0, %s28
    %s48 = sphi 0, %s48
    %s50 = sphi 0, %s48
    %s51 = sphi 0, %s50
    %s65 = sphi 0, %s51
    %s69 = sphi 0, %s69
    %s71 = sphi 0, %s69
    %s72 = sphi 0, %s71
    %s86 = sphi 0, %s72
    %s90 = sphi 0, %s90
    %s92 = sphi 0, %s90
    %s93 = sphi 0, %s92
    %s107 = sphi 0, %s93
    %s111 = sphi 0, %s111
    %s113 = sphi 0, %s111
    %s114 = sphi 0, %s113
    %s128 = sphi 0, %s114
    %s132 = sphi 0, %s132
    %s134 = sphi 0, %s132
    %s135 = sphi 0, %s134
    %s149 = sphi 0, %s135
    %s155 = sphi 0, %s157
    %s158 = sphi 0, %s155
    %s159 = sphi 0, %s158
    %s175 = sphi 0, %s159
    %s181 = sphi 0, %s183
    %s184 = sphi 0, %s181
    %s185 = sphi 0, %s184
    %s201 = sphi 0, %s185
  $region4: #{bottleneck_forward.5} parent=0 // loop_header_branch
    %17 = sbr.rel (%p15) target = $region8
  $region5: #{bottleneck_forward.5} parent=0 // loop_body
    %s19 = ssub.s32 %s14, 1
    %s20 = ssub.s32 %s14, 2
    %s21 = sadd.s32 %s14, 1
    %s22 = ssub.s32 %s14, %s21
    %p23 = scmp.eq.s32.totalorder %s22, 0
    %s25 = sadd.s32 %s24, 1
    %s26 = scalar_select %p23, %s24, %s25
    %p29 = pneg %p23
    %p30 = scmp.eq.s32.totalorder %s14, 1
    %p31 = por %p29, %p30
    %p32 = scmp.ne.s32.totalorder %s24, %s27
    %p33 = scmp.eq.s32.totalorder %s14, 0
    %p34 = por %p32, %p33
    %p35 = scmp.ne.s32.totalorder %s24, %s27
    %p36 = scmp.eq.s32.totalorder %s19, 1
    %p37 = por %p35, %p36
    %p38 = scmp.ne.s32.totalorder %s27, %s28
    %p39 = scmp.eq.s32.totalorder %s19, 0
    %p40 = por %p38, %p39
    %p41 = scmp.ne.s32.totalorder %s27, %s28
    %p42 = scmp.eq.s32.totalorder %s20, 1
    %p43 = por %p41, %p42
    %p45 = scmp.ne.s32.totalorder %s28, %s44
    %p46 = scmp.eq.s32.totalorder %s20, 0
    %p47 = por %p45, %p46
    %s49 = sadd.s32 %s48, 1
    %p52 = scmp.eq.s32.totalorder %s14, 1
    %p53 = scmp.ne.s32.totalorder %s48, %s50
    %p54 = scmp.eq.s32.totalorder %s14, 0
    %p55 = por %p53, %p54
    %p56 = scmp.ne.s32.totalorder %s48, %s50
    %p57 = scmp.eq.s32.totalorder %s19, 1
    %p58 = por %p56, %p57
    %p59 = scmp.ne.s32.totalorder %s50, %s51
    %p60 = scmp.eq.s32.totalorder %s19, 0
    %p61 = por %p59, %p60
    %p62 = scmp.ne.s32.totalorder %s50, %s51
    %p63 = scmp.eq.s32.totalorder %s20, 1
    %p64 = por %p62, %p63
    %p66 = scmp.ne.s32.totalorder %s51, %s65
    %p67 = scmp.eq.s32.totalorder %s20, 0
    %p68 = por %p66, %p67
    %s70 = sadd.s32 %s69, 1
    %p73 = scmp.eq.s32.totalorder %s14, 1
    %p74 = scmp.ne.s32.totalorder %s69, %s71
    %p75 = scmp.eq.s32.totalorder %s14, 0
    %p76 = por %p74, %p75
    %p77 = scmp.ne.s32.totalorder %s69, %s71
    %p78 = scmp.eq.s32.totalorder %s19, 1
    %p79 = por %p77, %p78
    %p80 = scmp.ne.s32.totalorder %s71, %s72
    %p81 = scmp.eq.s32.totalorder %s19, 0
    %p82 = por %p80, %p81
    %p83 = scmp.ne.s32.totalorder %s71, %s72
    %p84 = scmp.eq.s32.totalorder %s20, 1
    %p85 = por %p83, %p84
    %p87 = scmp.ne.s32.totalorder %s72, %s86
    %p88 = scmp.eq.s32.totalorder %s20, 0
    %p89 = por %p87, %p88
    %s91 = sadd.s32 %s90, 1
    %p94 = scmp.eq.s32.totalorder %s14, 1
    %p95 = scmp.ne.s32.totalorder %s90, %s92
    %p96 = scmp.eq.s32.totalorder %s14, 0
    %p97 = por %p95, %p96
    %p98 = scmp.ne.s32.totalorder %s90, %s92
    %p99 = scmp.eq.s32.totalorder %s19, 1
    %p100 = por %p98, %p99
    %p101 = scmp.ne.s32.totalorder %s92, %s93
    %p102 = scmp.eq.s32.totalorder %s19, 0
    %p103 = por %p101, %p102
    %p104 = scmp.ne.s32.totalorder %s92, %s93
    %p105 = scmp.eq.s32.totalorder %s20, 1
    %p106 = por %p104, %p105
    %p108 = scmp.ne.s32.totalorder %s93, %s107
    %p109 = scmp.eq.s32.totalorder %s20, 0
    %p110 = por %p108, %p109
    %s112 = sadd.s32 %s111, 1
    %p115 = scmp.eq.s32.totalorder %s14, 1
    %p116 = scmp.ne.s32.totalorder %s111, %s113
    %p117 = scmp.eq.s32.totalorder %s14, 0
    %p118 = por %p116, %p117
    %p119 = scmp.ne.s32.totalorder %s111, %s113
    %p120 = scmp.eq.s32.totalorder %s19, 1
    %p121 = por %p119, %p120
    %p122 = scmp.ne.s32.totalorder %s113, %s114
    %p123 = scmp.eq.s32.totalorder %s19, 0
    %p124 = por %p122, %p123
    %p125 = scmp.ne.s32.totalorder %s113, %s114
    %p126 = scmp.eq.s32.totalorder %s20, 1
    %p127 = por %p125, %p126
    %p129 = scmp.ne.s32.totalorder %s114, %s128
    %p130 = scmp.eq.s32.totalorder %s20, 0
    %p131 = por %p129, %p130
    %s133 = sadd.s32 %s132, 1
    %p136 = scmp.eq.s32.totalorder %s14, 1
    %p137 = scmp.ne.s32.totalorder %s132, %s134
    %p138 = scmp.eq.s32.totalorder %s14, 0
    %p139 = por %p137, %p138
    %p140 = scmp.ne.s32.totalorder %s132, %s134
    %p141 = scmp.eq.s32.totalorder %s19, 1
    %p142 = por %p140, %p141
    %p143 = scmp.ne.s32.totalorder %s134, %s135
    %p144 = scmp.eq.s32.totalorder %s19, 0
    %p145 = por %p143, %p144
    %p146 = scmp.ne.s32.totalorder %s134, %s135
    %p147 = scmp.eq.s32.totalorder %s20, 1
    %p148 = por %p146, %p147
    %p150 = scmp.ne.s32.totalorder %s135, %s149
    %p151 = scmp.eq.s32.totalorder %s20, 0
    %p152 = por %p150, %p151
    %s153 = ssub.s32 %s14, %s21
    %p154 = scmp.eq.s32.totalorder %s153, 0
    %s156 = sadd.s32 %s155, 1
    %s157 = scalar_select %p154, %s155, %s156
    %p160 = pneg %p154
    %p161 = scmp.eq.s32.totalorder %s14, 1
    %p162 = por %p160, %p161
    %p163 = scmp.ne.s32.totalorder %s155, %s158
    %p164 = scmp.eq.s32.totalorder %s14, 0
    %p165 = por %p163, %p164
    %p166 = scmp.ne.s32.totalorder %s155, %s158
    %p167 = scmp.eq.s32.totalorder %s19, 1
    %p168 = por %p166, %p167
    %p169 = scmp.ne.s32.totalorder %s158, %s159
    %p170 = scmp.eq.s32.totalorder %s19, 0
    %p171 = por %p169, %p170
    %p172 = scmp.ne.s32.totalorder %s158, %s159
    %p173 = scmp.eq.s32.totalorder %s20, 1
    %p174 = por %p172, %p173
    %p176 = scmp.ne.s32.totalorder %s159, %s175
    %p177 = scmp.eq.s32.totalorder %s20, 0
    %p178 = por %p176, %p177
    %s179 = ssub.s32 %s14, %s21
    %p180 = scmp.eq.s32.totalorder %s179, 0
    %s182 = sadd.s32 %s181, 1
    %s183 = scalar_select %p180, %s181, %s182
    %p186 = pneg %p180
    %p187 = scmp.eq.s32.totalorder %s14, 1
    %p188 = por %p186, %p187
    %p189 = scmp.ne.s32.totalorder %s181, %s184
    %p190 = scmp.eq.s32.totalorder %s14, 0
    %p191 = por %p189, %p190
    %p192 = scmp.ne.s32.totalorder %s181, %s184
    %p193 = scmp.eq.s32.totalorder %s19, 1
    %p194 = por %p192, %p193
    %p195 = scmp.ne.s32.totalorder %s184, %s185
    %p196 = scmp.eq.s32.totalorder %s19, 0
    %p197 = por %p195, %p196
    %p198 = scmp.ne.s32.totalorder %s184, %s185
    %p199 = scmp.eq.s32.totalorder %s20, 1
    %p200 = por %p198, %p199
    %p202 = scmp.ne.s32.totalorder %s185, %s201
    %p203 = scmp.eq.s32.totalorder %s20, 0
    %p204 = por %p202, %p203
    %p205 = scmp.le.s32.totalorder 1, %s14
    %p206 = scmp.lt.s32.totalorder %s14, 3
    %p207 = pnand %p205, %p206
    %p208 = pneg %p207
    // Predicated region
    $region9: #{bottleneck_forward.5} parent=5 // pred_check
      _
    $region10: #{bottleneck_forward.5} parent=5 // pred_check_branch
      %210 = sbr.rel (%p207) target = $region12
    $region11: #{bottleneck_forward.5} parent=5 // pred_region
      %s211 = ssub.s32 %s14, 1
      // Predicated region
      $region13: #{bottleneck_forward.5} parent=11 // pred_check
        %p212 = pneg %p61
      $region14: #{bottleneck_forward.5} parent=11 // pred_check_branch
        %214 = sbr.rel (%p212) target = $region16
      $region15: #{bottleneck_forward.5} parent=11 // pred_region
        _
      $region16: #{bottleneck_forward.5} parent=11 // pred_fallthru
        _
      // Predicated region
      $region17: #{bottleneck_forward.5} parent=11 // pred_check
        %p215 = pneg %p82
      $region18: #{bottleneck_forward.5} parent=11 // pred_check_branch
        %217 = sbr.rel (%p215) target = $region20
      $region19: #{bottleneck_forward.5} parent=11 // pred_region
        _
      $region20: #{bottleneck_forward.5} parent=11 // pred_fallthru
        _
      // Predicated region
      $region21: #{bottleneck_forward.5} parent=11 // pred_check
        %p218 = pneg %p103
      $region22: #{bottleneck_forward.5} parent=11 // pred_check_branch
        %220 = sbr.rel (%p218) target = $region24
      $region23: #{bottleneck_forward.5} parent=11 // pred_region
        _
      $region24: #{bottleneck_forward.5} parent=11 // pred_fallthru
        _
      // Predicated region
      $region25: #{bottleneck_forward.5} parent=11 // pred_check
        %p221 = pneg %p124
      $region26: #{bottleneck_forward.5} parent=11 // pred_check_branch
        %223 = sbr.rel (%p221) target = $region28
      $region27: #{bottleneck_forward.5} parent=11 // pred_region
        _
      $region28: #{bottleneck_forward.5} parent=11 // pred_fallthru
        _
      // Predicated region
      $region29: #{bottleneck_forward.5} parent=11 // pred_check
        %p224 = pneg %p145
      $region30: #{bottleneck_forward.5} parent=11 // pred_check_branch
        %226 = sbr.rel (%p224) target = $region32
      $region31: #{bottleneck_forward.5} parent=11 // pred_region
        _
      $region32: #{bottleneck_forward.5} parent=11 // pred_fallthru
        _
    $region12: #{bottleneck_forward.5} parent=5 // pred_fallthru
      _
    %p227 = scmp.lt.s32.totalorder %s14, 2
    // Predicated region
    $region33: #{bottleneck_forward.5} parent=5 // pred_check
      %p228 = pneg %p227
    $region34: #{bottleneck_forward.5} parent=5 // pred_check_branch
      %230 = sbr.rel (%p228) target = $region36
    $region35: #{bottleneck_forward.5} parent=5 // pred_region
      // Predicated region
      $region37: #{bottleneck_forward.5} parent=35 // pred_check
        %p231 = pneg %p34
      $region38: #{bottleneck_forward.5} parent=35 // pred_check_branch
        %233 = sbr.rel (%p231) target = $region40
      $region39: #{bottleneck_forward.5} parent=35 // pred_region
        %p234 = scmp.lt.s32.totalorder %s14, 1
        %s235 = scalar_select %p234, %s14, 1
        %s236 = smul.addr %s235, 32
        %s237 = smul.addr %s236, 8
        %s238 = scalar_lea.vmem %s0, %s237
      $region40: #{bottleneck_forward.5} parent=35 // pred_fallthru
        _
    $region36: #{bottleneck_forward.5} parent=5 // pred_fallthru
      _
    %p239 = scmp.le.s32.totalorder 1, %s14
    %p240 = scmp.lt.s32.totalorder %s14, 3
    %p241 = pnand %p239, %p240
    %p242 = pneg %p241
    // Predicated region
    $region41: #{bottleneck_forward.5} parent=5 // pred_check
      _
    $region42: #{bottleneck_forward.5} parent=5 // pred_check_branch
      %244 = sbr.rel (%p241) target = $region44
    $region43: #{bottleneck_forward.5} parent=5 // pred_region
      %s245 = ssub.s32 %s14, 1
      %p246 = scmp.lt.s32.totalorder %s19, 1
      %s247 = scalar_select %p246, %s19, 1
      %s248 = smul.addr %s247, 32
      %s249 = smul.addr %s248, 8
      %s250 = scalar_lea.vmem %s0, %s249
      %p251 = pneg %p40
      %p252 = pneg %p37
      %p253 = pneg %p61
      %p254 = pneg %p58
      %p255 = pneg %p82
      %p256 = pneg %p79
      %p257 = pneg %p103
      %p258 = pneg %p100
      %p259 = pneg %p124
      %p260 = pneg %p121
      %p261 = pneg %p145
      %p262 = pneg %p142
      %p263 = pneg %p171
      %p264 = pneg %p168
      %p265 = scmp.lt.s32.totalorder %s19, 1
      %s266 = scalar_select %p265, %s19, 1
      %s267 = smul.addr %s266, 8
      %s268 = smul.addr %s267, 8
      %s269 = scalar_lea.vmem %s6, %s268
      %p270 = pneg %p197
      %p271 = pneg %p194
      %p272 = scmp.lt.s32.totalorder %s19, 1
      %s273 = scalar_select %p272, %s19, 1
      %s274 = smul.addr %s273, 2
      %s275 = scalar_lea.vmem %s7, %s274
      %p276 = scmp.lt.s32.totalorder %s19, 1
      %s277 = scalar_select %p276, %s19, 1
      %s278 = smul.addr %s277, 32
      %s279 = smul.addr %s278, 8
      %s280 = scalar_lea.vmem %s0, %s279
      %p281 = scmp.lt.s32.totalorder %s19, 1
      %s282 = scalar_select %p281, %s19, 1
      %s283 = smul.addr %s282, 8
      %s284 = smul.addr %s283, 8
      %s285 = scalar_lea.vmem %s6, %s284
      %p286 = scmp.lt.s32.totalorder %s19, 1
      %s287 = scalar_select %p286, %s19, 1
      %s288 = smul.addr %s287, 2
      %s289 = scalar_lea.vmem %s7, %s288
      %v290 = vld [vmem:[%s2] sm:$0x3]
      %v291 = vld [vmem:[%s3] sm:$0x1]
      %v292 = vld [vmem:[%s4] sm:$0x1]
      %v293 = vadd.f32 %v290, 0.0
      %v294 = vmul.f32 %v293, 0.001953125
      %v295 = vmul.f32 %v294, %v294
      %v297 = vrot.slane %v295, 7
      %v299 = vsub.f32 %v294, %v297
      %v300 = vadd.f32 %v299, 1e-05
      %v301 = vrsqrt.pop %v300
      %v304 = vunpack.c.l.s4 1966171168
      %v305 = vunpack.c.0.s8 %v304
      %v306 = vlaneseq
      %v307 = vshrl.u32 %v306, 7
      %v308 = vsub.s32 %v305, %v307
      %v309 = vrot.slane %v301, %v308
      %v310 = vcombine.high %v309, %v309
      %v312 = vunpack.c.l.s4 1966171168
      %v313 = vunpack.c.0.s8 %v312
      %v314 = vlaneseq
      %v315 = vshrl.u32 %v314, 7
      %v316 = vsub.s32 %v313, %v315
      %v317 = vrot.slane %v310, %v316
      %v319 = vmul.f32 %v291, %v317
      %v320 = vmul.f32 %v294, %v319
      %v321 = vsub.f32 %v292, %v320
      %v322 = vld [vmem:[%s280] sm:$0xff]
      %v323 = vld [vmem:[%s280 + $0x8] sm:$0xff]
      %v324 = vld [vmem:[%s280 + $0x10] sm:$0xff]
      %v325 = vld [vmem:[%s280 + $0x18] sm:$0xff]
      %v326 = vld [vmem:[%s280 + $0x20] sm:$0xff]
      %v327 = vld [vmem:[%s280 + $0x28] sm:$0xff]
      %v328 = vld [vmem:[%s280 + $0x30] sm:$0xff]
      %v329 = vld [vmem:[%s280 + $0x38] sm:$0xff]
      %v330 = vld [vmem:[%s280 + $0x40] sm:$0xff]
      %v331 = vld [vmem:[%s280 + $0x48] sm:$0xff]
      %v332 = vld [vmem:[%s280 + $0x50] sm:$0xff]
      %v333 = vld [vmem:[%s280 + $0x58] sm:$0xff]
      %v334 = vld [vmem:[%s280 + $0x60] sm:$0xff]
      %v335 = vld [vmem:[%s280 + $0x68] sm:$0xff]
      %v336 = vld [vmem:[%s280 + $0x70] sm:$0xff]
      %v337 = vld [vmem:[%s280 + $0x78] sm:$0xff]
      %v338 = vld [vmem:[%s280 + $0x80] sm:$0xff]
      %v339 = vld [vmem:[%s280 + $0x88] sm:$0xff]
      %v340 = vld [vmem:[%s280 + $0x90] sm:$0xff]
      %v341 = vld [vmem:[%s280 + $0x98] sm:$0xff]
      %v342 = vld [vmem:[%s280 + $0xa0] sm:$0xff]
      %v343 = vld [vmem:[%s280 + $0xa8] sm:$0xff]
      %v344 = vld [vmem:[%s280 + $0xb0] sm:$0xff]
      %v345 = vld [vmem:[%s280 + $0xb8] sm:$0xff]
      %v346 = vld [vmem:[%s280 + $0xc0] sm:$0xff]
      %v347 = vld [vmem:[%s280 + $0xc8] sm:$0xff]
      %v348 = vld [vmem:[%s280 + $0xd0] sm:$0xff]
      %v349 = vld [vmem:[%s280 + $0xd8] sm:$0xff]
      %v350 = vld [vmem:[%s280 + $0xe0] sm:$0xff]
      %v351 = vld [vmem:[%s280 + $0xe8] sm:$0xff]
      %v352 = vld [vmem:[%s280 + $0xf0] sm:$0xff]
      %v353 = vld [vmem:[%s280 + $0xf8] sm:$0xff]
      %v354 = vld [vmem:[%s1] sm:$0xff]
      %v355 = vld [vmem:[%s1 + $0x8] sm:$0xff]
      %v356 = vld [vmem:[%s1 + $0x10] sm:$0xff]
      %v357 = vld [vmem:[%s1 + $0x18] sm:$0xff]
      %v358 = vld [vmem:[%s1 + $0x20] sm:$0xff]
      %v359 = vld [vmem:[%s1 + $0x28] sm:$0xff]
      %v360 = vld [vmem:[%s1 + $0x30] sm:$0xff]
      %v361 = vld [vmem:[%s1 + $0x38] sm:$0xff]
      %v362 = vld [vmem:[%s1 + $0x40] sm:$0xff]
      %v363 = vld [vmem:[%s1 + $0x48] sm:$0xff]
      %v364 = vld [vmem:[%s1 + $0x50] sm:$0xff]
      %v365 = vld [vmem:[%s1 + $0x58] sm:$0xff]
      %v366 = vld [vmem:[%s1 + $0x60] sm:$0xff]
      %v367 = vld [vmem:[%s1 + $0x68] sm:$0xff]
      %v368 = vld [vmem:[%s1 + $0x70] sm:$0xff]
      %v369 = vld [vmem:[%s1 + $0x78] sm:$0xff]
      %370 = vmatprep.subr.mxu0 0.0
      %371 = vmatpush1.msra.mxu0 %v369
      %372 = vmatprep.subr.mxu0 0.0
      %373 = vmatpush1.msra.mxu0 %v368
      %374 = vmatprep.subr.mxu0 0.0
      %375 = vmatpush1.msra.mxu0 %v367
      %376 = vmatprep.subr.mxu0 0.0
      %377 = vmatpush1.msra.mxu0 %v366
      %378 = vmatprep.subr.mxu0 0.0
      %379 = vmatpush1.msra.mxu0 %v365
      %380 = vmatprep.subr.mxu0 0.0
      %381 = vmatpush1.msra.mxu0 %v364
      %382 = vmatprep.subr.mxu0 0.0
      %383 = vmatpush1.msra.mxu0 %v363
      %384 = vmatprep.subr.mxu0 0.0
      %385 = vmatpush1.msra.mxu0 %v362
      %386 = vmatprep.subr.mxu0 0.0
      %387 = vmatpush1.msra.mxu0 %v361
      %388 = vmatprep.subr.mxu0 0.0
      %389 = vmatpush1.msra.mxu0 %v360
      %390 = vmatprep.subr.mxu0 0.0
      %391 = vmatpush1.msra.mxu0 %v359
      %392 = vmatprep.subr.mxu0 0.0
      %393 = vmatpush1.msra.mxu0 %v358
      %394 = vmatprep.subr.mxu0 0.0
      %395 = vmatpush1.msra.mxu0 %v357
      %396 = vmatprep.subr.mxu0 0.0
      %397 = vmatpush1.msra.mxu0 %v356
      %398 = vmatprep.subr.mxu0 0.0
      %399 = vmatpush1.msra.mxu0 %v355
      %400 = vmatprep.subr.mxu0 0.0
      %401 = vmatpush1.msra.mxu0 %v354
      %402 = vmatprep.subr.mxu0 0.0
      %403 = vmatpush2.msra.mxu0 0.0
      %404 = vmatprep.subr.mxu0 0.0
      %405 = vmatpush2.msra.mxu0 0.0
      %406 = vmatprep.subr.mxu0 0.0
      %407 = vmatpush2.msra.mxu0 0.0
      %408 = vmatprep.subr.mxu0 0.0
      %409 = vmatpush2.msra.mxu0 0.0
      %410 = vmatprep.subr.mxu0 0.0
      %411 = vmatpush2.msra.mxu0 0.0
      %412 = vmatprep.subr.mxu0 0.0
      %413 = vmatpush2.msra.mxu0 0.0
      %414 = vmatprep.subr.mxu0 0.0
      %415 = vmatpush2.msra.mxu0 0.0
      %416 = vmatprep.subr.mxu0 0.0
      %417 = vmatpush2.msra.mxu0 0.0
      %418 = vmatprep.subr.mxu0 0.0
      %419 = vmatpush2.msra.mxu0 0.0
      %420 = vmatprep.subr.mxu0 0.0
      %421 = vmatpush2.msra.mxu0 0.0
      %422 = vmatprep.subr.mxu0 0.0
      %423 = vmatpush2.msra.mxu0 0.0
      %424 = vmatprep.subr.mxu0 0.0
      %425 = vmatpush2.msra.mxu0 0.0
      %426 = vmatprep.subr.mxu0 0.0
      %427 = vmatpush2.msra.mxu0 0.0
      %428 = vmatprep.subr.mxu0 0.0
      %429 = vmatpush2.msra.mxu0 0.0
      %430 = vmatprep.subr.mxu0 0.0
      %431 = vmatpush2.msra.mxu0 0.0
      %432 = vmatprep.subr.mxu0 0.0
      %433 = vmatpush2.msra.mxu0 0.0
      %434 = vmatprep.mubr.f32.mxu0 0.0
      %435 = vmatmul.mubr.f32.gmra.mxu0 %v322
      %v436 = vpop.f32.mrf.mxu0
      %v437 = vadd.f32 0.0, %v436
      %v438 = vpop.f32.mrf.mxu0
      %439 = vmatprep.mubr.f32.mxu0 0.0
      %440 = vmatmul.mubr.f32.gmra.mxu0 %v323
      %v441 = vpop.f32.mrf.mxu0
      %v442 = vadd.f32 0.0, %v441
      %v443 = vpop.f32.mrf.mxu0
      %444 = vmatprep.mubr.f32.mxu0 0.0
      %445 = vmatmul.mubr.f32.gmra.mxu0 %v324
      %v446 = vpop.f32.mrf.mxu0
      %v447 = vadd.f32 0.0, %v446
      %v448 = vpop.f32.mrf.mxu0
      %449 = vmatprep.mubr.f32.mxu0 0.0
      %450 = vmatmul.mubr.f32.gmra.mxu0 %v325
      %v451 = vpop.f32.mrf.mxu0
      %v452 = vadd.f32 0.0, %v451
      %v453 = vpop.f32.mrf.mxu0
      %454 = vmatprep.mubr.f32.mxu0 0.0
      %455 = vmatmul.mubr.f32.gmra.mxu0 %v326
      %v456 = vpop.f32.mrf.mxu0
      %v457 = vadd.f32 0.0, %v456
      %v458 = vpop.f32.mrf.mxu0
      %459 = vmatprep.mubr.f32.mxu0 0.0
      %460 = vmatmul.mubr.f32.gmra.mxu0 %v327
      %v461 = vpop.f32.mrf.mxu0
      %v462 = vadd.f32 0.0, %v461
      %v463 = vpop.f32.mrf.mxu0
      %464 = vmatprep.mubr.f32.mxu0 0.0
      %465 = vmatmul.mubr.f32.gmra.mxu0 %v328
      %v466 = vpop.f32.mrf.mxu0
      %v467 = vadd.f32 0.0, %v466
      %v468 = vpop.f32.mrf.mxu0
      %469 = vmatprep.mubr.f32.mxu0 0.0
      %470 = vmatmul.mubr.f32.gmra.mxu0 %v329
      %v471 = vpop.f32.mrf.mxu0
      %v472 = vadd.f32 0.0, %v471
      %v473 = vpop.f32.mrf.mxu0
      %474 = vmatprep.mubr.f32.mxu0 0.0
      %475 = vmatmul.mubr.f32.gmra.mxu0 %v330
      %v476 = vpop.f32.mrf.mxu0
      %v477 = vadd.f32 0.0, %v476
      %v478 = vpop.f32.mrf.mxu0
      %479 = vmatprep.mubr.f32.mxu0 0.0
      %480 = vmatmul.mubr.f32.gmra.mxu0 %v331
      %v481 = vpop.f32.mrf.mxu0
      %v482 = vadd.f32 0.0, %v481
      %v483 = vpop.f32.mrf.mxu0
      %484 = vmatprep.mubr.f32.mxu0 0.0
      %485 = vmatmul.mubr.f32.gmra.mxu0 %v332
      %v486 = vpop.f32.mrf.mxu0
      %v487 = vadd.f32 0.0, %v486
      %v488 = vpop.f32.mrf.mxu0
      %489 = vmatprep.mubr.f32.mxu0 0.0
      %490 = vmatmul.mubr.f32.gmra.mxu0 %v333
      %v491 = vpop.f32.mrf.mxu0
      %v492 = vadd.f32 0.0, %v491
      %v493 = vpop.f32.mrf.mxu0
      %494 = vmatprep.mubr.f32.mxu0 0.0
      %495 = vmatmul.mubr.f32.gmra.mxu0 %v334
      %v496 = vpop.f32.mrf.mxu0
      %v497 = vadd.f32 0.0, %v496
      %v498 = vpop.f32.mrf.mxu0
      %499 = vmatprep.mubr.f32.mxu0 0.0
      %500 = vmatmul.mubr.f32.gmra.mxu0 %v335
      %v501 = vpop.f32.mrf.mxu0
      %v502 = vadd.f32 0.0, %v501
      %v503 = vpop.f32.mrf.mxu0
      %504 = vmatprep.mubr.f32.mxu0 0.0
      %505 = vmatmul.mubr.f32.gmra.mxu0 %v336
      %v506 = vpop.f32.mrf.mxu0
      %v507 = vadd.f32 0.0, %v506
      %v508 = vpop.f32.mrf.mxu0
      %509 = vmatprep.mubr.f32.mxu0 0.0
      %510 = vmatmul.mubr.f32.gmra.mxu0 %v337
      %v511 = vpop.f32.mrf.mxu0
      %v512 = vadd.f32 0.0, %v511
      %v513 = vpop.f32.mrf.mxu0
      %514 = vmatprep.mubr.f32.mxu0 0.0
      %515 = vmatmul.mubr.f32.gmra.mxu0 %v338
      %v516 = vpop.f32.mrf.mxu0
      %v517 = vadd.f32 0.0, %v516
      %v518 = vpop.f32.mrf.mxu0
      %519 = vmatprep.mubr.f32.mxu0 0.0
      %520 = vmatmul.mubr.f32.gmra.mxu0 %v339
      %v521 = vpop.f32.mrf.mxu0
      %v522 = vadd.f32 0.0, %v521
      %v523 = vpop.f32.mrf.mxu0
      %524 = vmatprep.mubr.f32.mxu0 0.0
      %525 = vmatmul.mubr.f32.gmra.mxu0 %v340
      %v526 = vpop.f32.mrf.mxu0
      %v527 = vadd.f32 0.0, %v526
      %v528 = vpop.f32.mrf.mxu0
      %529 = vmatprep.mubr.f32.mxu0 0.0
      %530 = vmatmul.mubr.f32.gmra.mxu0 %v341
      %v531 = vpop.f32.mrf.mxu0
      %v532 = vadd.f32 0.0, %v531
      %v533 = vpop.f32.mrf.mxu0
      %534 = vmatprep.mubr.f32.mxu0 0.0
      %535 = vmatmul.mubr.f32.gmra.mxu0 %v342
      %v536 = vpop.f32.mrf.mxu0
      %v537 = vadd.f32 0.0, %v536
      %v538 = vpop.f32.mrf.mxu0
      %539 = vmatprep.mubr.f32.mxu0 0.0
      %540 = vmatmul.mubr.f32.gmra.mxu0 %v343
      %v541 = vpop.f32.mrf.mxu0
      %v542 = vadd.f32 0.0, %v541
      %v543 = vpop.f32.mrf.mxu0
      %544 = vmatprep.mubr.f32.mxu0 0.0
      %545 = vmatmul.mubr.f32.gmra.mxu0 %v344
      %v546 = vpop.f32.mrf.mxu0
      %v547 = vadd.f32 0.0, %v546
      %v548 = vpop.f32.mrf.mxu0
      %549 = vmatprep.mubr.f32.mxu0 0.0
      %550 = vmatmul.mubr.f32.gmra.mxu0 %v345
      %v551 = vpop.f32.mrf.mxu0
      %v552 = vadd.f32 0.0, %v551
      %v553 = vpop.f32.mrf.mxu0
      %554 = vmatprep.mubr.f32.mxu0 0.0
      %555 = vmatmul.mubr.f32.gmra.mxu0 %v346
      %v556 = vpop.f32.mrf.mxu0
      %v557 = vadd.f32 0.0, %v556
      %v558 = vpop.f32.mrf.mxu0
      %559 = vmatprep.mubr.f32.mxu0 0.0
      %560 = vmatmul.mubr.f32.gmra.mxu0 %v347
      %v561 = vpop.f32.mrf.mxu0
      %v562 = vadd.f32 0.0, %v561
      %v563 = vpop.f32.mrf.mxu0
      %564 = vmatprep.mubr.f32.mxu0 0.0
      %565 = vmatmul.mubr.f32.gmra.mxu0 %v348
      %v566 = vpop.f32.mrf.mxu0
      %v567 = vadd.f32 0.0, %v566
      %v568 = vpop.f32.mrf.mxu0
      %569 = vmatprep.mubr.f32.mxu0 0.0
      %570 = vmatmul.mubr.f32.gmra.mxu0 %v349
      %v571 = vpop.f32.mrf.mxu0
      %v572 = vadd.f32 0.0, %v571
      %v573 = vpop.f32.mrf.mxu0
      %574 = vmatprep.mubr.f32.mxu0 0.0
      %575 = vmatmul.mubr.f32.gmra.mxu0 %v350
      %v576 = vpop.f32.mrf.mxu0
      %v577 = vadd.f32 0.0, %v576
      %v578 = vpop.f32.mrf.mxu0
      %579 = vmatprep.mubr.f32.mxu0 0.0
      %580 = vmatmul.mubr.f32.gmra.mxu0 %v351
      %v581 = vpop.f32.mrf.mxu0
      %v582 = vadd.f32 0.0, %v581
      %v583 = vpop.f32.mrf.mxu0
      %584 = vmatprep.mubr.f32.mxu0 0.0
      %585 = vmatmul.mubr.f32.gmra.mxu0 %v352
      %v586 = vpop.f32.mrf.mxu0
      %v587 = vadd.f32 0.0, %v586
      %v588 = vpop.f32.mrf.mxu0
      %589 = vmatprep.mubr.f32.mxu0 0.0
      %590 = vmatmul.mubr.f32.gmra.mxu0 %v353
      %v591 = vpop.f32.mrf.mxu0
      %v592 = vadd.f32 0.0, %v591
      %v593 = vpop.f32.mrf.mxu0
      %594 = vdwg.mxu0
      %v596 = vlaneseq
      %v597 = vshrl.u32 %v596, 7
      %v598 = vsub.s32 0, %v597
      %v599 = vrot.slane %v319, %v598
      %v601 = vmul.f32 %v437, %v599
      %v602 = vmul.f32 %v442, %v599
      %v603 = vmul.f32 %v447, %v599
      %v604 = vmul.f32 %v452, %v599
      %v605 = vmul.f32 %v457, %v599
      %v606 = vmul.f32 %v462, %v599
      %v607 = vmul.f32 %v467, %v599
      %v608 = vmul.f32 %v472, %v599
      %v609 = vmul.f32 %v477, %v599
      %v610 = vmul.f32 %v482, %v599
      %v611 = vmul.f32 %v487, %v599
      %v612 = vmul.f32 %v492, %v599
      %v613 = vmul.f32 %v497, %v599
      %v614 = vmul.f32 %v502, %v599
      %v615 = vmul.f32 %v507, %v599
      %v616 = vmul.f32 %v512, %v599
      %v617 = vmul.f32 %v517, %v599
      %v618 = vmul.f32 %v522, %v599
      %v619 = vmul.f32 %v527, %v599
      %v620 = vmul.f32 %v532, %v599
      %v621 = vmul.f32 %v537, %v599
      %v622 = vmul.f32 %v542, %v599
      %v623 = vmul.f32 %v547, %v599
      %v624 = vmul.f32 %v552, %v599
      %v625 = vmul.f32 %v557, %v599
      %v626 = vmul.f32 %v562, %v599
      %v627 = vmul.f32 %v567, %v599
      %v628 = vmul.f32 %v572, %v599
      %v629 = vmul.f32 %v577, %v599
      %v630 = vmul.f32 %v582, %v599
      %v631 = vmul.f32 %v587, %v599
      %v632 = vmul.f32 %v592, %v599
      %v634 = vlaneseq
      %v635 = vshrl.u32 %v634, 7
      %v636 = vsub.s32 0, %v635
      %v637 = vrot.slane %v321, %v636
      %v639 = vadd.f32 %v601, %v637
      %v640 = vadd.f32 %v602, %v637
      %v641 = vadd.f32 %v603, %v637
      %v642 = vadd.f32 %v604, %v637
      %v643 = vadd.f32 %v605, %v637
      %v644 = vadd.f32 %v606, %v637
      %v645 = vadd.f32 %v607, %v637
      %v646 = vadd.f32 %v608, %v637
      %v647 = vadd.f32 %v609, %v637
      %v648 = vadd.f32 %v610, %v637
      %v649 = vadd.f32 %v611, %v637
      %v650 = vadd.f32 %v612, %v637
      %v651 = vadd.f32 %v613, %v637
      %v652 = vadd.f32 %v614, %v637
      %v653 = vadd.f32 %v615, %v637
      %v654 = vadd.f32 %v616, %v637
      %v655 = vadd.f32 %v617, %v637
      %v656 = vadd.f32 %v618, %v637
      %v657 = vadd.f32 %v619, %v637
      %v658 = vadd.f32 %v620, %v637
      %v659 = vadd.f32 %v621, %v637
      %v660 = vadd.f32 %v622, %v637
      %v661 = vadd.f32 %v623, %v637
      %v662 = vadd.f32 %v624, %v637
      %v663 = vadd.f32 %v625, %v637
      %v664 = vadd.f32 %v626, %v637
      %v665 = vadd.f32 %v627, %v637
      %v666 = vadd.f32 %v628, %v637
      %v667 = vadd.f32 %v629, %v637
      %v668 = vadd.f32 %v630, %v637
      %v669 = vadd.f32 %v631, %v637
      %v670 = vadd.f32 %v632, %v637
      %v671 = vmax.f32 %v639, 0.0
      %v672 = vmax.f32 %v640, 0.0
      %v673 = vmax.f32 %v641, 0.0
      %v674 = vmax.f32 %v642, 0.0
      %v675 = vmax.f32 %v643, 0.0
      %v676 = vmax.f32 %v644, 0.0
      %v677 = vmax.f32 %v645, 0.0
      %v678 = vmax.f32 %v646, 0.0
      %v679 = vmax.f32 %v647, 0.0
      %v680 = vmax.f32 %v648, 0.0
      %v681 = vmax.f32 %v649, 0.0
      %v682 = vmax.f32 %v650, 0.0
      %v683 = vmax.f32 %v651, 0.0
      %v684 = vmax.f32 %v652, 0.0
      %v685 = vmax.f32 %v653, 0.0
      %v686 = vmax.f32 %v654, 0.0
      %v687 = vmax.f32 %v655, 0.0
      %v688 = vmax.f32 %v656, 0.0
      %v689 = vmax.f32 %v657, 0.0
      %v690 = vmax.f32 %v658, 0.0
      %v691 = vmax.f32 %v659, 0.0
      %v692 = vmax.f32 %v660, 0.0
      %v693 = vmax.f32 %v661, 0.0
      %v694 = vmax.f32 %v662, 0.0
      %v695 = vmax.f32 %v663, 0.0
      %v696 = vmax.f32 %v664, 0.0
      %v697 = vmax.f32 %v665, 0.0
      %v698 = vmax.f32 %v666, 0.0
      %v699 = vmax.f32 %v667, 0.0
      %v700 = vmax.f32 %v668, 0.0
      %v701 = vmax.f32 %v669, 0.0
      %v702 = vmax.f32 %v670, 0.0
      %703 = vst [vmem:[#allocation2] sm:$0xff] 0.0
      %704 = vst [vmem:[#allocation2 + $0x8] sm:$0xff] 0.0
      %705 = vst [vmem:[#allocation2 + $0x10] sm:$0xff] 0.0
      %706 = vst [vmem:[#allocation2 + $0x18] sm:$0xff] 0.0
      %707 = vst [vmem:[#allocation2 + $0x20] sm:$0xff] 0.0
      %708 = vst [vmem:[#allocation2 + $0x28] sm:$0xff] 0.0
      %709 = vst [vmem:[#allocation2 + $0x30] sm:$0xff] 0.0
      %710 = vst [vmem:[#allocation2 + $0x38] sm:$0xff] 0.0
      %711 = vst [vmem:[#allocation2 + $0x40] sm:$0xff] 0.0
      %712 = vst [vmem:[#allocation2 + $0x48] sm:$0xff] 0.0
      %713 = vst [vmem:[#allocation2 + $0x50] sm:$0xff] 0.0
      %714 = vst [vmem:[#allocation2 + $0x58] sm:$0xff] 0.0
      %715 = vst [vmem:[#allocation2 + $0x60] sm:$0xff] 0.0
      %716 = vst [vmem:[#allocation2 + $0x68] sm:$0xff] 0.0
      %717 = vst [vmem:[#allocation2 + $0x70] sm:$0xff] 0.0
      %718 = vst [vmem:[#allocation2 + $0x78] sm:$0xff] 0.0
      %719 = vst [vmem:[#allocation2 + $0x80] sm:$0xff] 0.0
      %720 = vst [vmem:[#allocation2 + $0x88] sm:$0xff] 0.0
      %721 = vst [vmem:[#allocation2 + $0x90] sm:$0xff] 0.0
      %722 = vst [vmem:[#allocation2 + $0x98] sm:$0xff] 0.0
      %723 = vst [vmem:[#allocation2 + $0xa0] sm:$0xff] 0.0
      %724 = vst [vmem:[#allocation2 + $0xa8] sm:$0xff] 0.0
      %725 = vst [vmem:[#allocation2 + $0xb0] sm:$0xff] 0.0
      %726 = vst [vmem:[#allocation2 + $0xb8] sm:$0xff] 0.0
      %727 = vst [vmem:[#allocation2 + $0xc0] sm:$0xff] 0.0
      %728 = vst [vmem:[#allocation2 + $0xc8] sm:$0xff] 0.0
      %729 = vst [vmem:[#allocation2 + $0xd0] sm:$0xff] 0.0
      %730 = vst [vmem:[#allocation2 + $0xd8] sm:$0xff] 0.0
      %731 = vst [vmem:[#allocation2 + $0xe0] sm:$0xff] 0.0
      %732 = vst [vmem:[#allocation2 + $0xe8] sm:$0xff] 0.0
      %733 = vst [vmem:[#allocation2 + $0xf0] sm:$0xff] 0.0
      %734 = vst [vmem:[#allocation2 + $0xf8] sm:$0xff] 0.0
      %735 = vst [vmem:[#allocation2 + $0x100] sm:$0xff] 0.0
      %736 = vst [vmem:[#allocation2 + $0x108] sm:$0xff] 0.0
      %737 = vst [vmem:[#allocation2 + $0x110] sm:$0xff] 0.0
      %738 = vst [vmem:[#allocation2 + $0x118] sm:$0xff] 0.0
      %739 = vst [vmem:[#allocation2 + $0x120] sm:$0xff] 0.0
      %740 = vst [vmem:[#allocation2 + $0x128] sm:$0xff] 0.0
      %741 = vst [vmem:[#allocation2 + $0x130] sm:$0xff] 0.0
      %742 = vst [vmem:[#allocation2 + $0x138] sm:$0xff] 0.0
      %743 = vst [vmem:[#allocation2 + $0x140] sm:$0xff] 0.0
      %744 = vst [vmem:[#allocation2 + $0x148] sm:$0xff] 0.0
      %745 = vst [vmem:[#allocation2 + $0x150] sm:$0xff] 0.0
      %746 = vst [vmem:[#allocation2 + $0x158] sm:$0xff] 0.0
      %747 = vst [vmem:[#allocation2 + $0x160] sm:$0xff] 0.0
      %748 = vst [vmem:[#allocation2 + $0x168] sm:$0xff] 0.0
      %749 = vst [vmem:[#allocation2 + $0x170] sm:$0xff] 0.0
      %750 = vst [vmem:[#allocation2 + $0x178] sm:$0xff] 0.0
      %751 = vst [vmem:[#allocation2 + $0x180] sm:$0xff] 0.0
      %752 = vst [vmem:[#allocation2 + $0x188] sm:$0xff] 0.0
      %753 = vst [vmem:[#allocation2 + $0x190] sm:$0xff] 0.0
      %754 = vst [vmem:[#allocation2 + $0x198] sm:$0xff] 0.0
      %755 = vst [vmem:[#allocation2 + $0x1a0] sm:$0xff] 0.0
      %756 = vst [vmem:[#allocation2 + $0x1a8] sm:$0xff] 0.0
      %757 = vst [vmem:[#allocation2 + $0x1b0] sm:$0xff] 0.0
      %758 = vst [vmem:[#allocation2 + $0x1b8] sm:$0xff] 0.0
      %759 = vst [vmem:[#allocation2 + $0x1c0] sm:$0xff] 0.0
      %760 = vst [vmem:[#allocation2 + $0x1c8] sm:$0xff] 0.0
      %761 = vst [vmem:[#allocation2 + $0x1d0] sm:$0xff] 0.0
      %762 = vst [vmem:[#allocation2 + $0x1d8] sm:$0xff] 0.0
      %763 = vst [vmem:[#allocation2 + $0x1e0] sm:$0xff] 0.0
      %764 = vst [vmem:[#allocation2 + $0x1e8] sm:$0xff] 0.0
      %765 = vst [vmem:[#allocation2 + $0x1f0] sm:$0xff] 0.0
      %766 = vst [vmem:[#allocation2 + $0x1f8] sm:$0xff] 0.0
      %767 = vst [vmem:[#allocation2 + $0x200] sm:$0xff] 0.0
      %768 = vst [vmem:[#allocation2 + $0x208] sm:$0xff] 0.0
      %769 = vst [vmem:[#allocation2 + $0x210] sm:$0xff] 0.0
      %770 = vst [vmem:[#allocation2 + $0x218] sm:$0xff] 0.0
      %771 = vst [vmem:[#allocation2 + $0x220] sm:$0xff] 0.0
      %772 = vst [vmem:[#allocation2 + $0x228] sm:$0xff] 0.0
      %773 = vst [vmem:[#allocation2 + $0x230] sm:$0xff] 0.0
      %774 = vst [vmem:[#allocation2 + $0x238] sm:$0xff] 0.0
      %s775 = scalar_lea.vmem [#allocation2], 432
      %776 = vst [vmem:[%s775] sm:$0xff] %v671
      %777 = vst [vmem:[%s775 + $0x10] sm:$0xff] %v672
      %778 = vst [vmem:[%s775 + $0x20] sm:$0xff] %v673
      %779 = vst [vmem:[%s775 + $0x30] sm:$0xff] %v674
      %780 = vst [vmem:[%s775 + $0x40] sm:$0xff] %v675
      %781 = vst [vmem:[%s775 + $0x50] sm:$0xff] %v676
      %782 = vst [vmem:[%s775 + $0x60] sm:$0xff] %v677
      %783 = vst [vmem:[%s775 + $0x70] sm:$0xff] %v678
      %s784 = scalar_lea.vmem [#allocation2], 288
      %785 = vst [vmem:[%s784 + $0x1] sm:$0xff] %v679
      %786 = vst [vmem:[%s784 + $0x11] sm:$0xff] %v680
      %787 = vst [vmem:[%s784 + $0x21] sm:$0xff] %v681
      %788 = vst [vmem:[%s784 + $0x31] sm:$0xff] %v682
      %789 = vst [vmem:[%s784 + $0x41] sm:$0xff] %v683
      %790 = vst [vmem:[%s784 + $0x51] sm:$0xff] %v684
      %791 = vst [vmem:[%s784 + $0x61] sm:$0xff] %v685
      %792 = vst [vmem:[%s784 + $0x71] sm:$0xff] %v686
      %s793 = scalar_lea.vmem [#allocation2], 160
      %794 = vst [vmem:[%s793] sm:$0xff] %v687
      %795 = vst [vmem:[%s793 + $0x10] sm:$0xff] %v688
      %796 = vst [vmem:[%s793 + $0x20] sm:$0xff] %v689
      %797 = vst [vmem:[%s793 + $0x30] sm:$0xff] %v690
      %798 = vst [vmem:[%s793 + $0x40] sm:$0xff] %v691
      %799 = vst [vmem:[%s793 + $0x50] sm:$0xff] %v692
      %800 = vst [vmem:[%s793 + $0x60] sm:$0xff] %v693
      %801 = vst [vmem:[%s793 + $0x70] sm:$0xff] %v694
      %s802 = scalar_lea.vmem [#allocation2], 16
      %803 = vst [vmem:[%s802 + $0x1] sm:$0xff] %v695
      %804 = vst [vmem:[%s802 + $0x11] sm:$0xff] %v696
      %805 = vst [vmem:[%s802 + $0x21] sm:$0xff] %v697
      %806 = vst [vmem:[%s802 + $0x31] sm:$0xff] %v698
      %807 = vst [vmem:[%s802 + $0x41] sm:$0xff] %v699
      %808 = vst [vmem:[%s802 + $0x51] sm:$0xff] %v700
      %809 = vst [vmem:[%s802 + $0x61] sm:$0xff] %v701
      %810 = vst [vmem:[%s802 + $0x71] sm:$0xff] %v702
      %v811 = vld [vmem:[#allocation2] sm:$0xff]
      %v812 = vld [vmem:[#allocation2 + $0x10] sm:$0xff]
      %v813 = vld [vmem:[#allocation2 + $0x20] sm:$0xff]
      %v814 = vld [vmem:[#allocation2 + $0x30] sm:$0xff]
      %v815 = vld [vmem:[#allocation2 + $0x40] sm:$0xff]
      %v816 = vld [vmem:[#allocation2 + $0x50] sm:$0xff]
      %v817 = vld [vmem:[#allocation2 + $0x60] sm:$0xff]
      %v818 = vld [vmem:[#allocation2 + $0x70] sm:$0xff]
      %v819 = vld [vmem:[%s5] sm:$0xff]
      %v820 = vld [vmem:[%s5 + $0x8] sm:$0xff]
      %v821 = vld [vmem:[%s5 + $0x10] sm:$0xff]
      %v822 = vld [vmem:[%s5 + $0x18] sm:$0xff]
      %v823 = vld [vmem:[%s5 + $0x20] sm:$0xff]
      %v824 = vld [vmem:[%s5 + $0x28] sm:$0xff]
      %v825 = vld [vmem:[%s5 + $0x30] sm:$0xff]
      %v826 = vld [vmem:[%s5 + $0x38] sm:$0xff]
      %v827 = vld [vmem:[%s5 + $0x40] sm:$0xff]
      %v828 = vld [vmem:[%s5 + $0x48] sm:$0xff]
      %v829 = vld [vmem:[%s5 + $0x50] sm:$0xff]
      %v830 = vld [vmem:[%s5 + $0x58] sm:$0xff]
      %v831 = vld [vmem:[%s5 + $0x60] sm:$0xff]
      %v832 = vld [vmem:[%s5 + $0x68] sm:$0xff]
      %v833 = vld [vmem:[%s5 + $0x70] sm:$0xff]
      %v834 = vld [vmem:[%s5 + $0x78] sm:$0xff]
      %s835 = scalar_lea.vmem [#allocation2], 144
      %v836 = vld [vmem:[%s835] sm:$0xff]
      %v837 = vld [vmem:[%s835 + $0x10] sm:$0xff]
      %v838 = vld [vmem:[%s835 + $0x20] sm:$0xff]
      %v839 = vld [vmem:[%s835 + $0x30] sm:$0xff]
      %v840 = vld [vmem:[%s835 + $0x40] sm:$0xff]
      %v841 = vld [vmem:[%s835 + $0x50] sm:$0xff]
      %v842 = vld [vmem:[%s835 + $0x60] sm:$0xff]
      %v843 = vld [vmem:[%s835 + $0x70] sm:$0xff]
      %s844 = scalar_lea.vmem %s5, 128
      %v845 = vld [vmem:[%s844] sm:$0xff]
      %v846 = vld [vmem:[%s844 + $0x8] sm:$0xff]
      %v847 = vld [vmem:[%s844 + $0x10] sm:$0xff]
      %v848 = vld [vmem:[%s844 + $0x18] sm:$0xff]
      %v849 = vld [vmem:[%s844 + $0x20] sm:$0xff]
      %v850 = vld [vmem:[%s844 + $0x28] sm:$0xff]
      %v851 = vld [vmem:[%s844 + $0x30] sm:$0xff]
      %v852 = vld [vmem:[%s844 + $0x38] sm:$0xff]
      %v853 = vld [vmem:[%s844 + $0x40] sm:$0xff]
      %v854 = vld [vmem:[%s844 + $0x48] sm:$0xff]
      %v855 = vld [vmem:[%s844 + $0x50] sm:$0xff]
      %v856 = vld [vmem:[%s844 + $0x58] sm:$0xff]
      %v857 = vld [vmem:[%s844 + $0x60] sm:$0xff]
      %v858 = vld [vmem:[%s844 + $0x68] sm:$0xff]
      %v859 = vld [vmem:[%s844 + $0x70] sm:$0xff]
      %v860 = vld [vmem:[%s844 + $0x78] sm:$0xff]
      %861 = vmatprep.subr.mxu0 0.0
      %862 = vmatpush1.msra.mxu0 %v860
      %863 = vmatprep.subr.mxu0 0.0
      %864 = vmatpush1.msra.mxu0 %v859
      %865 = vmatprep.subr.mxu0 0.0
      %866 = vmatpush1.msra.mxu0 %v858
      %867 = vmatprep.subr.mxu0 0.0
      %868 = vmatpush1.msra.mxu0 %v857
      %869 = vmatprep.subr.mxu0 0.0
      %870 = vmatpush1.msra.mxu0 %v856
      %871 = vmatprep.subr.mxu0 0.0
      %872 = vmatpush1.msra.mxu0 %v855
      %873 = vmatprep.subr.mxu0 0.0
      %874 = vmatpush1.msra.mxu0 %v854
      %875 = vmatprep.subr.mxu0 0.0
      %876 = vmatpush1.msra.mxu0 %v853
      %877 = vmatprep.subr.mxu0 0.0
      %878 = vmatpush1.msra.mxu0 %v852
      %879 = vmatprep.subr.mxu0 0.0
      %880 = vmatpush1.msra.mxu0 %v851
      %881 = vmatprep.subr.mxu0 0.0
      %882 = vmatpush1.msra.mxu0 %v850
      %883 = vmatprep.subr.mxu0 0.0
      %884 = vmatpush1.msra.mxu0 %v849
      %885 = vmatprep.subr.mxu0 0.0
      %886 = vmatpush1.msra.mxu0 %v848
      %887 = vmatprep.subr.mxu0 0.0
      %888 = vmatpush1.msra.mxu0 %v847
      %889 = vmatprep.subr.mxu0 0.0
      %890 = vmatpush1.msra.mxu0 %v846
      %891 = vmatprep.subr.mxu0 0.0
      %892 = vmatpush1.msra.mxu0 %v845
      %893 = vmatprep.subr.mxu0 0.0
      %894 = vmatpush2.msra.mxu0 0.0
      %895 = vmatprep.subr.mxu0 0.0
      %896 = vmatpush2.msra.mxu0 0.0
      %897 = vmatprep.subr.mxu0 0.0
      %898 = vmatpush2.msra.mxu0 0.0
      %899 = vmatprep.subr.mxu0 0.0
      %900 = vmatpush2.msra.mxu0 0.0
      %901 = vmatprep.subr.mxu0 0.0
      %902 = vmatpush2.msra.mxu0 0.0
      %903 = vmatprep.subr.mxu0 0.0
      %904 = vmatpush2.msra.mxu0 0.0
      %905 = vmatprep.subr.mxu0 0.0
      %906 = vmatpush2.msra.mxu0 0.0
      %907 = vmatprep.subr.mxu0 0.0
      %908 = vmatpush2.msra.mxu0 0.0
      %909 = vmatprep.subr.mxu0 0.0
      %910 = vmatpush2.msra.mxu0 0.0
      %911 = vmatprep.subr.mxu0 0.0
      %912 = vmatpush2.msra.mxu0 0.0
      %913 = vmatprep.subr.mxu0 0.0
      %914 = vmatpush2.msra.mxu0 0.0
      %915 = vmatprep.subr.mxu0 0.0
      %916 = vmatpush2.msra.mxu0 0.0
      %917 = vmatprep.subr.mxu0 0.0
      %918 = vmatpush2.msra.mxu0 0.0
      %919 = vmatprep.subr.mxu0 0.0
      %920 = vmatpush2.msra.mxu0 0.0
      %921 = vmatprep.subr.mxu0 0.0
      %922 = vmatpush2.msra.mxu0 0.0
      %923 = vmatprep.subr.mxu0 0.0
      %924 = vmatpush2.msra.mxu0 0.0
      %925 = vmatprep.mubr.f32.mxu0 0.0
      %926 = vmatmul.mubr.f32.gmra.mxu0 %v836
      %v927 = vpop.f32.mrf.mxu0
      %v928 = vadd.f32 0.0, %v927
      %v929 = vpop.f32.mrf.mxu0
      %930 = vmatprep.mubr.f32.mxu0 0.0
      %931 = vmatmul.mubr.f32.gmra.mxu0 %v837
      %v932 = vpop.f32.mrf.mxu0
      %v933 = vadd.f32 0.0, %v932
      %v934 = vpop.f32.mrf.mxu0
      %935 = vmatprep.mubr.f32.mxu0 0.0
      %936 = vmatmul.mubr.f32.gmra.mxu0 %v838
      %v937 = vpop.f32.mrf.mxu0
      %v938 = vadd.f32 0.0, %v937
      %v939 = vpop.f32.mrf.mxu0
      %940 = vmatprep.mubr.f32.mxu0 0.0
      %941 = vmatmul.mubr.f32.gmra.mxu0 %v839
      %v942 = vpop.f32.mrf.mxu0
      %v943 = vadd.f32 0.0, %v942
      %v944 = vpop.f32.mrf.mxu0
      %945 = vmatprep.mubr.f32.mxu0 0.0
      %946 = vmatmul.mubr.f32.gmra.mxu0 %v840
      %v947 = vpop.f32.mrf.mxu0
      %v948 = vadd.f32 0.0, %v947
      %v949 = vpop.f32.mrf.mxu0
      %950 = vmatprep.mubr.f32.mxu0 0.0
      %951 = vmatmul.mubr.f32.gmra.mxu0 %v841
      %v952 = vpop.f32.mrf.mxu0
      %v953 = vadd.f32 0.0, %v952
      %v954 = vpop.f32.mrf.mxu0
      %955 = vmatprep.mubr.f32.mxu0 0.0
      %956 = vmatmul.mubr.f32.gmra.mxu0 %v842
      %v957 = vpop.f32.mrf.mxu0
      %v958 = vadd.f32 0.0, %v957
      %v959 = vpop.f32.mrf.mxu0
      %960 = vmatprep.mubr.f32.mxu0 0.0
      %961 = vmatmul.mubr.f32.gmra.mxu0 %v843
      %v962 = vpop.f32.mrf.mxu0
      %v963 = vadd.f32 0.0, %v962
      %v964 = vpop.f32.mrf.mxu0
      %965 = vdwg.mxu0
      %966 = vmatprep.subr.mxu0 0.0
      %967 = vmatpush1.msra.mxu0 %v834
      %968 = vmatprep.subr.mxu0 0.0
      %969 = vmatpush1.msra.mxu0 %v833
      %970 = vmatprep.subr.mxu0 0.0
      %971 = vmatpush1.msra.mxu0 %v832
      %972 = vmatprep.subr.mxu0 0.0
      %973 = vmatpush1.msra.mxu0 %v831
      %974 = vmatprep.subr.mxu0 0.0
      %975 = vmatpush1.msra.mxu0 %v830
      %976 = vmatprep.subr.mxu0 0.0
      %977 = vmatpush1.msra.mxu0 %v829
      %978 = vmatprep.subr.mxu0 0.0
      %979 = vmatpush1.msra.mxu0 %v828
      %980 = vmatprep.subr.mxu0 0.0
      %981 = vmatpush1.msra.mxu0 %v827
      %982 = vmatprep.subr.mxu0 0.0
      %983 = vmatpush1.msra.mxu0 %v826
      %984 = vmatprep.subr.mxu0 0.0
      %985 = vmatpush1.msra.mxu0 %v825
      %986 = vmatprep.subr.mxu0 0.0
      %987 = vmatpush1.msra.mxu0 %v824
      %988 = vmatprep.subr.mxu0 0.0
      %989 = vmatpush1.msra.mxu0 %v823
      %990 = vmatprep.subr.mxu0 0.0
      %991 = vmatpush1.msra.mxu0 %v822
      %992 = vmatprep.subr.mxu0 0.0
      %993 = vmatpush1.msra.mxu0 %v821
      %994 = vmatprep.subr.mxu0 0.0
      %995 = vmatpush1.msra.mxu0 %v820
      %996 = vmatprep.subr.mxu0 0.0
      %997 = vmatpush1.msra.mxu0 %v819
      %998 = vmatprep.subr.mxu0 0.0
      %999 = vmatpush2.msra.mxu0 0.0
      %1000 = vmatprep.subr.mxu0 0.0
      %1001 = vmatpush2.msra.mxu0 0.0
      %1002 = vmatprep.subr.mxu0 0.0
      %1003 = vmatpush2.msra.mxu0 0.0
      %1004 = vmatprep.subr.mxu0 0.0
      %1005 = vmatpush2.msra.mxu0 0.0
      %1006 = vmatprep.subr.mxu0 0.0
      %1007 = vmatpush2.msra.mxu0 0.0
      %1008 = vmatprep.subr.mxu0 0.0
      %1009 = vmatpush2.msra.mxu0 0.0
      %1010 = vmatprep.subr.mxu0 0.0
      %1011 = vmatpush2.msra.mxu0 0.0
      %1012 = vmatprep.subr.mxu0 0.0
      %1013 = vmatpush2.msra.mxu0 0.0
      %1014 = vmatprep.subr.mxu0 0.0
      %1015 = vmatpush2.msra.mxu0 0.0
      %1016 = vmatprep.subr.mxu0 0.0
      %1017 = vmatpush2.msra.mxu0 0.0
      %1018 = vmatprep.subr.mxu0 0.0
      %1019 = vmatpush2.msra.mxu0 0.0
      %1020 = vmatprep.subr.mxu0 0.0
      %1021 = vmatpush2.msra.mxu0 0.0
      %1022 = vmatprep.subr.mxu0 0.0
      %1023 = vmatpush2.msra.mxu0 0.0
      %1024 = vmatprep.subr.mxu0 0.0
      %1025 = vmatpush2.msra.mxu0 0.0
      %1026 = vmatprep.subr.mxu0 0.0
      %1027 = vmatpush2.msra.mxu0 0.0
      %1028 = vmatprep.subr.mxu0 0.0
      %1029 = vmatpush2.msra.mxu0 0.0
      %1030 = vmatprep.mubr.f32.mxu0 0.0
      %1031 = vmatmul.mubr.f32.gmra.mxu0 %v811
      %v1032 = vpop.f32.mrf.mxu0
      %v1033 = vadd.f32 %v928, %v1032
      %v1034 = vpop.f32.mrf.mxu0
      %1035 = vmatprep.mubr.f32.mxu0 0.0
      %1036 = vmatmul.mubr.f32.gmra.mxu0 %v812
      %v1037 = vpop.f32.mrf.mxu0
      %v1038 = vadd.f32 %v933, %v1037
      %v1039 = vpop.f32.mrf.mxu0
      %1040 = vmatprep.mubr.f32.mxu0 0.0
      %1041 = vmatmul.mubr.f32.gmra.mxu0 %v813
      %v1042 = vpop.f32.mrf.mxu0
      %v1043 = vadd.f32 %v938, %v1042
      %v1044 = vpop.f32.mrf.mxu0
      %1045 = vmatprep.mubr.f32.mxu0 0.0
      %1046 = vmatmul.mubr.f32.gmra.mxu0 %v814
      %v1047 = vpop.f32.mrf.mxu0
      %v1048 = vadd.f32 %v943, %v1047
      %v1049 = vpop.f32.mrf.mxu0
      %1050 = vmatprep.mubr.f32.mxu0 0.0
      %1051 = vmatmul.mubr.f32.gmra.mxu0 %v815
      %v1052 = vpop.f32.mrf.mxu0
      %v1053 = vadd.f32 %v948, %v1052
      %v1054 = vpop.f32.mrf.mxu0
      %1055 = vmatprep.mubr.f32.mxu0 0.0
      %1056 = vmatmul.mubr.f32.gmra.mxu0 %v816
      %v1057 = vpop.f32.mrf.mxu0
      %v1058 = vadd.f32 %v953, %v1057
      %v1059 = vpop.f32.mrf.mxu0
      %1060 = vmatprep.mubr.f32.mxu0 0.0
      %1061 = vmatmul.mubr.f32.gmra.mxu0 %v817
      %v1062 = vpop.f32.mrf.mxu0
      %v1063 = vadd.f32 %v958, %v1062
      %v1064 = vpop.f32.mrf.mxu0
      %1065 = vmatprep.mubr.f32.mxu0 0.0
      %1066 = vmatmul.mubr.f32.gmra.mxu0 %v818
      %v1067 = vpop.f32.mrf.mxu0
      %v1068 = vadd.f32 %v963, %v1067
      %v1069 = vpop.f32.mrf.mxu0
      %1070 = vdwg.mxu0
      %v1071 = vld [vmem:[#allocation2 + $0x1] sm:$0xff]
      %v1072 = vld [vmem:[#allocation2 + $0x11] sm:$0xff]
      %v1073 = vld [vmem:[#allocation2 + $0x21] sm:$0xff]
      %v1074 = vld [vmem:[#allocation2 + $0x31] sm:$0xff]
      %v1075 = vld [vmem:[#allocation2 + $0x41] sm:$0xff]
      %v1076 = vld [vmem:[#allocation2 + $0x51] sm:$0xff]
      %v1077 = vld [vmem:[#allocation2 + $0x61] sm:$0xff]
      %v1078 = vld [vmem:[#allocation2 + $0x71] sm:$0xff]
      %s1079 = scalar_lea.vmem %s5, 256
      %v1080 = vld [vmem:[%s1079] sm:$0xff]
      %v1081 = vld [vmem:[%s1079 + $0x8] sm:$0xff]
      %v1082 = vld [vmem:[%s1079 + $0x10] sm:$0xff]
      %v1083 = vld [vmem:[%s1079 + $0x18] sm:$0xff]
      %v1084 = vld [vmem:[%s1079 + $0x20] sm:$0xff]
      %v1085 = vld [vmem:[%s1079 + $0x28] sm:$0xff]
      %v1086 = vld [vmem:[%s1079 + $0x30] sm:$0xff]
      %v1087 = vld [vmem:[%s1079 + $0x38] sm:$0xff]
      %v1088 = vld [vmem:[%s1079 + $0x40] sm:$0xff]
      %v1089 = vld [vmem:[%s1079 + $0x48] sm:$0xff]
      %v1090 = vld [vmem:[%s1079 + $0x50] sm:$0xff]
      %v1091 = vld [vmem:[%s1079 + $0x58] sm:$0xff]
      %v1092 = vld [vmem:[%s1079 + $0x60] sm:$0xff]
      %v1093 = vld [vmem:[%s1079 + $0x68] sm:$0xff]
      %v1094 = vld [vmem:[%s1079 + $0x70] sm:$0xff]
      %v1095 = vld [vmem:[%s1079 + $0x78] sm:$0xff]
      %1096 = vmatprep.subr.mxu0 0.0
      %1097 = vmatpush1.msra.mxu0 %v1095
      %1098 = vmatprep.subr.mxu0 0.0
      %1099 = vmatpush1.msra.mxu0 %v1094
      %1100 = vmatprep.subr.mxu0 0.0
      %1101 = vmatpush1.msra.mxu0 %v1093
      %1102 = vmatprep.subr.mxu0 0.0
      %1103 = vmatpush1.msra.mxu0 %v1092
      %1104 = vmatprep.subr.mxu0 0.0
      %1105 = vmatpush1.msra.mxu0 %v1091
      %1106 = vmatprep.subr.mxu0 0.0
      %1107 = vmatpush1.msra.mxu0 %v1090
      %1108 = vmatprep.subr.mxu0 0.0
      %1109 = vmatpush1.msra.mxu0 %v1089
      %1110 = vmatprep.subr.mxu0 0.0
      %1111 = vmatpush1.msra.mxu0 %v1088
      %1112 = vmatprep.subr.mxu0 0.0
      %1113 = vmatpush1.msra.mxu0 %v1087
      %1114 = vmatprep.subr.mxu0 0.0
      %1115 = vmatpush1.msra.mxu0 %v1086
      %1116 = vmatprep.subr.mxu0 0.0
      %1117 = vmatpush1.msra.mxu0 %v1085
      %1118 = vmatprep.subr.mxu0 0.0
      %1119 = vmatpush1.msra.mxu0 %v1084
      %1120 = vmatprep.subr.mxu0 0.0
      %1121 = vmatpush1.msra.mxu0 %v1083
      %1122 = vmatprep.subr.mxu0 0.0
      %1123 = vmatpush1.msra.mxu0 %v1082
      %1124 = vmatprep.subr.mxu0 0.0
      %1125 = vmatpush1.msra.mxu0 %v1081
      %1126 = vmatprep.subr.mxu0 0.0
      %1127 = vmatpush1.msra.mxu0 %v1080
      %1128 = vmatprep.subr.mxu0 0.0
      %1129 = vmatpush2.msra.mxu0 0.0
      %1130 = vmatprep.subr.mxu0 0.0
      %1131 = vmatpush2.msra.mxu0 0.0
      %1132 = vmatprep.subr.mxu0 0.0
      %1133 = vmatpush2.msra.mxu0 0.0
      %1134 = vmatprep.subr.mxu0 0.0
      %1135 = vmatpush2.msra.mxu0 0.0
      %1136 = vmatprep.subr.mxu0 0.0
      %1137 = vmatpush2.msra.mxu0 0.0
      %1138 = vmatprep.subr.mxu0 0.0
      %1139 = vmatpush2.msra.mxu0 0.0
      %1140 = vmatprep.subr.mxu0 0.0
      %1141 = vmatpush2.msra.mxu0 0.0
      %1142 = vmatprep.subr.mxu0 0.0
      %1143 = vmatpush2.msra.mxu0 0.0
      %1144 = vmatprep.subr.mxu0 0.0
      %1145 = vmatpush2.msra.mxu0 0.0
      %1146 = vmatprep.subr.mxu0 0.0
      %1147 = vmatpush2.msra.mxu0 0.0
      %1148 = vmatprep.subr.mxu0 0.0
      %1149 = vmatpush2.msra.mxu0 0.0
      %1150 = vmatprep.subr.mxu0 0.0
      %1151 = vmatpush2.msra.mxu0 0.0
      %1152 = vmatprep.subr.mxu0 0.0
      %1153 = vmatpush2.msra.mxu0 0.0
      %1154 = vmatprep.subr.mxu0 0.0
      %1155 = vmatpush2.msra.mxu0 0.0
      %1156 = vmatprep.subr.mxu0 0.0
      %1157 = vmatpush2.msra.mxu0 0.0
      %1158 = vmatprep.subr.mxu0 0.0
      %1159 = vmatpush2.msra.mxu0 0.0
      %1160 = vmatprep.mubr.f32.mxu0 0.0
      %1161 = vmatmul.mubr.f32.gmra.mxu0 %v1071
      %v1162 = vpop.f32.mrf.mxu0
      %v1163 = vadd.f32 0.0, %v1162
      %v1164 = vpop.f32.mrf.mxu0
      %1165 = vmatprep.mubr.f32.mxu0 0.0
      %1166 = vmatmul.mubr.f32.gmra.mxu0 %v1072
      %v1167 = vpop.f32.mrf.mxu0
      %v1168 = vadd.f32 0.0, %v1167
      %v1169 = vpop.f32.mrf.mxu0
      %1170 = vmatprep.mubr.f32.mxu0 0.0
      %1171 = vmatmul.mubr.f32.gmra.mxu0 %v1073
      %v1172 = vpop.f32.mrf.mxu0
      %v1173 = vadd.f32 0.0, %v1172
      %v1174 = vpop.f32.mrf.mxu0
      %1175 = vmatprep.mubr.f32.mxu0 0.0
      %1176 = vmatmul.mubr.f32.gmra.mxu0 %v1074
      %v1177 = vpop.f32.mrf.mxu0
      %v1178 = vadd.f32 0.0, %v1177
      %v1179 = vpop.f32.mrf.mxu0
      %1180 = vmatprep.mubr.f32.mxu0 0.0
      %1181 = vmatmul.mubr.f32.gmra.mxu0 %v1075
      %v1182 = vpop.f32.mrf.mxu0
      %v1183 = vadd.f32 0.0, %v1182
      %v1184 = vpop.f32.mrf.mxu0
      %1185 = vmatprep.mubr.f32.mxu0 0.0
      %1186 = vmatmul.mubr.f32.gmra.mxu0 %v1076
      %v1187 = vpop.f32.mrf.mxu0
      %v1188 = vadd.f32 0.0, %v1187
      %v1189 = vpop.f32.mrf.mxu0
      %1190 = vmatprep.mubr.f32.mxu0 0.0
      %1191 = vmatmul.mubr.f32.gmra.mxu0 %v1077
      %v1192 = vpop.f32.mrf.mxu0
      %v1193 = vadd.f32 0.0, %v1192
      %v1194 = vpop.f32.mrf.mxu0
      %1195 = vmatprep.mubr.f32.mxu0 0.0
      %1196 = vmatmul.mubr.f32.gmra.mxu0 %v1078
      %v1197 = vpop.f32.mrf.mxu0
      %v1198 = vadd.f32 0.0, %v1197
      %v1199 = vpop.f32.mrf.mxu0
      %1200 = vdwg.mxu0
      %v1201 = vadd.f32 %v1033, %v1163
      %v1202 = vadd.f32 %v1038, %v1168
      %v1203 = vadd.f32 %v1043, %v1173
      %v1204 = vadd.f32 %v1048, %v1178
      %v1205 = vadd.f32 %v1053, %v1183
      %v1206 = vadd.f32 %v1058, %v1188
      %v1207 = vadd.f32 %v1063, %v1193
      %v1208 = vadd.f32 %v1068, %v1198
      %v1209 = vld [vmem:[%s784] sm:$0xff]
      %v1210 = vld [vmem:[%s784 + $0x10] sm:$0xff]
      %v1211 = vld [vmem:[%s784 + $0x20] sm:$0xff]
      %v1212 = vld [vmem:[%s784 + $0x30] sm:$0xff]
      %v1213 = vld [vmem:[%s784 + $0x40] sm:$0xff]
      %v1214 = vld [vmem:[%s784 + $0x50] sm:$0xff]
      %v1215 = vld [vmem:[%s784 + $0x60] sm:$0xff]
      %v1216 = vld [vmem:[%s784 + $0x70] sm:$0xff]
      %s1217 = scalar_lea.vmem %s5, 384
      %v1218 = vld [vmem:[%s1217] sm:$0xff]
      %v1219 = vld [vmem:[%s1217 + $0x8] sm:$0xff]
      %v1220 = vld [vmem:[%s1217 + $0x10] sm:$0xff]
      %v1221 = vld [vmem:[%s1217 + $0x18] sm:$0xff]
      %v1222 = vld [vmem:[%s1217 + $0x20] sm:$0xff]
      %v1223 = vld [vmem:[%s1217 + $0x28] sm:$0xff]
      %v1224 = vld [vmem:[%s1217 + $0x30] sm:$0xff]
      %v1225 = vld [vmem:[%s1217 + $0x38] sm:$0xff]
      %v1226 = vld [vmem:[%s1217 + $0x40] sm:$0xff]
      %v1227 = vld [vmem:[%s1217 + $0x48] sm:$0xff]
      %v1228 = vld [vmem:[%s1217 + $0x50] sm:$0xff]
      %v1229 = vld [vmem:[%s1217 + $0x58] sm:$0xff]
      %v1230 = vld [vmem:[%s1217 + $0x60] sm:$0xff]
      %v1231 = vld [vmem:[%s1217 + $0x68] sm:$0xff]
      %v1232 = vld [vmem:[%s1217 + $0x70] sm:$0xff]
      %v1233 = vld [vmem:[%s1217 + $0x78] sm:$0xff]
      %1234 = vmatprep.subr.mxu0 0.0
      %1235 = vmatpush1.msra.mxu0 %v1233
      %1236 = vmatprep.subr.mxu0 0.0
      %1237 = vmatpush1.msra.mxu0 %v1232
      %1238 = vmatprep.subr.mxu0 0.0
      %1239 = vmatpush1.msra.mxu0 %v1231
      %1240 = vmatprep.subr.mxu0 0.0
      %1241 = vmatpush1.msra.mxu0 %v1230
      %1242 = vmatprep.subr.mxu0 0.0
      %1243 = vmatpush1.msra.mxu0 %v1229
      %1244 = vmatprep.subr.mxu0 0.0
      %1245 = vmatpush1.msra.mxu0 %v1228
      %1246 = vmatprep.subr.mxu0 0.0
      %1247 = vmatpush1.msra.mxu0 %v1227
      %1248 = vmatprep.subr.mxu0 0.0
      %1249 = vmatpush1.msra.mxu0 %v1226
      %1250 = vmatprep.subr.mxu0 0.0
      %1251 = vmatpush1.msra.mxu0 %v1225
      %1252 = vmatprep.subr.mxu0 0.0
      %1253 = vmatpush1.msra.mxu0 %v1224
      %1254 = vmatprep.subr.mxu0 0.0
      %1255 = vmatpush1.msra.mxu0 %v1223
      %1256 = vmatprep.subr.mxu0 0.0
      %1257 = vmatpush1.msra.mxu0 %v1222
      %1258 = vmatprep.subr.mxu0 0.0
      %1259 = vmatpush1.msra.mxu0 %v1221
      %1260 = vmatprep.subr.mxu0 0.0
      %1261 = vmatpush1.msra.mxu0 %v1220
      %1262 = vmatprep.subr.mxu0 0.0
      %1263 = vmatpush1.msra.mxu0 %v1219
      %1264 = vmatprep.subr.mxu0 0.0
      %1265 = vmatpush1.msra.mxu0 %v1218
      %1266 = vmatprep.subr.mxu0 0.0
      %1267 = vmatpush2.msra.mxu0 0.0
      %1268 = vmatprep.subr.mxu0 0.0
      %1269 = vmatpush2.msra.mxu0 0.0
      %1270 = vmatprep.subr.mxu0 0.0
      %1271 = vmatpush2.msra.mxu0 0.0
      %1272 = vmatprep.subr.mxu0 0.0
      %1273 = vmatpush2.msra.mxu0 0.0
      %1274 = vmatprep.subr.mxu0 0.0
      %1275 = vmatpush2.msra.mxu0 0.0
      %1276 = vmatprep.subr.mxu0 0.0
      %1277 = vmatpush2.msra.mxu0 0.0
      %1278 = vmatprep.subr.mxu0 0.0
      %1279 = vmatpush2.msra.mxu0 0.0
      %1280 = vmatprep.subr.mxu0 0.0
      %1281 = vmatpush2.msra.mxu0 0.0
      %1282 = vmatprep.subr.mxu0 0.0
      %1283 = vmatpush2.msra.mxu0 0.0
      %1284 = vmatprep.subr.mxu0 0.0
      %1285 = vmatpush2.msra.mxu0 0.0
      %1286 = vmatprep.subr.mxu0 0.0
      %1287 = vmatpush2.msra.mxu0 0.0
      %1288 = vmatprep.subr.mxu0 0.0
      %1289 = vmatpush2.msra.mxu0 0.0
      %1290 = vmatprep.subr.mxu0 0.0
      %1291 = vmatpush2.msra.mxu0 0.0
      %1292 = vmatprep.subr.mxu0 0.0
      %1293 = vmatpush2.msra.mxu0 0.0
      %1294 = vmatprep.subr.mxu0 0.0
      %1295 = vmatpush2.msra.mxu0 0.0
      %1296 = vmatprep.subr.mxu0 0.0
      %1297 = vmatpush2.msra.mxu0 0.0
      %1298 = vmatprep.mubr.f32.mxu0 0.0
      %1299 = vmatmul.mubr.f32.gmra.mxu0 %v1209
      %v1300 = vpop.f32.mrf.mxu0
      %v1301 = vadd.f32 0.0, %v1300
      %v1302 = vpop.f32.mrf.mxu0
      %1303 = vmatprep.mubr.f32.mxu0 0.0
      %1304 = vmatmul.mubr.f32.gmra.mxu0 %v1210
      %v1305 = vpop.f32.mrf.mxu0
      %v1306 = vadd.f32 0.0, %v1305
      %v1307 = vpop.f32.mrf.mxu0
      %1308 = vmatprep.mubr.f32.mxu0 0.0
      %1309 = vmatmul.mubr.f32.gmra.mxu0 %v1211
      %v1310 = vpop.f32.mrf.mxu0
      %v1311 = vadd.f32 0.0, %v1310
      %v1312 = vpop.f32.mrf.mxu0
      %1313 = vmatprep.mubr.f32.mxu0 0.0
      %1314 = vmatmul.mubr.f32.gmra.mxu0 %v1212
      %v1315 = vpop.f32.mrf.mxu0
      %v1316 = vadd.f32 0.0, %v1315
      %v1317 = vpop.f32.mrf.mxu0
      %1318 = vmatprep.mubr.f32.mxu0 0.0
      %1319 = vmatmul.mubr.f32.gmra.mxu0 %v1213
      %v1320 = vpop.f32.mrf.mxu0
      %v1321 = vadd.f32 0.0, %v1320
      %v1322 = vpop.f32.mrf.mxu0
      %1323 = vmatprep.mubr.f32.mxu0 0.0
      %1324 = vmatmul.mubr.f32.gmra.mxu0 %v1214
      %v1325 = vpop.f32.mrf.mxu0
      %v1326 = vadd.f32 0.0, %v1325
      %v1327 = vpop.f32.mrf.mxu0
      %1328 = vmatprep.mubr.f32.mxu0 0.0
      %1329 = vmatmul.mubr.f32.gmra.mxu0 %v1215
      %v1330 = vpop.f32.mrf.mxu0
      %v1331 = vadd.f32 0.0, %v1330
      %v1332 = vpop.f32.mrf.mxu0
      %1333 = vmatprep.mubr.f32.mxu0 0.0
      %1334 = vmatmul.mubr.f32.gmra.mxu0 %v1216
      %v1335 = vpop.f32.mrf.mxu0
      %v1336 = vadd.f32 0.0, %v1335
      %v1337 = vpop.f32.mrf.mxu0
      %1338 = vdwg.mxu0
      %v1339 = vadd.f32 %v1201, %v1301
      %v1340 = vadd.f32 %v1202, %v1306
      %v1341 = vadd.f32 %v1203, %v1311
      %v1342 = vadd.f32 %v1204, %v1316
      %v1343 = vadd.f32 %v1205, %v1321
      %v1344 = vadd.f32 %v1206, %v1326
      %v1345 = vadd.f32 %v1207, %v1331
      %v1346 = vadd.f32 %v1208, %v1336
      %v1347 = vld [vmem:[%s775] sm:$0xff]
      %v1348 = vld [vmem:[%s775 + $0x10] sm:$0xff]
      %v1349 = vld [vmem:[%s775 + $0x20] sm:$0xff]
      %v1350 = vld [vmem:[%s775 + $0x30] sm:$0xff]
      %v1351 = vld [vmem:[%s775 + $0x40] sm:$0xff]
      %v1352 = vld [vmem:[%s775 + $0x50] sm:$0xff]
      %v1353 = vld [vmem:[%s775 + $0x60] sm:$0xff]
      %v1354 = vld [vmem:[%s775 + $0x70] sm:$0xff]
      %s1355 = scalar_lea.vmem %s5, 512
      %v1356 = vld [vmem:[%s1355] sm:$0xff]
      %v1357 = vld [vmem:[%s1355 + $0x8] sm:$0xff]
      %v1358 = vld [vmem:[%s1355 + $0x10] sm:$0xff]
      %v1359 = vld [vmem:[%s1355 + $0x18] sm:$0xff]
      %v1360 = vld [vmem:[%s1355 + $0x20] sm:$0xff]
      %v1361 = vld [vmem:[%s1355 + $0x28] sm:$0xff]
      %v1362 = vld [vmem:[%s1355 + $0x30] sm:$0xff]
      %v1363 = vld [vmem:[%s1355 + $0x38] sm:$0xff]
      %v1364 = vld [vmem:[%s1355 + $0x40] sm:$0xff]
      %v1365 = vld [vmem:[%s1355 + $0x48] sm:$0xff]
      %v1366 = vld [vmem:[%s1355 + $0x50] sm:$0xff]
      %v1367 = vld [vmem:[%s1355 + $0x58] sm:$0xff]
      %v1368 = vld [vmem:[%s1355 + $0x60] sm:$0xff]
      %v1369 = vld [vmem:[%s1355 + $0x68] sm:$0xff]
      %v1370 = vld [vmem:[%s1355 + $0x70] sm:$0xff]
      %v1371 = vld [vmem:[%s1355 + $0x78] sm:$0xff]
      %1372 = vmatprep.subr.mxu0 0.0
      %1373 = vmatpush1.msra.mxu0 %v1371
      %1374 = vmatprep.subr.mxu0 0.0
      %1375 = vmatpush1.msra.mxu0 %v1370
      %1376 = vmatprep.subr.mxu0 0.0
      %1377 = vmatpush1.msra.mxu0 %v1369
      %1378 = vmatprep.subr.mxu0 0.0
      %1379 = vmatpush1.msra.mxu0 %v1368
      %1380 = vmatprep.subr.mxu0 0.0
      %1381 = vmatpush1.msra.mxu0 %v1367
      %1382 = vmatprep.subr.mxu0 0.0
      %1383 = vmatpush1.msra.mxu0 %v1366
      %1384 = vmatprep.subr.mxu0 0.0
      %1385 = vmatpush1.msra.mxu0 %v1365
      %1386 = vmatprep.subr.mxu0 0.0
      %1387 = vmatpush1.msra.mxu0 %v1364
      %1388 = vmatprep.subr.mxu0 0.0
      %1389 = vmatpush1.msra.mxu0 %v1363
      %1390 = vmatprep.subr.mxu0 0.0
      %1391 = vmatpush1.msra.mxu0 %v1362
      %1392 = vmatprep.subr.mxu0 0.0
      %1393 = vmatpush1.msra.mxu0 %v1361
      %1394 = vmatprep.subr.mxu0 0.0
      %1395 = vmatpush1.msra.mxu0 %v1360
      %1396 = vmatprep.subr.mxu0 0.0
      %1397 = vmatpush1.msra.mxu0 %v1359
      %1398 = vmatprep.subr.mxu0 0.0
      %1399 = vmatpush1.msra.mxu0 %v1358
      %1400 = vmatprep.subr.mxu0 0.0
      %1401 = vmatpush1.msra.mxu0 %v1357
      %1402 = vmatprep.subr.mxu0 0.0
      %1403 = vmatpush1.msra.mxu0 %v1356
      %1404 = vmatprep.subr.mxu0 0.0
      %1405 = vmatpush2.msra.mxu0 0.0
      %1406 = vmatprep.subr.mxu0 0.0
      %1407 = vmatpush2.msra.mxu0 0.0
      %1408 = vmatprep.subr.mxu0 0.0
      %1409 = vmatpush2.msra.mxu0 0.0
      %1410 = vmatprep.subr.mxu0 0.0
      %1411 = vmatpush2.msra.mxu0 0.0
      %1412 = vmatprep.subr.mxu0 0.0
      %1413 = vmatpush2.msra.mxu0 0.0
      %1414 = vmatprep.subr.mxu0 0.0
      %1415 = vmatpush2.msra.mxu0 0.0
      %1416 = vmatprep.subr.mxu0 0.0
      %1417 = vmatpush2.msra.mxu0 0.0
      %1418 = vmatprep.subr.mxu0 0.0
      %1419 = vmatpush2.msra.mxu0 0.0
      %1420 = vmatprep.subr.mxu0 0.0
      %1421 = vmatpush2.msra.mxu0 0.0
      %1422 = vmatprep.subr.mxu0 0.0
      %1423 = vmatpush2.msra.mxu0 0.0
      %1424 = vmatprep.subr.mxu0 0.0
      %1425 = vmatpush2.msra.mxu0 0.0
      %1426 = vmatprep.subr.mxu0 0.0
      %1427 = vmatpush2.msra.mxu0 0.0
      %1428 = vmatprep.subr.mxu0 0.0
      %1429 = vmatpush2.msra.mxu0 0.0
      %1430 = vmatprep.subr.mxu0 0.0
      %1431 = vmatpush2.msra.mxu0 0.0
      %1432 = vmatprep.subr.mxu0 0.0
      %1433 = vmatpush2.msra.mxu0 0.0
      %1434 = vmatprep.subr.mxu0 0.0
      %1435 = vmatpush2.msra.mxu0 0.0
      %1436 = vmatprep.mubr.f32.mxu0 0.0
      %1437 = vmatmul.mubr.f32.gmra.mxu0 %v1347
      %v1438 = vpop.f32.mrf.mxu0
      %v1439 = vadd.f32 0.0, %v1438
      %v1440 = vpop.f32.mrf.mxu0
      %1441 = vmatprep.mubr.f32.mxu0 0.0
      %1442 = vmatmul.mubr.f32.gmra.mxu0 %v1348
      %v1443 = vpop.f32.mrf.mxu0
      %v1444 = vadd.f32 0.0, %v1443
      %v1445 = vpop.f32.mrf.mxu0
      %1446 = vmatprep.mubr.f32.mxu0 0.0
      %1447 = vmatmul.mubr.f32.gmra.mxu0 %v1349
      %v1448 = vpop.f32.mrf.mxu0
      %v1449 = vadd.f32 0.0, %v1448
      %v1450 = vpop.f32.mrf.mxu0
      %1451 = vmatprep.mubr.f32.mxu0 0.0
      %1452 = vmatmul.mubr.f32.gmra.mxu0 %v1350
      %v1453 = vpop.f32.mrf.mxu0
      %v1454 = vadd.f32 0.0, %v1453
      %v1455 = vpop.f32.mrf.mxu0
      %1456 = vmatprep.mubr.f32.mxu0 0.0
      %1457 = vmatmul.mubr.f32.gmra.mxu0 %v1351
      %v1458 = vpop.f32.mrf.mxu0
      %v1459 = vadd.f32 0.0, %v1458
      %v1460 = vpop.f32.mrf.mxu0
      %1461 = vmatprep.mubr.f32.mxu0 0.0
      %1462 = vmatmul.mubr.f32.gmra.mxu0 %v1352
      %v1463 = vpop.f32.mrf.mxu0
      %v1464 = vadd.f32 0.0, %v1463
      %v1465 = vpop.f32.mrf.mxu0
      %1466 = vmatprep.mubr.f32.mxu0 0.0
      %1467 = vmatmul.mubr.f32.gmra.mxu0 %v1353
      %v1468 = vpop.f32.mrf.mxu0
      %v1469 = vadd.f32 0.0, %v1468
      %v1470 = vpop.f32.mrf.mxu0
      %1471 = vmatprep.mubr.f32.mxu0 0.0
      %1472 = vmatmul.mubr.f32.gmra.mxu0 %v1354
      %v1473 = vpop.f32.mrf.mxu0
      %v1474 = vadd.f32 0.0, %v1473
      %v1475 = vpop.f32.mrf.mxu0
      %1476 = vdwg.mxu0
      %v1477 = vadd.f32 %v1339, %v1439
      %v1478 = vadd.f32 %v1340, %v1444
      %v1479 = vadd.f32 %v1341, %v1449
      %v1480 = vadd.f32 %v1342, %v1454
      %v1481 = vadd.f32 %v1343, %v1459
      %v1482 = vadd.f32 %v1344, %v1464
      %v1483 = vadd.f32 %v1345, %v1469
      %v1484 = vadd.f32 %v1346, %v1474
      %v1485 = vld [vmem:[%s784 + $0x1] sm:$0xff]
      %v1486 = vld [vmem:[%s784 + $0x11] sm:$0xff]
      %v1487 = vld [vmem:[%s784 + $0x21] sm:$0xff]
      %v1488 = vld [vmem:[%s784 + $0x31] sm:$0xff]
      %v1489 = vld [vmem:[%s784 + $0x41] sm:$0xff]
      %v1490 = vld [vmem:[%s784 + $0x51] sm:$0xff]
      %v1491 = vld [vmem:[%s784 + $0x61] sm:$0xff]
      %v1492 = vld [vmem:[%s784 + $0x71] sm:$0xff]
      %s1493 = scalar_lea.vmem %s5, 640
      %v1494 = vld [vmem:[%s1493] sm:$0xff]
      %v1495 = vld [vmem:[%s1493 + $0x8] sm:$0xff]
      %v1496 = vld [vmem:[%s1493 + $0x10] sm:$0xff]
      %v1497 = vld [vmem:[%s1493 + $0x18] sm:$0xff]
      %v1498 = vld [vmem:[%s1493 + $0x20] sm:$0xff]
      %v1499 = vld [vmem:[%s1493 + $0x28] sm:$0xff]
      %v1500 = vld [vmem:[%s1493 + $0x30] sm:$0xff]
      %v1501 = vld [vmem:[%s1493 + $0x38] sm:$0xff]
      %v1502 = vld [vmem:[%s1493 + $0x40] sm:$0xff]
      %v1503 = vld [vmem:[%s1493 + $0x48] sm:$0xff]
      %v1504 = vld [vmem:[%s1493 + $0x50] sm:$0xff]
      %v1505 = vld [vmem:[%s1493 + $0x58] sm:$0xff]
      %v1506 = vld [vmem:[%s1493 + $0x60] sm:$0xff]
      %v1507 = vld [vmem:[%s1493 + $0x68] sm:$0xff]
      %v1508 = vld [vmem:[%s1493 + $0x70] sm:$0xff]
      %v1509 = vld [vmem:[%s1493 + $0x78] sm:$0xff]
      %1510 = vmatprep.subr.mxu0 0.0
      %1511 = vmatpush1.msra.mxu0 %v1509
      %1512 = vmatprep.subr.mxu0 0.0
      %1513 = vmatpush1.msra.mxu0 %v1508
      %1514 = vmatprep.subr.mxu0 0.0
      %1515 = vmatpush1.msra.mxu0 %v1507
      %1516 = vmatprep.subr.mxu0 0.0
      %1517 = vmatpush1.msra.mxu0 %v1506
      %1518 = vmatprep.subr.mxu0 0.0
      %1519 = vmatpush1.msra.mxu0 %v1505
      %1520 = vmatprep.subr.mxu0 0.0
      %1521 = vmatpush1.msra.mxu0 %v1504
      %1522 = vmatprep.subr.mxu0 0.0
      %1523 = vmatpush1.msra.mxu0 %v1503
      %1524 = vmatprep.subr.mxu0 0.0
      %1525 = vmatpush1.msra.mxu0 %v1502
      %1526 = vmatprep.subr.mxu0 0.0
      %1527 = vmatpush1.msra.mxu0 %v1501
      %1528 = vmatprep.subr.mxu0 0.0
      %1529 = vmatpush1.msra.mxu0 %v1500
      %1530 = vmatprep.subr.mxu0 0.0
      %1531 = vmatpush1.msra.mxu0 %v1499
      %1532 = vmatprep.subr.mxu0 0.0
      %1533 = vmatpush1.msra.mxu0 %v1498
      %1534 = vmatprep.subr.mxu0 0.0
      %1535 = vmatpush1.msra.mxu0 %v1497
      %1536 = vmatprep.subr.mxu0 0.0
      %1537 = vmatpush1.msra.mxu0 %v1496
      %1538 = vmatprep.subr.mxu0 0.0
      %1539 = vmatpush1.msra.mxu0 %v1495
      %1540 = vmatprep.subr.mxu0 0.0
      %1541 = vmatpush1.msra.mxu0 %v1494
      %1542 = vmatprep.subr.mxu0 0.0
      %1543 = vmatpush2.msra.mxu0 0.0
      %1544 = vmatprep.subr.mxu0 0.0
      %1545 = vmatpush2.msra.mxu0 0.0
      %1546 = vmatprep.subr.mxu0 0.0
      %1547 = vmatpush2.msra.mxu0 0.0
      %1548 = vmatprep.subr.mxu0 0.0
      %1549 = vmatpush2.msra.mxu0 0.0
      %1550 = vmatprep.subr.mxu0 0.0
      %1551 = vmatpush2.msra.mxu0 0.0
      %1552 = vmatprep.subr.mxu0 0.0
      %1553 = vmatpush2.msra.mxu0 0.0
      %1554 = vmatprep.subr.mxu0 0.0
      %1555 = vmatpush2.msra.mxu0 0.0
      %1556 = vmatprep.subr.mxu0 0.0
      %1557 = vmatpush2.msra.mxu0 0.0
      %1558 = vmatprep.subr.mxu0 0.0
      %1559 = vmatpush2.msra.mxu0 0.0
      %1560 = vmatprep.subr.mxu0 0.0
      %1561 = vmatpush2.msra.mxu0 0.0
      %1562 = vmatprep.subr.mxu0 0.0
      %1563 = vmatpush2.msra.mxu0 0.0
      %1564 = vmatprep.subr.mxu0 0.0
      %1565 = vmatpush2.msra.mxu0 0.0
      %1566 = vmatprep.subr.mxu0 0.0
      %1567 = vmatpush2.msra.mxu0 0.0
      %1568 = vmatprep.subr.mxu0 0.0
      %1569 = vmatpush2.msra.mxu0 0.0
      %1570 = vmatprep.subr.mxu0 0.0
      %1571 = vmatpush2.msra.mxu0 0.0
      %1572 = vmatprep.subr.mxu0 0.0
      %1573 = vmatpush2.msra.mxu0 0.0
      %1574 = vmatprep.mubr.f32.mxu0 0.0
      %1575 = vmatmul.mubr.f32.gmra.mxu0 %v1485
      %v1576 = vpop.f32.mrf.mxu0
      %v1577 = vadd.f32 0.0, %v1576
      %v1578 = vpop.f32.mrf.mxu0
      %1579 = vmatprep.mubr.f32.mxu0 0.0
      %1580 = vmatmul.mubr.f32.gmra.mxu0 %v1486
      %v1581 = vpop.f32.mrf.mxu0
      %v1582 = vadd.f32 0.0, %v1581
      %v1583 = vpop.f32.mrf.mxu0
      %1584 = vmatprep.mubr.f32.mxu0 0.0
      %1585 = vmatmul.mubr.f32.gmra.mxu0 %v1487
      %v1586 = vpop.f32.mrf.mxu0
      %v1587 = vadd.f32 0.0, %v1586
      %v1588 = vpop.f32.mrf.mxu0
      %1589 = vmatprep.mubr.f32.mxu0 0.0
      %1590 = vmatmul.mubr.f32.gmra.mxu0 %v1488
      %v1591 = vpop.f32.mrf.mxu0
      %v1592 = vadd.f32 0.0, %v1591
      %v1593 = vpop.f32.mrf.mxu0
      %1594 = vmatprep.mubr.f32.mxu0 0.0
      %1595 = vmatmul.mubr.f32.gmra.mxu0 %v1489
      %v1596 = vpop.f32.mrf.mxu0
      %v1597 = vadd.f32 0.0, %v1596
      %v1598 = vpop.f32.mrf.mxu0
      %1599 = vmatprep.mubr.f32.mxu0 0.0
      %1600 = vmatmul.mubr.f32.gmra.mxu0 %v1490
      %v1601 = vpop.f32.mrf.mxu0
      %v1602 = vadd.f32 0.0, %v1601
      %v1603 = vpop.f32.mrf.mxu0
      %1604 = vmatprep.mubr.f32.mxu0 0.0
      %1605 = vmatmul.mubr.f32.gmra.mxu0 %v1491
      %v1606 = vpop.f32.mrf.mxu0
      %v1607 = vadd.f32 0.0, %v1606
      %v1608 = vpop.f32.mrf.mxu0
      %1609 = vmatprep.mubr.f32.mxu0 0.0
      %1610 = vmatmul.mubr.f32.gmra.mxu0 %v1492
      %v1611 = vpop.f32.mrf.mxu0
      %v1612 = vadd.f32 0.0, %v1611
      %v1613 = vpop.f32.mrf.mxu0
      %1614 = vdwg.mxu0
      %v1615 = vadd.f32 %v1477, %v1577
      %v1616 = vadd.f32 %v1478, %v1582
      %v1617 = vadd.f32 %v1479, %v1587
      %v1618 = vadd.f32 %v1480, %v1592
      %v1619 = vadd.f32 %v1481, %v1597
      %v1620 = vadd.f32 %v1482, %v1602
      %v1621 = vadd.f32 %v1483, %v1607
      %v1622 = vadd.f32 %v1484, %v1612
      %v1623 = vld [vmem:[%s802] sm:$0xff]
      %v1624 = vld [vmem:[%s802 + $0x10] sm:$0xff]
      %v1625 = vld [vmem:[%s802 + $0x20] sm:$0xff]
      %v1626 = vld [vmem:[%s802 + $0x30] sm:$0xff]
      %v1627 = vld [vmem:[%s802 + $0x40] sm:$0xff]
      %v1628 = vld [vmem:[%s802 + $0x50] sm:$0xff]
      %v1629 = vld [vmem:[%s802 + $0x60] sm:$0xff]
      %v1630 = vld [vmem:[%s802 + $0x70] sm:$0xff]
      %s1631 = scalar_lea.vmem %s5, 768
      %v1632 = vld [vmem:[%s1631] sm:$0xff]
      %v1633 = vld [vmem:[%s1631 + $0x8] sm:$0xff]
      %v1634 = vld [vmem:[%s1631 + $0x10] sm:$0xff]
      %v1635 = vld [vmem:[%s1631 + $0x18] sm:$0xff]
      %v1636 = vld [vmem:[%s1631 + $0x20] sm:$0xff]
      %v1637 = vld [vmem:[%s1631 + $0x28] sm:$0xff]
      %v1638 = vld [vmem:[%s1631 + $0x30] sm:$0xff]
      %v1639 = vld [vmem:[%s1631 + $0x38] sm:$0xff]
      %v1640 = vld [vmem:[%s1631 + $0x40] sm:$0xff]
      %v1641 = vld [vmem:[%s1631 + $0x48] sm:$0xff]
      %v1642 = vld [vmem:[%s1631 + $0x50] sm:$0xff]
      %v1643 = vld [vmem:[%s1631 + $0x58] sm:$0xff]
      %v1644 = vld [vmem:[%s1631 + $0x60] sm:$0xff]
      %v1645 = vld [vmem:[%s1631 + $0x68] sm:$0xff]
      %v1646 = vld [vmem:[%s1631 + $0x70] sm:$0xff]
      %v1647 = vld [vmem:[%s1631 + $0x78] sm:$0xff]
      %1648 = vmatprep.subr.mxu0 0.0
      %1649 = vmatpush1.msra.mxu0 %v1647
      %1650 = vmatprep.subr.mxu0 0.0
      %1651 = vmatpush1.msra.mxu0 %v1646
      %1652 = vmatprep.subr.mxu0 0.0
      %1653 = vmatpush1.msra.mxu0 %v1645
      %1654 = vmatprep.subr.mxu0 0.0
      %1655 = vmatpush1.msra.mxu0 %v1644
      %1656 = vmatprep.subr.mxu0 0.0
      %1657 = vmatpush1.msra.mxu0 %v1643
      %1658 = vmatprep.subr.mxu0 0.0
      %1659 = vmatpush1.msra.mxu0 %v1642
      %1660 = vmatprep.subr.mxu0 0.0
      %1661 = vmatpush1.msra.mxu0 %v1641
      %1662 = vmatprep.subr.mxu0 0.0
      %1663 = vmatpush1.msra.mxu0 %v1640
      %1664 = vmatprep.subr.mxu0 0.0
      %1665 = vmatpush1.msra.mxu0 %v1639
      %1666 = vmatprep.subr.mxu0 0.0
      %1667 = vmatpush1.msra.mxu0 %v1638
      %1668 = vmatprep.subr.mxu0 0.0
      %1669 = vmatpush1.msra.mxu0 %v1637
      %1670 = vmatprep.subr.mxu0 0.0
      %1671 = vmatpush1.msra.mxu0 %v1636
      %1672 = vmatprep.subr.mxu0 0.0
      %1673 = vmatpush1.msra.mxu0 %v1635
      %1674 = vmatprep.subr.mxu0 0.0
      %1675 = vmatpush1.msra.mxu0 %v1634
      %1676 = vmatprep.subr.mxu0 0.0
      %1677 = vmatpush1.msra.mxu0 %v1633
      %1678 = vmatprep.subr.mxu0 0.0
      %1679 = vmatpush1.msra.mxu0 %v1632
      %1680 = vmatprep.subr.mxu0 0.0
      %1681 = vmatpush2.msra.mxu0 0.0
      %1682 = vmatprep.subr.mxu0 0.0
      %1683 = vmatpush2.msra.mxu0 0.0
      %1684 = vmatprep.subr.mxu0 0.0
      %1685 = vmatpush2.msra.mxu0 0.0
      %1686 = vmatprep.subr.mxu0 0.0
      %1687 = vmatpush2.msra.mxu0 0.0
      %1688 = vmatprep.subr.mxu0 0.0
      %1689 = vmatpush2.msra.mxu0 0.0
      %1690 = vmatprep.subr.mxu0 0.0
      %1691 = vmatpush2.msra.mxu0 0.0
      %1692 = vmatprep.subr.mxu0 0.0
      %1693 = vmatpush2.msra.mxu0 0.0
      %1694 = vmatprep.subr.mxu0 0.0
      %1695 = vmatpush2.msra.mxu0 0.0
      %1696 = vmatprep.subr.mxu0 0.0
      %1697 = vmatpush2.msra.mxu0 0.0
      %1698 = vmatprep.subr.mxu0 0.0
      %1699 = vmatpush2.msra.mxu0 0.0
      %1700 = vmatprep.subr.mxu0 0.0
      %1701 = vmatpush2.msra.mxu0 0.0
      %1702 = vmatprep.subr.mxu0 0.0
      %1703 = vmatpush2.msra.mxu0 0.0
      %1704 = vmatprep.subr.mxu0 0.0
      %1705 = vmatpush2.msra.mxu0 0.0
      %1706 = vmatprep.subr.mxu0 0.0
      %1707 = vmatpush2.msra.mxu0 0.0
      %1708 = vmatprep.subr.mxu0 0.0
      %1709 = vmatpush2.msra.mxu0 0.0
      %1710 = vmatprep.subr.mxu0 0.0
      %1711 = vmatpush2.msra.mxu0 0.0
      %1712 = vmatprep.mubr.f32.mxu0 0.0
      %1713 = vmatmul.mubr.f32.gmra.mxu0 %v1623
      %v1714 = vpop.f32.mrf.mxu0
      %v1715 = vadd.f32 0.0, %v1714
      %v1716 = vpop.f32.mrf.mxu0
      %1717 = vmatprep.mubr.f32.mxu0 0.0
      %1718 = vmatmul.mubr.f32.gmra.mxu0 %v1624
      %v1719 = vpop.f32.mrf.mxu0
      %v1720 = vadd.f32 0.0, %v1719
      %v1721 = vpop.f32.mrf.mxu0
      %1722 = vmatprep.mubr.f32.mxu0 0.0
      %1723 = vmatmul.mubr.f32.gmra.mxu0 %v1625
      %v1724 = vpop.f32.mrf.mxu0
      %v1725 = vadd.f32 0.0, %v1724
      %v1726 = vpop.f32.mrf.mxu0
      %1727 = vmatprep.mubr.f32.mxu0 0.0
      %1728 = vmatmul.mubr.f32.gmra.mxu0 %v1626
      %v1729 = vpop.f32.mrf.mxu0
      %v1730 = vadd.f32 0.0, %v1729
      %v1731 = vpop.f32.mrf.mxu0
      %1732 = vmatprep.mubr.f32.mxu0 0.0
      %1733 = vmatmul.mubr.f32.gmra.mxu0 %v1627
      %v1734 = vpop.f32.mrf.mxu0
      %v1735 = vadd.f32 0.0, %v1734
      %v1736 = vpop.f32.mrf.mxu0
      %1737 = vmatprep.mubr.f32.mxu0 0.0
      %1738 = vmatmul.mubr.f32.gmra.mxu0 %v1628
      %v1739 = vpop.f32.mrf.mxu0
      %v1740 = vadd.f32 0.0, %v1739
      %v1741 = vpop.f32.mrf.mxu0
      %1742 = vmatprep.mubr.f32.mxu0 0.0
      %1743 = vmatmul.mubr.f32.gmra.mxu0 %v1629
      %v1744 = vpop.f32.mrf.mxu0
      %v1745 = vadd.f32 0.0, %v1744
      %v1746 = vpop.f32.mrf.mxu0
      %1747 = vmatprep.mubr.f32.mxu0 0.0
      %1748 = vmatmul.mubr.f32.gmra.mxu0 %v1630
      %v1749 = vpop.f32.mrf.mxu0
      %v1750 = vadd.f32 0.0, %v1749
      %v1751 = vpop.f32.mrf.mxu0
      %1752 = vdwg.mxu0
      %v1753 = vadd.f32 %v1615, %v1715
      %v1754 = vadd.f32 %v1616, %v1720
      %v1755 = vadd.f32 %v1617, %v1725
      %v1756 = vadd.f32 %v1618, %v1730
      %v1757 = vadd.f32 %v1619, %v1735
      %v1758 = vadd.f32 %v1620, %v1740
      %v1759 = vadd.f32 %v1621, %v1745
      %v1760 = vadd.f32 %v1622, %v1750
      %v1761 = vld [vmem:[%s793] sm:$0xff]
      %v1762 = vld [vmem:[%s793 + $0x10] sm:$0xff]
      %v1763 = vld [vmem:[%s793 + $0x20] sm:$0xff]
      %v1764 = vld [vmem:[%s793 + $0x30] sm:$0xff]
      %v1765 = vld [vmem:[%s793 + $0x40] sm:$0xff]
      %v1766 = vld [vmem:[%s793 + $0x50] sm:$0xff]
      %v1767 = vld [vmem:[%s793 + $0x60] sm:$0xff]
      %v1768 = vld [vmem:[%s793 + $0x70] sm:$0xff]
      %s1769 = scalar_lea.vmem %s5, 896
      %v1770 = vld [vmem:[%s1769] sm:$0xff]
      %v1771 = vld [vmem:[%s1769 + $0x8] sm:$0xff]
      %v1772 = vld [vmem:[%s1769 + $0x10] sm:$0xff]
      %v1773 = vld [vmem:[%s1769 + $0x18] sm:$0xff]
      %v1774 = vld [vmem:[%s1769 + $0x20] sm:$0xff]
      %v1775 = vld [vmem:[%s1769 + $0x28] sm:$0xff]
      %v1776 = vld [vmem:[%s1769 + $0x30] sm:$0xff]
      %v1777 = vld [vmem:[%s1769 + $0x38] sm:$0xff]
      %v1778 = vld [vmem:[%s1769 + $0x40] sm:$0xff]
      %v1779 = vld [vmem:[%s1769 + $0x48] sm:$0xff]
      %v1780 = vld [vmem:[%s1769 + $0x50] sm:$0xff]
      %v1781 = vld [vmem:[%s1769 + $0x58] sm:$0xff]
      %v1782 = vld [vmem:[%s1769 + $0x60] sm:$0xff]
      %v1783 = vld [vmem:[%s1769 + $0x68] sm:$0xff]
      %v1784 = vld [vmem:[%s1769 + $0x70] sm:$0xff]
      %v1785 = vld [vmem:[%s1769 + $0x78] sm:$0xff]
      %1786 = vmatprep.subr.mxu0 0.0
      %1787 = vmatpush1.msra.mxu0 %v1785
      %1788 = vmatprep.subr.mxu0 0.0
      %1789 = vmatpush1.msra.mxu0 %v1784
      %1790 = vmatprep.subr.mxu0 0.0
      %1791 = vmatpush1.msra.mxu0 %v1783
      %1792 = vmatprep.subr.mxu0 0.0
      %1793 = vmatpush1.msra.mxu0 %v1782
      %1794 = vmatprep.subr.mxu0 0.0
      %1795 = vmatpush1.msra.mxu0 %v1781
      %1796 = vmatprep.subr.mxu0 0.0
      %1797 = vmatpush1.msra.mxu0 %v1780
      %1798 = vmatprep.subr.mxu0 0.0
      %1799 = vmatpush1.msra.mxu0 %v1779
      %1800 = vmatprep.subr.mxu0 0.0
      %1801 = vmatpush1.msra.mxu0 %v1778
      %1802 = vmatprep.subr.mxu0 0.0
      %1803 = vmatpush1.msra.mxu0 %v1777
      %1804 = vmatprep.subr.mxu0 0.0
      %1805 = vmatpush1.msra.mxu0 %v1776
      %1806 = vmatprep.subr.mxu0 0.0
      %1807 = vmatpush1.msra.mxu0 %v1775
      %1808 = vmatprep.subr.mxu0 0.0
      %1809 = vmatpush1.msra.mxu0 %v1774
      %1810 = vmatprep.subr.mxu0 0.0
      %1811 = vmatpush1.msra.mxu0 %v1773
      %1812 = vmatprep.subr.mxu0 0.0
      %1813 = vmatpush1.msra.mxu0 %v1772
      %1814 = vmatprep.subr.mxu0 0.0
      %1815 = vmatpush1.msra.mxu0 %v1771
      %1816 = vmatprep.subr.mxu0 0.0
      %1817 = vmatpush1.msra.mxu0 %v1770
      %1818 = vmatprep.subr.mxu0 0.0
      %1819 = vmatpush2.msra.mxu0 0.0
      %1820 = vmatprep.subr.mxu0 0.0
      %1821 = vmatpush2.msra.mxu0 0.0
      %1822 = vmatprep.subr.mxu0 0.0
      %1823 = vmatpush2.msra.mxu0 0.0
      %1824 = vmatprep.subr.mxu0 0.0
      %1825 = vmatpush2.msra.mxu0 0.0
      %1826 = vmatprep.subr.mxu0 0.0
      %1827 = vmatpush2.msra.mxu0 0.0
      %1828 = vmatprep.subr.mxu0 0.0
      %1829 = vmatpush2.msra.mxu0 0.0
      %1830 = vmatprep.subr.mxu0 0.0
      %1831 = vmatpush2.msra.mxu0 0.0
      %1832 = vmatprep.subr.mxu0 0.0
      %1833 = vmatpush2.msra.mxu0 0.0
      %1834 = vmatprep.subr.mxu0 0.0
      %1835 = vmatpush2.msra.mxu0 0.0
      %1836 = vmatprep.subr.mxu0 0.0
      %1837 = vmatpush2.msra.mxu0 0.0
      %1838 = vmatprep.subr.mxu0 0.0
      %1839 = vmatpush2.msra.mxu0 0.0
      %1840 = vmatprep.subr.mxu0 0.0
      %1841 = vmatpush2.msra.mxu0 0.0
      %1842 = vmatprep.subr.mxu0 0.0
      %1843 = vmatpush2.msra.mxu0 0.0
      %1844 = vmatprep.subr.mxu0 0.0
      %1845 = vmatpush2.msra.mxu0 0.0
      %1846 = vmatprep.subr.mxu0 0.0
      %1847 = vmatpush2.msra.mxu0 0.0
      %1848 = vmatprep.subr.mxu0 0.0
      %1849 = vmatpush2.msra.mxu0 0.0
      %1850 = vmatprep.mubr.f32.mxu0 0.0
      %1851 = vmatmul.mubr.f32.gmra.mxu0 %v1761
      %v1852 = vpop.f32.mrf.mxu0
      %v1853 = vadd.f32 0.0, %v1852
      %v1854 = vpop.f32.mrf.mxu0
      %1855 = vmatprep.mubr.f32.mxu0 0.0
      %1856 = vmatmul.mubr.f32.gmra.mxu0 %v1762
      %v1857 = vpop.f32.mrf.mxu0
      %v1858 = vadd.f32 0.0, %v1857
      %v1859 = vpop.f32.mrf.mxu0
      %1860 = vmatprep.mubr.f32.mxu0 0.0
      %1861 = vmatmul.mubr.f32.gmra.mxu0 %v1763
      %v1862 = vpop.f32.mrf.mxu0
      %v1863 = vadd.f32 0.0, %v1862
      %v1864 = vpop.f32.mrf.mxu0
      %1865 = vmatprep.mubr.f32.mxu0 0.0
      %1866 = vmatmul.mubr.f32.gmra.mxu0 %v1764
      %v1867 = vpop.f32.mrf.mxu0
      %v1868 = vadd.f32 0.0, %v1867
      %v1869 = vpop.f32.mrf.mxu0
      %1870 = vmatprep.mubr.f32.mxu0 0.0
      %1871 = vmatmul.mubr.f32.gmra.mxu0 %v1765
      %v1872 = vpop.f32.mrf.mxu0
      %v1873 = vadd.f32 0.0, %v1872
      %v1874 = vpop.f32.mrf.mxu0
      %1875 = vmatprep.mubr.f32.mxu0 0.0
      %1876 = vmatmul.mubr.f32.gmra.mxu0 %v1766
      %v1877 = vpop.f32.mrf.mxu0
      %v1878 = vadd.f32 0.0, %v1877
      %v1879 = vpop.f32.mrf.mxu0
      %1880 = vmatprep.mubr.f32.mxu0 0.0
      %1881 = vmatmul.mubr.f32.gmra.mxu0 %v1767
      %v1882 = vpop.f32.mrf.mxu0
      %v1883 = vadd.f32 0.0, %v1882
      %v1884 = vpop.f32.mrf.mxu0
      %1885 = vmatprep.mubr.f32.mxu0 0.0
      %1886 = vmatmul.mubr.f32.gmra.mxu0 %v1768
      %v1887 = vpop.f32.mrf.mxu0
      %v1888 = vadd.f32 0.0, %v1887
      %v1889 = vpop.f32.mrf.mxu0
      %1890 = vdwg.mxu0
      %v1891 = vadd.f32 %v1753, %v1853
      %v1892 = vadd.f32 %v1754, %v1858
      %v1893 = vadd.f32 %v1755, %v1863
      %v1894 = vadd.f32 %v1756, %v1868
      %v1895 = vadd.f32 %v1757, %v1873
      %v1896 = vadd.f32 %v1758, %v1878
      %v1897 = vadd.f32 %v1759, %v1883
      %v1898 = vadd.f32 %v1760, %v1888
      %v1899 = vld [vmem:[%s802 + $0x1] sm:$0xff]
      %v1900 = vld [vmem:[%s802 + $0x11] sm:$0xff]
      %v1901 = vld [vmem:[%s802 + $0x21] sm:$0xff]
      %v1902 = vld [vmem:[%s802 + $0x31] sm:$0xff]
      %v1903 = vld [vmem:[%s802 + $0x41] sm:$0xff]
      %v1904 = vld [vmem:[%s802 + $0x51] sm:$0xff]
      %v1905 = vld [vmem:[%s802 + $0x61] sm:$0xff]
      %v1906 = vld [vmem:[%s802 + $0x71] sm:$0xff]
      %s1907 = scalar_lea.vmem %s5, 1024
      %v1908 = vld [vmem:[%s1907] sm:$0xff]
      %v1909 = vld [vmem:[%s1907 + $0x8] sm:$0xff]
      %v1910 = vld [vmem:[%s1907 + $0x10] sm:$0xff]
      %v1911 = vld [vmem:[%s1907 + $0x18] sm:$0xff]
      %v1912 = vld [vmem:[%s1907 + $0x20] sm:$0xff]
      %v1913 = vld [vmem:[%s1907 + $0x28] sm:$0xff]
      %v1914 = vld [vmem:[%s1907 + $0x30] sm:$0xff]
      %v1915 = vld [vmem:[%s1907 + $0x38] sm:$0xff]
      %v1916 = vld [vmem:[%s1907 + $0x40] sm:$0xff]
      %v1917 = vld [vmem:[%s1907 + $0x48] sm:$0xff]
      %v1918 = vld [vmem:[%s1907 + $0x50] sm:$0xff]
      %v1919 = vld [vmem:[%s1907 + $0x58] sm:$0xff]
      %v1920 = vld [vmem:[%s1907 + $0x60] sm:$0xff]
      %v1921 = vld [vmem:[%s1907 + $0x68] sm:$0xff]
      %v1922 = vld [vmem:[%s1907 + $0x70] sm:$0xff]
      %v1923 = vld [vmem:[%s1907 + $0x78] sm:$0xff]
      %1924 = vmatprep.subr.mxu0 0.0
      %1925 = vmatpush1.msra.mxu0 %v1923
      %1926 = vmatprep.subr.mxu0 0.0
      %1927 = vmatpush1.msra.mxu0 %v1922
      %1928 = vmatprep.subr.mxu0 0.0
      %1929 = vmatpush1.msra.mxu0 %v1921
      %1930 = vmatprep.subr.mxu0 0.0
      %1931 = vmatpush1.msra.mxu0 %v1920
      %1932 = vmatprep.subr.mxu0 0.0
      %1933 = vmatpush1.msra.mxu0 %v1919
      %1934 = vmatprep.subr.mxu0 0.0
      %1935 = vmatpush1.msra.mxu0 %v1918
      %1936 = vmatprep.subr.mxu0 0.0
      %1937 = vmatpush1.msra.mxu0 %v1917
      %1938 = vmatprep.subr.mxu0 0.0
      %1939 = vmatpush1.msra.mxu0 %v1916
      %1940 = vmatprep.subr.mxu0 0.0
      %1941 = vmatpush1.msra.mxu0 %v1915
      %1942 = vmatprep.subr.mxu0 0.0
      %1943 = vmatpush1.msra.mxu0 %v1914
      %1944 = vmatprep.subr.mxu0 0.0
      %1945 = vmatpush1.msra.mxu0 %v1913
      %1946 = vmatprep.subr.mxu0 0.0
      %1947 = vmatpush1.msra.mxu0 %v1912
      %1948 = vmatprep.subr.mxu0 0.0
      %1949 = vmatpush1.msra.mxu0 %v1911
      %1950 = vmatprep.subr.mxu0 0.0
      %1951 = vmatpush1.msra.mxu0 %v1910
      %1952 = vmatprep.subr.mxu0 0.0
      %1953 = vmatpush1.msra.mxu0 %v1909
      %1954 = vmatprep.subr.mxu0 0.0
      %1955 = vmatpush1.msra.mxu0 %v1908
      %1956 = vmatprep.subr.mxu0 0.0
      %1957 = vmatpush2.msra.mxu0 0.0
      %1958 = vmatprep.subr.mxu0 0.0
      %1959 = vmatpush2.msra.mxu0 0.0
      %1960 = vmatprep.subr.mxu0 0.0
      %1961 = vmatpush2.msra.mxu0 0.0
      %1962 = vmatprep.subr.mxu0 0.0
      %1963 = vmatpush2.msra.mxu0 0.0
      %1964 = vmatprep.subr.mxu0 0.0
      %1965 = vmatpush2.msra.mxu0 0.0
      %1966 = vmatprep.subr.mxu0 0.0
      %1967 = vmatpush2.msra.mxu0 0.0
      %1968 = vmatprep.subr.mxu0 0.0
      %1969 = vmatpush2.msra.mxu0 0.0
      %1970 = vmatprep.subr.mxu0 0.0
      %1971 = vmatpush2.msra.mxu0 0.0
      %1972 = vmatprep.subr.mxu0 0.0
      %1973 = vmatpush2.msra.mxu0 0.0
      %1974 = vmatprep.subr.mxu0 0.0
      %1975 = vmatpush2.msra.mxu0 0.0
      %1976 = vmatprep.subr.mxu0 0.0
      %1977 = vmatpush2.msra.mxu0 0.0
      %1978 = vmatprep.subr.mxu0 0.0
      %1979 = vmatpush2.msra.mxu0 0.0
      %1980 = vmatprep.subr.mxu0 0.0
      %1981 = vmatpush2.msra.mxu0 0.0
      %1982 = vmatprep.subr.mxu0 0.0
      %1983 = vmatpush2.msra.mxu0 0.0
      %1984 = vmatprep.subr.mxu0 0.0
      %1985 = vmatpush2.msra.mxu0 0.0
      %1986 = vmatprep.subr.mxu0 0.0
      %1987 = vmatpush2.msra.mxu0 0.0
      %1988 = vmatprep.mubr.f32.mxu0 0.0
      %1989 = vmatmul.mubr.f32.gmra.mxu0 %v1899
      %v1990 = vpop.f32.mrf.mxu0
      %v1991 = vadd.f32 0.0, %v1990
      %v1992 = vpop.f32.mrf.mxu0
      %1993 = vmatprep.mubr.f32.mxu0 0.0
      %1994 = vmatmul.mubr.f32.gmra.mxu0 %v1900
      %v1995 = vpop.f32.mrf.mxu0
      %v1996 = vadd.f32 0.0, %v1995
      %v1997 = vpop.f32.mrf.mxu0
      %1998 = vmatprep.mubr.f32.mxu0 0.0
      %1999 = vmatmul.mubr.f32.gmra.mxu0 %v1901
      %v2000 = vpop.f32.mrf.mxu0
      %v2001 = vadd.f32 0.0, %v2000
      %v2002 = vpop.f32.mrf.mxu0
      %2003 = vmatprep.mubr.f32.mxu0 0.0
      %2004 = vmatmul.mubr.f32.gmra.mxu0 %v1902
      %v2005 = vpop.f32.mrf.mxu0
      %v2006 = vadd.f32 0.0, %v2005
      %v2007 = vpop.f32.mrf.mxu0
      %2008 = vmatprep.mubr.f32.mxu0 0.0
      %2009 = vmatmul.mubr.f32.gmra.mxu0 %v1903
      %v2010 = vpop.f32.mrf.mxu0
      %v2011 = vadd.f32 0.0, %v2010
      %v2012 = vpop.f32.mrf.mxu0
      %2013 = vmatprep.mubr.f32.mxu0 0.0
      %2014 = vmatmul.mubr.f32.gmra.mxu0 %v1904
      %v2015 = vpop.f32.mrf.mxu0
      %v2016 = vadd.f32 0.0, %v2015
      %v2017 = vpop.f32.mrf.mxu0
      %2018 = vmatprep.mubr.f32.mxu0 0.0
      %2019 = vmatmul.mubr.f32.gmra.mxu0 %v1905
      %v2020 = vpop.f32.mrf.mxu0
      %v2021 = vadd.f32 0.0, %v2020
      %v2022 = vpop.f32.mrf.mxu0
      %2023 = vmatprep.mubr.f32.mxu0 0.0
      %2024 = vmatmul.mubr.f32.gmra.mxu0 %v1906
      %v2025 = vpop.f32.mrf.mxu0
      %v2026 = vadd.f32 0.0, %v2025
      %v2027 = vpop.f32.mrf.mxu0
      %2028 = vdwg.mxu0
      %v2029 = vadd.f32 %v1891, %v1991
      %v2030 = vadd.f32 %v1892, %v1996
      %v2031 = vadd.f32 %v1893, %v2001
      %v2032 = vadd.f32 %v1894, %v2006
      %v2033 = vadd.f32 %v1895, %v2011
      %v2034 = vadd.f32 %v1896, %v2016
      %v2035 = vadd.f32 %v1897, %v2021
      %v2036 = vadd.f32 %v1898, %v2026
      %2037 = vst [vmem:[%s285] sm:$0xff] %v2029
      %2038 = vst [vmem:[%s285 + $0x8] sm:$0xff] %v2030
      %2039 = vst [vmem:[%s285 + $0x10] sm:$0xff] %v2031
      %2040 = vst [vmem:[%s285 + $0x18] sm:$0xff] %v2032
      %2041 = vst [vmem:[%s285 + $0x20] sm:$0xff] %v2033
      %2042 = vst [vmem:[%s285 + $0x28] sm:$0xff] %v2034
      %2043 = vst [vmem:[%s285 + $0x30] sm:$0xff] %v2035
      %2044 = vst [vmem:[%s285 + $0x38] sm:$0xff] %v2036
      %v2045 = vadd.f32 %v2029, %v2030
      %v2046 = vadd.f32 %v2045, %v2031
      %v2047 = vadd.f32 %v2046, %v2032
      %v2048 = vadd.f32 %v2047, %v2033
      %v2049 = vadd.f32 %v2048, %v2034
      %v2050 = vadd.f32 %v2049, %v2035
      %v2051 = vadd.f32 %v2050, %v2036
      %v2052 = vrot.slane %v2051, 4
      %v2053 = vadd.f32 %v2051, %v2052
      %v2054 = vrot.slane %v2053, 2
      %v2055 = vadd.f32 %v2053, %v2054
      %v2056 = vrot.slane %v2055, 1
      %v2057 = vadd.f32 %v2055, %v2056
      %2058 = vst [vmem:[%s289] sm:$0x1] %v2057
      %v2059 = vmul.f32 %v2029, %v2029
      %v2060 = vmul.f32 %v2030, %v2030
      %v2061 = vmul.f32 %v2031, %v2031
      %v2062 = vmul.f32 %v2032, %v2032
      %v2063 = vmul.f32 %v2033, %v2033
      %v2064 = vmul.f32 %v2034, %v2034
      %v2065 = vmul.f32 %v2035, %v2035
      %v2066 = vmul.f32 %v2036, %v2036
      %v2067 = vadd.f32 %v2059, %v2060
      %v2068 = vadd.f32 %v2067, %v2061
      %v2069 = vadd.f32 %v2068, %v2062
      %v2070 = vadd.f32 %v2069, %v2063
      %v2071 = vadd.f32 %v2070, %v2064
      %v2072 = vadd.f32 %v2071, %v2065
      %v2073 = vadd.f32 %v2072, %v2066
      %v2074 = vrot.slane %v2073, 4
      %v2075 = vadd.f32 %v2073, %v2074
      %v2076 = vrot.slane %v2075, 2
      %v2077 = vadd.f32 %v2075, %v2076
      %v2078 = vrot.slane %v2077, 1
      %v2079 = vadd.f32 %v2077, %v2078
      %2080 = vst [vmem:[%s289 + $0x1] sm:$0x1] %v2079
      %p2081 = scmp.lt.s32.totalorder %s19, 1
      %s2082 = scalar_select %p2081, %s19, 1
      %s2083 = smul.addr %s2082, 8
      %s2084 = smul.addr %s2083, 8
      %s2085 = scalar_lea.vmem %s6, %s2084
      %p2086 = scmp.lt.s32.totalorder %s19, 1
      %s2087 = scalar_select %p2086, %s19, 1
      %s2088 = smul.addr %s2087, 2
      %s2089 = scalar_lea.vmem %s7, %s2088
      // Predicated region
      $region45: #{bottleneck_forward.5} parent=43 // pred_check
        %p2090 = pneg %p168
      $region46: #{bottleneck_forward.5} parent=43 // pred_check_branch
        %2092 = sbr.rel (%p2090) target = $region48
      $region47: #{bottleneck_forward.5} parent=43 // pred_region
        _
      $region48: #{bottleneck_forward.5} parent=43 // pred_fallthru
        _
      // Predicated region
      $region49: #{bottleneck_forward.5} parent=43 // pred_check
        %p2093 = pneg %p194
      $region50: #{bottleneck_forward.5} parent=43 // pred_check_branch
        %2095 = sbr.rel (%p2093) target = $region52
      $region51: #{bottleneck_forward.5} parent=43 // pred_region
        _
      $region52: #{bottleneck_forward.5} parent=43 // pred_fallthru
        _
    $region44: #{bottleneck_forward.5} parent=5 // pred_fallthru
      _
    %p2096 = scmp.le.s32.totalorder 2, %s14
    // Predicated region
    $region53: #{bottleneck_forward.5} parent=5 // pred_check
      %p2097 = pneg %p2096
    $region54: #{bottleneck_forward.5} parent=5 // pred_check_branch
      %2099 = sbr.rel (%p2097) target = $region56
    $region55: #{bottleneck_forward.5} parent=5 // pred_region
      %s2100 = ssub.s32 %s14, 2
      // Predicated region
      $region57: #{bottleneck_forward.5} parent=55 // pred_check
        %p2101 = pneg %p174
      $region58: #{bottleneck_forward.5} parent=55 // pred_check_branch
        %2103 = sbr.rel (%p2101) target = $region60
      $region59: #{bottleneck_forward.5} parent=55 // pred_region
        %p2104 = scmp.lt.s32.totalorder %s20, 1
        %s2105 = scalar_select %p2104, %s20, 1
        %s2106 = smul.addr %s2105, 8
        %s2107 = smul.addr %s2106, 8
        %s2108 = scalar_lea.vmem %s6, %s2107
      $region60: #{bottleneck_forward.5} parent=55 // pred_fallthru
        _
      // Predicated region
      $region61: #{bottleneck_forward.5} parent=55 // pred_check
        %p2109 = pneg %p200
      $region62: #{bottleneck_forward.5} parent=55 // pred_check_branch
        %2111 = sbr.rel (%p2109) target = $region64
      $region63: #{bottleneck_forward.5} parent=55 // pred_region
        %p2112 = scmp.lt.s32.totalorder %s20, 1
        %s2113 = scalar_select %p2112, %s20, 1
        %s2114 = smul.addr %s2113, 2
        %s2115 = scalar_lea.vmem %s7, %s2114
      $region64: #{bottleneck_forward.5} parent=55 // pred_fallthru
        _
    $region56: #{bottleneck_forward.5} parent=5 // pred_fallthru
      _
  $region6: #{bottleneck_forward.5} parent=0 // loop_footer
    %s18 = sadd.s32 1, %s14
  $region7: #{bottleneck_forward.5} parent=0 // loop_footer_branch
    %13 = sbr.rel target = $region3
  $region8: #{bottleneck_forward.5} parent=0 // loop_exit
    _

</llo_original>
